<compile_context>
chip_gen: v7x
topology: tpu7x:2x2x1
jax: 0.10.0
libtpu: 0.0.40
codegen_flags: <defaults>
</compile_context>

<pallas_src>
import functools

import jax
import jax.numpy as jnp
from jax.experimental import pallas as pl
from jax.experimental.pallas import tpu as pltpu

ACT_DTYPE = jnp.bfloat16  # MXU-native operand dtype on v6e/v7x; f32 accumulate.


def _round_up(x, m):
    return ((x + m - 1) // m) * m


def _pick_m_tile(m):
    """Largest 8-aligned tile that divides M and yields >1 grid step."""
    for t in (512, 256, 128, 64, 32, 16, 8):
        if m % t == 0 and m // t > 1:
            return t
    return m


def _vmem_block_bytes(shape, itemsize=4):
    s = list(shape)
    if len(s) == 1:
        s = [1] + s
    s[-1] = _round_up(s[-1], 128)
    s[-2] = _round_up(s[-2], 8)
    n = 1
    for d in s:
        n *= d
    return n * itemsize


def _vmem_limit(block_shapes):
    # double-buffered pipeline blocks + headroom for compiler scratch
    total = sum(_vmem_block_bytes(s) for s in block_shapes)
    return int(min(max(4 * total, 8 * 1024 * 1024), 48 * 1024 * 1024))


# ------------------------------ Pallas kernels ------------------------------

def _gemm_kernel(x_ref, w_ref, b_ref, o_ref, *, relu):
    """(tm, K) @ (K, N) with fused BN-shift / ReLU epilogue (f32 accumulate)."""
    acc = jnp.dot(x_ref[...].astype(jnp.bfloat16),
                  w_ref[...].astype(jnp.bfloat16),
                  preferred_element_type=jnp.float32)
    y = acc + b_ref[...].astype(jnp.float32)
    if relu:
        y = jnp.maximum(y, 0.0)
    o_ref[...] = y.astype(o_ref.dtype)


def _gemm_res_kernel(x_ref, w_ref, b_ref, r_ref, o_ref, *, relu):
    """Same as _gemm_kernel but with a fused residual add."""
    acc = jnp.dot(x_ref[...].astype(jnp.bfloat16),
                  w_ref[...].astype(jnp.bfloat16),
                  preferred_element_type=jnp.float32)
    y = acc + b_ref[...].astype(jnp.float32) + r_ref[...].astype(jnp.float32)
    if relu:
        y = jnp.maximum(y, 0.0)
    o_ref[...] = y.astype(o_ref.dtype)


def _conv3x3_kernel(x_ref, w_ref, b_ref, o_ref, *, oh, ow, relu):
    """3x3 stride-1 conv, implicit im2col built from contiguous VMEM slices.

    x_ref: (1, oh+2, ow+2, cin)  spatially zero-padded input (one image)
    w_ref: (9*cin, cout)         BN-folded weights, (kh, kw, cin) row order
    b_ref: (1, cout)             BN shift
    o_ref: (1, oh, ow, cout)
    """
    w = w_ref[...].astype(jnp.bfloat16)          # hoisted: resident across rows
    bias = b_ref[...].astype(jnp.float32)
    # TODO(synk): for large images add an output-row grid axis (overlapping
    #             row windows) instead of one full image per grid step.
    for r in range(oh):
        taps = []
        for i in range(3):
            row = x_ref[0, r + i]                # (ow+2, cin)
            for j in range(3):
                taps.append(row[j:j + ow, :])    # (ow, cin), static slice
        lhs = jnp.concatenate(taps, axis=-1).astype(jnp.bfloat16)  # (ow, 9*cin)
        acc = jnp.dot(lhs, w, preferred_element_type=jnp.float32)
        y = acc + bias
        if relu:
            y = jnp.maximum(y, 0.0)
        o_ref[0, r] = y.astype(o_ref.dtype)


def _maxpool3x3_kernel(x_ref, o_ref, *, oh, ow):
    """Stride-1 3x3 max via pairwise VPU maximums over shifted VMEM views."""
    m = x_ref[0, 0:oh, 0:ow, :]
    for i in range(3):
        for j in range(3):
            if i == 0 and j == 0:
                continue
            m = jnp.maximum(m, x_ref[0, i:i + oh, j:j + ow, :])
    o_ref[0] = m


def _head_kernel(x_ref, w_ref, b_ref, o_ref):
    """Fused global average pool + fully-connected layer."""
    feat = jnp.mean(x_ref[...].astype(jnp.float32), axis=1)       # (N, C)
    acc = jnp.dot(feat, w_ref[...], preferred_element_type=jnp.float32)
    o_ref[...] = acc + b_ref[...]


# ------------------------------ Pallas wrappers ------------------------------

def pallas_gemm(x, w, b, relu=False, residual=None, out_dtype=ACT_DTYPE):
    """out = relu?((x @ w) + b [+ residual]).  x:(M,K) bf16, w:(K,N) bf16."""
    m, k = x.shape
    n = w.shape[-1]
    tm = _pick_m_tile(m)
    args = [x, w, b.reshape(1, n)]
    in_specs = [pl.BlockSpec((tm, k), lambda i: (i, 0)),
                pl.BlockSpec((k, n), lambda i: (0, 0)),
                pl.BlockSpec((1, n), lambda i: (0, 0))]
    blocks = [(tm, k), (k, n), (1, n), (tm, n)]
    if residual is not None:
        args.append(residual)
        in_specs.append(pl.BlockSpec((tm, n), lambda i: (i, 0)))
        blocks.append((tm, n))
        kern = functools.partial(_gemm_res_kernel, relu=relu)
    else:
        kern = functools.partial(_gemm_kernel, relu=relu)
    return pl.pallas_call(
        kern,
        out_shape=jax.ShapeDtypeStruct((m, n), out_dtype),
        grid=(m // tm,),
        in_specs=in_specs,
        out_specs=pl.BlockSpec((tm, n), lambda i: (i, 0)),
        compiler_params=pltpu.CompilerParams(
            dimension_semantics=("parallel",),
            vmem_limit_bytes=_vmem_limit(blocks)),
    )(*args)


def conv1x1(x, w, b, relu, residual=None):
    """1x1 conv (stride 1) as a flattened tiled GEMM.  x: NHWC."""
    n, h, wd, cin = x.shape
    cout = w.shape[-1]
    xf = x.reshape(n * h * wd, cin)
    rf = residual.reshape(n * h * wd, cout) if residual is not None else None
    out = pallas_gemm(xf, w, b, relu=relu, residual=rf)
    return out.reshape(n, h, wd, cout)


def conv3x3_bn_relu(x, w, b, relu=True):
    """3x3 stride-1 pad-1 conv + BN-shift + ReLU.  x: NHWC, w: (9*Cin, Cout)."""
    n, h, wd, cin = x.shape
    cout = w.shape[-1]
    xp = jnp.pad(x, ((0, 0), (1, 1), (1, 1), (0, 0)))
    kern = functools.partial(_conv3x3_kernel, oh=h, ow=wd, relu=relu)
    blocks = [(1, h + 2, wd + 2, cin), (9 * cin, cout), (1, cout),
              (1, h, wd, cout)]
    return pl.pallas_call(
        kern,
        out_shape=jax.ShapeDtypeStruct((n, h, wd, cout), ACT_DTYPE),
        grid=(n,),
        in_specs=[
            pl.BlockSpec((1, h + 2, wd + 2, cin), lambda i: (i, 0, 0, 0)),
            pl.BlockSpec((9 * cin, cout), lambda i: (0, 0)),
            pl.BlockSpec((1, cout), lambda i: (0, 0)),
        ],
        out_specs=pl.BlockSpec((1, h, wd, cout), lambda i: (i, 0, 0, 0)),
        compiler_params=pltpu.CompilerParams(
            dimension_semantics=("parallel",),
            vmem_limit_bytes=_vmem_limit(blocks)),
    )(xp, w, b.reshape(1, cout))


def maxpool2d_3x3_s2(x):
    """MaxPool2d(kernel=3, stride=2, padding=1): stride-1 pool in Pallas,
    stride handled with a cheap XLA subsample (exactly equivalent)."""
    # TODO(synk): could be fused into the conv1 epilogue in a follow-up.
    n, h, wd, c = x.shape
    neg = jnp.finfo(x.dtype).min
    xp = jnp.pad(x, ((0, 0), (1, 1), (1, 1), (0, 0)), constant_values=neg)
    kern = functools.partial(_maxpool3x3_kernel, oh=h, ow=wd)
    blocks = [(1, h + 2, wd + 2, c), (1, h, wd, c)]
    full = pl.pallas_call(
        kern,
        out_shape=jax.ShapeDtypeStruct((n, h, wd, c), x.dtype),
        grid=(n,),
        in_specs=[pl.BlockSpec((1, h + 2, wd + 2, c), lambda i: (i, 0, 0, 0))],
        out_specs=pl.BlockSpec((1, h, wd, c), lambda i: (i, 0, 0, 0)),
        compiler_params=pltpu.CompilerParams(
            dimension_semantics=("parallel",),
            vmem_limit_bytes=_vmem_limit(blocks)),
    )(xp)
    return full[:, ::2, ::2, :]


def head(x, fc_w, fc_b):
    """Fused AdaptiveAvgPool2d((1,1)) + flatten + Linear."""
    n, h, wd, c = x.shape
    xf = x.reshape(n, h * wd, c)
    nclass = fc_w.shape[-1]
    return pl.pallas_call(
        _head_kernel,
        out_shape=jax.ShapeDtypeStruct((n, nclass), jnp.float32),
        in_specs=[pl.BlockSpec(memory_space=pltpu.MemorySpace.VMEM)] * 3,
        out_specs=pl.BlockSpec(memory_space=pltpu.MemorySpace.VMEM),
        compiler_params=pltpu.CompilerParams(
            vmem_limit_bytes=_vmem_limit([(n, h * wd, c), (c, nclass),
                                          (1, nclass), (n, nclass)])),
    )(xf, fc_w, fc_b.reshape(1, nclass))


# ------------------------------ parameters ------------------------------

def _kaiming_out(key, cout, cin, kh, kw):
    # kaiming_normal_, mode='fan_out', relu gain: std = sqrt(2 / (cout*kh*kw))
    std = (2.0 / (cout * kh * kw)) ** 0.5
    return std * jax.random.normal(key, (cout, cin, kh, kw), jnp.float32)


def _bn_params(c, eps=1e-5):
    gamma = jnp.full((c,), 0.5, jnp.float32)
    beta = jnp.zeros((c,), jnp.float32)
    running_mean = jnp.zeros((c,), jnp.float32)
    running_var = jnp.ones((c,), jnp.float32)
    scale = gamma / jnp.sqrt(running_var + eps)
    shift = beta - running_mean * scale
    return scale, shift


def _fold_conv(w, scale, dtype=ACT_DTYPE):
    """(Cout,Cin,KH,KW) -> (KH*KW*Cin, Cout), BN scale folded per Cout."""
    cout, cin, kh, kw = w.shape
    wf = jnp.transpose(w, (2, 3, 1, 0)).reshape(kh * kw * cin, cout)
    return (wf * scale.reshape(1, cout)).astype(dtype)


def init_params(key, cfg, num_classes):
    keys = iter(jax.random.split(key, 128))
    params = {}
    inplanes = cfg[0]
    w = _kaiming_out(next(keys), inplanes, 1, 3, 3)
    s, b = _bn_params(inplanes)
    params["conv1_w"] = _fold_conv(w, s)             # (9*1, inplanes)
    params["conv1_b"] = b
    layers = []
    for li in range(1, 5):
        layer_cfg = cfg[li]
        planes = layer_cfg[-1]
        stride = 1 if li == 1 else 2
        nblocks = len(layer_cfg) // 3
        blocks = []
        for bi in range(nblocks):
            bcfg = layer_cfg[3 * bi:3 * bi + 3]
            bstride = stride if bi == 0 else 1
            has_down = bi == 0 and (stride != 1 or inplanes != planes)
            w1 = _kaiming_out(next(keys), bcfg[0], inplanes, 1, 1)
            s1, b1 = _bn_params(bcfg[0])
            w2 = _kaiming_out(next(keys), bcfg[1], bcfg[0], 3, 3)
            s2, b2 = _bn_params(bcfg[1])
            w3 = _kaiming_out(next(keys), planes, bcfg[1], 1, 1)
            s3, b3 = _bn_params(planes)
            blk = {
                "w1": _fold_conv(w1, s1), "b1": b1,    # (inplanes, c0)
                "w2": _fold_conv(w2, s2), "b2": b2,    # (9*c0, c1)
                "w3": _fold_conv(w3, s3), "b3": b3,    # (c1, planes)
                "stride": bstride,
            }
            if has_down:
                wd = _kaiming_out(next(keys), planes, inplanes, 1, 1)
                blk["wd"] = _fold_conv(wd, jnp.ones((planes,), jnp.float32))
                blk["bd"] = jnp.zeros((planes,), jnp.float32)
            blocks.append(blk)
            inplanes = planes
        layers.append(blocks)
    params["layers"] = layers
    fan_in = cfg[4][-1]
    bound = 1.0 / (fan_in ** 0.5)
    kw1, kw2 = jax.random.split(next(keys))
    fc_w = jax.random.uniform(kw1, (num_classes, fan_in), jnp.float32,
                              -bound, bound)
    params["fc_w"] = jnp.transpose(fc_w)             # pre-transposed (fan_in, nclass)
    params["fc_b"] = jax.random.uniform(kw2, (num_classes,), jnp.float32,
                                        -bound, bound)
    return params


# ------------------------------ forward ------------------------------

def bottleneck_forward(x, blk):
    stride = blk["stride"]
    out = conv1x1(x, blk["w1"], blk["b1"], relu=True)
    out = conv3x3_bn_relu(out, blk["w2"], blk["b2"], relu=True)
    if stride > 1:                                    # strided 3x3 == stride-1 + subsample
        out = out[:, ::stride, ::stride, :]
    if "wd" in blk:
        xs = x[:, ::stride, ::stride, :] if stride > 1 else x
        identity = conv1x1(xs, blk["wd"], blk["bd"], relu=False)
    else:
        identity = x
    out = conv1x1(out, blk["w3"], blk["b3"], relu=True, residual=identity)
    return out


def resnet_forward(x_nchw, params):
    x = jnp.transpose(x_nchw, (0, 2, 3, 1)).astype(ACT_DTYPE)   # NCHW -> NHWC, bf16
    x = conv3x3_bn_relu(x, params["conv1_w"], params["conv1_b"], relu=True)
    x = maxpool2d_3x3_s2(x)
    for blocks in params["layers"]:
        for blk in blocks:
            x = bottleneck_forward(x, blk)
    logits = head(x, params["fc_w"], params["fc_b"])            # avgpool + flatten + fc
    return logits


if __name__ == "__main__":
    # Small config: cfg[0]=stem width, cfg[1..4] = per-layer bottleneck widths.
    cfg = [8, [4, 4, 8, 4, 4, 8], [8, 8, 16], [16, 16, 32], [16, 16, 64]]
    num_classes = 10

    key = jax.random.PRNGKey(0)
    pkey, xkey = jax.random.split(key)
    params = init_params(pkey, cfg, num_classes)

    x = jax.random.normal(xkey, (2, 1, 16, 16), jnp.float32)  # NCHW like PyTorch

    logits = resnet_forward(x, params)
    jax.block_until_ready(logits)
    assert logits.shape == (2, num_classes)
    assert bool(jnp.all(jnp.isfinite(logits)))
    print("KERNEL_OK")
</pallas_src>

<mosaic_0001>
module attributes {stable_mosaic.version = 11 : i64} {
  func.func @_conv3x3_kernel(%arg0: i32, %arg1: memref<1x18x18x1xbf16, #tpu.memory_space<vmem>>, %arg2: memref<9x8xbf16, #tpu.memory_space<vmem>>, %arg3: memref<1x8xf32, #tpu.memory_space<vmem>>, %arg4: memref<1x16x16x8xbf16, #tpu.memory_space<vmem>>) attributes {dimension_semantics = [#tpu.dimension_semantics<parallel>], iteration_bounds = array<i64: 2>, scalar_prefetch = 0 : i64, scratch_operands = 0 : i64, tpu.core_type = #tpu.core_type<tc>, window_params = [{transform_indices = @transform_0, window_bounds = array<i64: 1, 18, 18, 1>}, {pipeline_mode = #tpu.pipeline_mode<synchronous>, transform_indices = @transform_1, window_bounds = array<i64: 9, 8>}, {pipeline_mode = #tpu.pipeline_mode<synchronous>, transform_indices = @transform_2, window_bounds = array<i64: 1, 8>}, {transform_indices = @transform_3, window_bounds = array<i64: 1, 16, 16, 8>}]} {
    %c0 = arith.constant 0 : index
    %c0_0 = arith.constant 0 : index
    %0 = vector.load %arg2[%c0, %c0_0] : memref<9x8xbf16, #tpu.memory_space<vmem>>, vector<9x8xbf16>
    %c0_1 = arith.constant 0 : index
    %c0_2 = arith.constant 0 : index
    %1 = vector.load %arg3[%c0_1, %c0_2] : memref<1x8xf32, #tpu.memory_space<vmem>>, vector<1x8xf32>
    %c0_3 = arith.constant 0 : index
    %c0_4 = arith.constant 0 : index
    %c0_5 = arith.constant 0 : index
    %c0_6 = arith.constant 0 : index
    %2 = vector.load %arg1[%c0_3, %c0_4, %c0_5, %c0_6] : memref<1x18x18x1xbf16, #tpu.memory_space<vmem>>, vector<1x1x18x1xbf16>
    %3 = vector.shape_cast %2 : vector<1x1x18x1xbf16> to vector<18x1xbf16>
    %4 = vector.extract_strided_slice %3 {offsets = [0, 0], sizes = [16, 1], strides = [1, 1]} : vector<18x1xbf16> to vector<16x1xbf16>
    %5 = vector.extract_strided_slice %3 {offsets = [1, 0], sizes = [16, 1], strides = [1, 1]} : vector<18x1xbf16> to vector<16x1xbf16>
    %6 = vector.extract_strided_slice %3 {offsets = [2, 0], sizes = [16, 1], strides = [1, 1]} : vector<18x1xbf16> to vector<16x1xbf16>
    %c0_7 = arith.constant 0 : index
    %c1 = arith.constant 1 : index
    %c0_8 = arith.constant 0 : index
    %c0_9 = arith.constant 0 : index
    %7 = vector.load %arg1[%c0_7, %c1, %c0_8, %c0_9] : memref<1x18x18x1xbf16, #tpu.memory_space<vmem>>, vector<1x1x18x1xbf16>
    %8 = vector.shape_cast %7 : vector<1x1x18x1xbf16> to vector<18x1xbf16>
    %9 = vector.extract_strided_slice %8 {offsets = [0, 0], sizes = [16, 1], strides = [1, 1]} : vector<18x1xbf16> to vector<16x1xbf16>
    %10 = vector.extract_strided_slice %8 {offsets = [1, 0], sizes = [16, 1], strides = [1, 1]} : vector<18x1xbf16> to vector<16x1xbf16>
    %11 = vector.extract_strided_slice %8 {offsets = [2, 0], sizes = [16, 1], strides = [1, 1]} : vector<18x1xbf16> to vector<16x1xbf16>
    %c0_10 = arith.constant 0 : index
    %c2 = arith.constant 2 : index
    %c0_11 = arith.constant 0 : index
    %c0_12 = arith.constant 0 : index
    %12 = vector.load %arg1[%c0_10, %c2, %c0_11, %c0_12] : memref<1x18x18x1xbf16, #tpu.memory_space<vmem>>, vector<1x1x18x1xbf16>
    %13 = vector.shape_cast %12 : vector<1x1x18x1xbf16> to vector<18x1xbf16>
    %14 = vector.extract_strided_slice %13 {offsets = [0, 0], sizes = [16, 1], strides = [1, 1]} : vector<18x1xbf16> to vector<16x1xbf16>
    %15 = vector.extract_strided_slice %13 {offsets = [1, 0], sizes = [16, 1], strides = [1, 1]} : vector<18x1xbf16> to vector<16x1xbf16>
    %16 = vector.extract_strided_slice %13 {offsets = [2, 0], sizes = [16, 1], strides = [1, 1]} : vector<18x1xbf16> to vector<16x1xbf16>
    %17 = tpu.concatenate %4, %5, %6, %9, %10, %11, %14, %15, %16 in 1 : vector<16x1xbf16>, vector<16x1xbf16>, vector<16x1xbf16>, vector<16x1xbf16>, vector<16x1xbf16>, vector<16x1xbf16>, vector<16x1xbf16>, vector<16x1xbf16>, vector<16x1xbf16> -> vector<16x9xbf16>
    %cst = arith.constant dense<0.000000e+00> : vector<16x8xf32>
    %18 = tpu.matmul %17, %0, %cst {dimension_numbers = #tpu.dot_dimension_numbers<[1], [0], [0], [1], [0, 0, 1, 1], [], []>} : vector<16x9xbf16>, vector<9x8xbf16>, vector<16x8xf32> -> vector<16x8xf32>
    %19 = vector.broadcast %1 : vector<1x8xf32> to vector<16x8xf32>
    %20 = arith.addf %18, %19 : vector<16x8xf32>
    %cst_13 = arith.constant 0.000000e+00 : f32
    %21 = vector.broadcast %cst_13 : f32 to vector<16x8xf32>
    %22 = arith.maximumf %20, %21 : vector<16x8xf32>
    %23 = arith.truncf %22 : vector<16x8xf32> to vector<16x8xbf16>
    %c0_14 = arith.constant 0 : index
    %c0_15 = arith.constant 0 : index
    %c0_16 = arith.constant 0 : index
    %c0_17 = arith.constant 0 : index
    %24 = vector.load %arg4[%c0_14, %c0_15, %c0_16, %c0_17] : memref<1x16x16x8xbf16, #tpu.memory_space<vmem>>, vector<1x1x16x8xbf16>
    %25 = vector.shape_cast %24 : vector<1x1x16x8xbf16> to vector<16x8xbf16>
    %26 = vector.shape_cast %23 : vector<16x8xbf16> to vector<1x1x16x8xbf16>
    tpu.vector_store %arg4[%c0_14, %c0_15, %c0_16, %c0_17], %26 {strides = array<i32>} : memref<1x16x16x8xbf16, #tpu.memory_space<vmem>>, vector<1x1x16x8xbf16>,
    %c0_18 = arith.constant 0 : index
    %c1_19 = arith.constant 1 : index
    %c0_20 = arith.constant 0 : index
    %c0_21 = arith.constant 0 : index
    %27 = vector.load %arg1[%c0_18, %c1_19, %c0_20, %c0_21] : memref<1x18x18x1xbf16, #tpu.memory_space<vmem>>, vector<1x1x18x1xbf16>
    %28 = vector.shape_cast %27 : vector<1x1x18x1xbf16> to vector<18x1xbf16>
    %29 = vector.extract_strided_slice %28 {offsets = [0, 0], sizes = [16, 1], strides = [1, 1]} : vector<18x1xbf16> to vector<16x1xbf16>
    %30 = vector.extract_strided_slice %28 {offsets = [1, 0], sizes = [16, 1], strides = [1, 1]} : vector<18x1xbf16> to vector<16x1xbf16>
    %31 = vector.extract_strided_slice %28 {offsets = [2, 0], sizes = [16, 1], strides = [1, 1]} : vector<18x1xbf16> to vector<16x1xbf16>
    %c0_22 = arith.constant 0 : index
    %c2_23 = arith.constant 2 : index
    %c0_24 = arith.constant 0 : index
    %c0_25 = arith.constant 0 : index
    %32 = vector.load %arg1[%c0_22, %c2_23, %c0_24, %c0_25] : memref<1x18x18x1xbf16, #tpu.memory_space<vmem>>, vector<1x1x18x1xbf16>
    %33 = vector.shape_cast %32 : vector<1x1x18x1xbf16> to vector<18x1xbf16>
    %34 = vector.extract_strided_slice %33 {offsets = [0, 0], sizes = [16, 1], strides = [1, 1]} : vector<18x1xbf16> to vector<16x1xbf16>
    %35 = vector.extract_strided_slice %33 {offsets = [1, 0], sizes = [16, 1], strides = [1, 1]} : vector<18x1xbf16> to vector<16x1xbf16>
    %36 = vector.extract_strided_slice %33 {offsets = [2, 0], sizes = [16, 1], strides = [1, 1]} : vector<18x1xbf16> to vector<16x1xbf16>
    %c0_26 = arith.constant 0 : index
    %c3 = arith.constant 3 : index
    %c0_27 = arith.constant 0 : index
    %c0_28 = arith.constant 0 : index
    %37 = vector.load %arg1[%c0_26, %c3, %c0_27, %c0_28] : memref<1x18x18x1xbf16, #tpu.memory_space<vmem>>, vector<1x1x18x1xbf16>
    %38 = vector.shape_cast %37 : vector<1x1x18x1xbf16> to vector<18x1xbf16>
    %39 = vector.extract_strided_slice %38 {offsets = [0, 0], sizes = [16, 1], strides = [1, 1]} : vector<18x1xbf16> to vector<16x1xbf16>
    %40 = vector.extract_strided_slice %38 {offsets = [1, 0], sizes = [16, 1], strides = [1, 1]} : vector<18x1xbf16> to vector<16x1xbf16>
    %41 = vector.extract_strided_slice %38 {offsets = [2, 0], sizes = [16, 1], strides = [1, 1]} : vector<18x1xbf16> to vector<16x1xbf16>
    %42 = tpu.concatenate %29, %30, %31, %34, %35, %36, %39, %40, %41 in 1 : vector<16x1xbf16>, vector<16x1xbf16>, vector<16x1xbf16>, vector<16x1xbf16>, vector<16x1xbf16>, vector<16x1xbf16>, vector<16x1xbf16>, vector<16x1xbf16>, vector<16x1xbf16> -> vector<16x9xbf16>
    %cst_29 = arith.constant dense<0.000000e+00> : vector<16x8xf32>
    %43 = tpu.matmul %42, %0, %cst_29 {dimension_numbers = #tpu.dot_dimension_numbers<[1], [0], [0], [1], [0, 0, 1, 1], [], []>} : vector<16x9xbf16>, vector<9x8xbf16>, vector<16x8xf32> -> vector<16x8xf32>
    %44 = vector.broadcast %1 : vector<1x8xf32> to vector<16x8xf32>
    %45 = arith.addf %43, %44 : vector<16x8xf32>
    %cst_30 = arith.constant 0.000000e+00 : f32
    %46 = vector.broadcast %cst_30 : f32 to vector<16x8xf32>
    %47 = arith.maximumf %45, %46 : vector<16x8xf32>
    %48 = arith.truncf %47 : vector<16x8xf32> to vector<16x8xbf16>
    %c0_31 = arith.constant 0 : index
    %c1_32 = arith.constant 1 : index
    %c0_33 = arith.constant 0 : index
    %c0_34 = arith.constant 0 : index
    %49 = vector.load %arg4[%c0_31, %c1_32, %c0_33, %c0_34] : memref<1x16x16x8xbf16, #tpu.memory_space<vmem>>, vector<1x1x16x8xbf16>
    %50 = vector.shape_cast %49 : vector<1x1x16x8xbf16> to vector<16x8xbf16>
    %51 = vector.shape_cast %48 : vector<16x8xbf16> to vector<1x1x16x8xbf16>
    tpu.vector_store %arg4[%c0_31, %c1_32, %c0_33, %c0_34], %51 {strides = array<i32>} : memref<1x16x16x8xbf16, #tpu.memory_space<vmem>>, vector<1x1x16x8xbf16>,
    %c0_35 = arith.constant 0 : index
    %c2_36 = arith.constant 2 : index
    %c0_37 = arith.constant 0 : index
    %c0_38 = arith.constant 0 : index
    %52 = vector.load %arg1[%c0_35, %c2_36, %c0_37, %c0_38] : memref<1x18x18x1xbf16, #tpu.memory_space<vmem>>, vector<1x1x18x1xbf16>
    %53 = vector.shape_cast %52 : vector<1x1x18x1xbf16> to vector<18x1xbf16>
    %54 = vector.extract_strided_slice %53 {offsets = [0, 0], sizes = [16, 1], strides = [1, 1]} : vector<18x1xbf16> to vector<16x1xbf16>
    %55 = vector.extract_strided_slice %53 {offsets = [1, 0], sizes = [16, 1], strides = [1, 1]} : vector<18x1xbf16> to vector<16x1xbf16>
    %56 = vector.extract_strided_slice %53 {offsets = [2, 0], sizes = [16, 1], strides = [1, 1]} : vector<18x1xbf16> to vector<16x1xbf16>
    %c0_39 = arith.constant 0 : index
    %c3_40 = arith.constant 3 : index
    %c0_41 = arith.constant 0 : index
    %c0_42 = arith.constant 0 : index
    %57 = vector.load %arg1[%c0_39, %c3_40, %c0_41, %c0_42] : memref<1x18x18x1xbf16, #tpu.memory_space<vmem>>, vector<1x1x18x1xbf16>
    %58 = vector.shape_cast %57 : vector<1x1x18x1xbf16> to vector<18x1xbf16>
    %59 = vector.extract_strided_slice %58 {offsets = [0, 0], sizes = [16, 1], strides = [1, 1]} : vector<18x1xbf16> to vector<16x1xbf16>
    %60 = vector.extract_strided_slice %58 {offsets = [1, 0], sizes = [16, 1], strides = [1, 1]} : vector<18x1xbf16> to vector<16x1xbf16>
    %61 = vector.extract_strided_slice %58 {offsets = [2, 0], sizes = [16, 1], strides = [1, 1]} : vector<18x1xbf16> to vector<16x1xbf16>
    %c0_43 = arith.constant 0 : index
    %c4 = arith.constant 4 : index
    %c0_44 = arith.constant 0 : index
    %c0_45 = arith.constant 0 : index
    %62 = vector.load %arg1[%c0_43, %c4, %c0_44, %c0_45] : memref<1x18x18x1xbf16, #tpu.memory_space<vmem>>, vector<1x1x18x1xbf16>
    %63 = vector.shape_cast %62 : vector<1x1x18x1xbf16> to vector<18x1xbf16>
    %64 = vector.extract_strided_slice %63 {offsets = [0, 0], sizes = [16, 1], strides = [1, 1]} : vector<18x1xbf16> to vector<16x1xbf16>
    %65 = vector.extract_strided_slice %63 {offsets = [1, 0], sizes = [16, 1], strides = [1, 1]} : vector<18x1xbf16> to vector<16x1xbf16>
    %66 = vector.extract_strided_slice %63 {offsets = [2, 0], sizes = [16, 1], strides = [1, 1]} : vector<18x1xbf16> to vector<16x1xbf16>
    %67 = tpu.concatenate %54, %55, %56, %59, %60, %61, %64, %65, %66 in 1 : vector<16x1xbf16>, vector<16x1xbf16>, vector<16x1xbf16>, vector<16x1xbf16>, vector<16x1xbf16>, vector<16x1xbf16>, vector<16x1xbf16>, vector<16x1xbf16>, vector<16x1xbf16> -> vector<16x9xbf16>
    %cst_46 = arith.constant dense<0.000000e+00> : vector<16x8xf32>
    %68 = tpu.matmul %67, %0, %cst_46 {dimension_numbers = #tpu.dot_dimension_numbers<[1], [0], [0], [1], [0, 0, 1, 1], [], []>} : vector<16x9xbf16>, vector<9x8xbf16>, vector<16x8xf32> -> vector<16x8xf32>
    %69 = vector.broadcast %1 : vector<1x8xf32> to vector<16x8xf32>
    %70 = arith.addf %68, %69 : vector<16x8xf32>
    %cst_47 = arith.constant 0.000000e+00 : f32
    %71 = vector.broadcast %cst_47 : f32 to vector<16x8xf32>
    %72 = arith.maximumf %70, %71 : vector<16x8xf32>
    %73 = arith.truncf %72 : vector<16x8xf32> to vector<16x8xbf16>
    %c0_48 = arith.constant 0 : index
    %c2_49 = arith.constant 2 : index
    %c0_50 = arith.constant 0 : index
    %c0_51 = arith.constant 0 : index
    %74 = vector.load %arg4[%c0_48, %c2_49, %c0_50, %c0_51] : memref<1x16x16x8xbf16, #tpu.memory_space<vmem>>, vector<1x1x16x8xbf16>
    %75 = vector.shape_cast %74 : vector<1x1x16x8xbf16> to vector<16x8xbf16>
    %76 = vector.shape_cast %73 : vector<16x8xbf16> to vector<1x1x16x8xbf16>
    tpu.vector_store %arg4[%c0_48, %c2_49, %c0_50, %c0_51], %76 {strides = array<i32>} : memref<1x16x16x8xbf16, #tpu.memory_space<vmem>>, vector<1x1x16x8xbf16>,
    %c0_52 = arith.constant 0 : index
    %c3_53 = arith.constant 3 : index
    %c0_54 = arith.constant 0 : index
    %c0_55 = arith.constant 0 : index
    %77 = vector.load %arg1[%c0_52, %c3_53, %c0_54, %c0_55] : memref<1x18x18x1xbf16, #tpu.memory_space<vmem>>, vector<1x1x18x1xbf16>
    %78 = vector.shape_cast %77 : vector<1x1x18x1xbf16> to vector<18x1xbf16>
    %79 = vector.extract_strided_slice %78 {offsets = [0, 0], sizes = [16, 1], strides = [1, 1]} : vector<18x1xbf16> to vector<16x1xbf16>
    %80 = vector.extract_strided_slice %78 {offsets = [1, 0], sizes = [16, 1], strides = [1, 1]} : vector<18x1xbf16> to vector<16x1xbf16>
    %81 = vector.extract_strided_slice %78 {offsets = [2, 0], sizes = [16, 1], strides = [1, 1]} : vector<18x1xbf16> to vector<16x1xbf16>
    %c0_56 = arith.constant 0 : index
    %c4_57 = arith.constant 4 : index
    %c0_58 = arith.constant 0 : index
    %c0_59 = arith.constant 0 : index
    %82 = vector.load %arg1[%c0_56, %c4_57, %c0_58, %c0_59] : memref<1x18x18x1xbf16, #tpu.memory_space<vmem>>, vector<1x1x18x1xbf16>
    %83 = vector.shape_cast %82 : vector<1x1x18x1xbf16> to vector<18x1xbf16>
    %84 = vector.extract_strided_slice %83 {offsets = [0, 0], sizes = [16, 1], strides = [1, 1]} : vector<18x1xbf16> to vector<16x1xbf16>
    %85 = vector.extract_strided_slice %83 {offsets = [1, 0], sizes = [16, 1], strides = [1, 1]} : vector<18x1xbf16> to vector<16x1xbf16>
    %86 = vector.extract_strided_slice %83 {offsets = [2, 0], sizes = [16, 1], strides = [1, 1]} : vector<18x1xbf16> to vector<16x1xbf16>
    %c0_60 = arith.constant 0 : index
    %c5 = arith.constant 5 : index
    %c0_61 = arith.constant 0 : index
    %c0_62 = arith.constant 0 : index
    %87 = vector.load %arg1[%c0_60, %c5, %c0_61, %c0_62] : memref<1x18x18x1xbf16, #tpu.memory_space<vmem>>, vector<1x1x18x1xbf16>
    %88 = vector.shape_cast %87 : vector<1x1x18x1xbf16> to vector<18x1xbf16>
    %89 = vector.extract_strided_slice %88 {offsets = [0, 0], sizes = [16, 1], strides = [1, 1]} : vector<18x1xbf16> to vector<16x1xbf16>
    %90 = vector.extract_strided_slice %88 {offsets = [1, 0], sizes = [16, 1], strides = [1, 1]} : vector<18x1xbf16> to vector<16x1xbf16>
    %91 = vector.extract_strided_slice %88 {offsets = [2, 0], sizes = [16, 1], strides = [1, 1]} : vector<18x1xbf16> to vector<16x1xbf16>
    %92 = tpu.concatenate %79, %80, %81, %84, %85, %86, %89, %90, %91 in 1 : vector<16x1xbf16>, vector<16x1xbf16>, vector<16x1xbf16>, vector<16x1xbf16>, vector<16x1xbf16>, vector<16x1xbf16>, vector<16x1xbf16>, vector<16x1xbf16>, vector<16x1xbf16> -> vector<16x9xbf16>
    %cst_63 = arith.constant dense<0.000000e+00> : vector<16x8xf32>
    %93 = tpu.matmul %92, %0, %cst_63 {dimension_numbers = #tpu.dot_dimension_numbers<[1], [0], [0], [1], [0, 0, 1, 1], [], []>} : vector<16x9xbf16>, vector<9x8xbf16>, vector<16x8xf32> -> vector<16x8xf32>
    %94 = vector.broadcast %1 : vector<1x8xf32> to vector<16x8xf32>
    %95 = arith.addf %93, %94 : vector<16x8xf32>
    %cst_64 = arith.constant 0.000000e+00 : f32
    %96 = vector.broadcast %cst_64 : f32 to vector<16x8xf32>
    %97 = arith.maximumf %95, %96 : vector<16x8xf32>
    %98 = arith.truncf %97 : vector<16x8xf32> to vector<16x8xbf16>
    %c0_65 = arith.constant 0 : index
    %c3_66 = arith.constant 3 : index
    %c0_67 = arith.constant 0 : index
    %c0_68 = arith.constant 0 : index
    %99 = vector.load %arg4[%c0_65, %c3_66, %c0_67, %c0_68] : memref<1x16x16x8xbf16, #tpu.memory_space<vmem>>, vector<1x1x16x8xbf16>
    %100 = vector.shape_cast %99 : vector<1x1x16x8xbf16> to vector<16x8xbf16>
    %101 = vector.shape_cast %98 : vector<16x8xbf16> to vector<1x1x16x8xbf16>
    tpu.vector_store %arg4[%c0_65, %c3_66, %c0_67, %c0_68], %101 {strides = array<i32>} : memref<1x16x16x8xbf16, #tpu.memory_space<vmem>>, vector<1x1x16x8xbf16>,
    %c0_69 = arith.constant 0 : index
    %c4_70 = arith.constant 4 : index
    %c0_71 = arith.constant 0 : index
    %c0_72 = arith.constant 0 : index
    %102 = vector.load %arg1[%c0_69, %c4_70, %c0_71, %c0_72] : memref<1x18x18x1xbf16, #tpu.memory_space<vmem>>, vector<1x1x18x1xbf16>
    %103 = vector.shape_cast %102 : vector<1x1x18x1xbf16> to vector<18x1xbf16>
    %104 = vector.extract_strided_slice %103 {offsets = [0, 0], sizes = [16, 1], strides = [1, 1]} : vector<18x1xbf16> to vector<16x1xbf16>
    %105 = vector.extract_strided_slice %103 {offsets = [1, 0], sizes = [16, 1], strides = [1, 1]} : vector<18x1xbf16> to vector<16x1xbf16>
    %106 = vector.extract_strided_slice %103 {offsets = [2, 0], sizes = [16, 1], strides = [1, 1]} : vector<18x1xbf16> to vector<16x1xbf16>
    %c0_73 = arith.constant 0 : index
    %c5_74 = arith.constant 5 : index
    %c0_75 = arith.constant 0 : index
    %c0_76 = arith.constant 0 : index
    %107 = vector.load %arg1[%c0_73, %c5_74, %c0_75, %c0_76] : memref<1x18x18x1xbf16, #tpu.memory_space<vmem>>, vector<1x1x18x1xbf16>
    %108 = vector.shape_cast %107 : vector<1x1x18x1xbf16> to vector<18x1xbf16>
    %109 = vector.extract_strided_slice %108 {offsets = [0, 0], sizes = [16, 1], strides = [1, 1]} : vector<18x1xbf16> to vector<16x1xbf16>
    %110 = vector.extract_strided_slice %108 {offsets = [1, 0], sizes = [16, 1], strides = [1, 1]} : vector<18x1xbf16> to vector<16x1xbf16>
    %111 = vector.extract_strided_slice %108 {offsets = [2, 0], sizes = [16, 1], strides = [1, 1]} : vector<18x1xbf16> to vector<16x1xbf16>
    %c0_77 = arith.constant 0 : index
    %c6 = arith.constant 6 : index
    %c0_78 = arith.constant 0 : index
    %c0_79 = arith.constant 0 : index
    %112 = vector.load %arg1[%c0_77, %c6, %c0_78, %c0_79] : memref<1x18x18x1xbf16, #tpu.memory_space<vmem>>, vector<1x1x18x1xbf16>
    %113 = vector.shape_cast %112 : vector<1x1x18x1xbf16> to vector<18x1xbf16>
    %114 = vector.extract_strided_slice %113 {offsets = [0, 0], sizes = [16, 1], strides = [1, 1]} : vector<18x1xbf16> to vector<16x1xbf16>
    %115 = vector.extract_strided_slice %113 {offsets = [1, 0], sizes = [16, 1], strides = [1, 1]} : vector<18x1xbf16> to vector<16x1xbf16>
    %116 = vector.extract_strided_slice %113 {offsets = [2, 0], sizes = [16, 1], strides = [1, 1]} : vector<18x1xbf16> to vector<16x1xbf16>
    %117 = tpu.concatenate %104, %105, %106, %109, %110, %111, %114, %115, %116 in 1 : vector<16x1xbf16>, vector<16x1xbf16>, vector<16x1xbf16>, vector<16x1xbf16>, vector<16x1xbf16>, vector<16x1xbf16>, vector<16x1xbf16>, vector<16x1xbf16>, vector<16x1xbf16> -> vector<16x9xbf16>
    %cst_80 = arith.constant dense<0.000000e+00> : vector<16x8xf32>
    %118 = tpu.matmul %117, %0, %cst_80 {dimension_numbers = #tpu.dot_dimension_numbers<[1], [0], [0], [1], [0, 0, 1, 1], [], []>} : vector<16x9xbf16>, vector<9x8xbf16>, vector<16x8xf32> -> vector<16x8xf32>
    %119 = vector.broadcast %1 : vector<1x8xf32> to vector<16x8xf32>
    %120 = arith.addf %118, %119 : vector<16x8xf32>
    %cst_81 = arith.constant 0.000000e+00 : f32
    %121 = vector.broadcast %cst_81 : f32 to vector<16x8xf32>
    %122 = arith.maximumf %120, %121 : vector<16x8xf32>
    %123 = arith.truncf %122 : vector<16x8xf32> to vector<16x8xbf16>
    %c0_82 = arith.constant 0 : index
    %c4_83 = arith.constant 4 : index
    %c0_84 = arith.constant 0 : index
    %c0_85 = arith.constant 0 : index
    %124 = vector.load %arg4[%c0_82, %c4_83, %c0_84, %c0_85] : memref<1x16x16x8xbf16, #tpu.memory_space<vmem>>, vector<1x1x16x8xbf16>
    %125 = vector.shape_cast %124 : vector<1x1x16x8xbf16> to vector<16x8xbf16>
    %126 = vector.shape_cast %123 : vector<16x8xbf16> to vector<1x1x16x8xbf16>
    tpu.vector_store %arg4[%c0_82, %c4_83, %c0_84, %c0_85], %126 {strides = array<i32>} : memref<1x16x16x8xbf16, #tpu.memory_space<vmem>>, vector<1x1x16x8xbf16>,
    %c0_86 = arith.constant 0 : index
    %c5_87 = arith.constant 5 : index
    %c0_88 = arith.constant 0 : index
    %c0_89 = arith.constant 0 : index
    %127 = vector.load %arg1[%c0_86, %c5_87, %c0_88, %c0_89] : memref<1x18x18x1xbf16, #tpu.memory_space<vmem>>, vector<1x1x18x1xbf16>
    %128 = vector.shape_cast %127 : vector<1x1x18x1xbf16> to vector<18x1xbf16>
    %129 = vector.extract_strided_slice %128 {offsets = [0, 0], sizes = [16, 1], strides = [1, 1]} : vector<18x1xbf16> to vector<16x1xbf16>
    %130 = vector.extract_strided_slice %128 {offsets = [1, 0], sizes = [16, 1], strides = [1, 1]} : vector<18x1xbf16> to vector<16x1xbf16>
    %131 = vector.extract_strided_slice %128 {offsets = [2, 0], sizes = [16, 1], strides = [1, 1]} : vector<18x1xbf16> to vector<16x1xbf16>
    %c0_90 = arith.constant 0 : index
    %c6_91 = arith.constant 6 : index
    %c0_92 = arith.constant 0 : index
    %c0_93 = arith.constant 0 : index
    %132 = vector.load %arg1[%c0_90, %c6_91, %c0_92, %c0_93] : memref<1x18x18x1xbf16, #tpu.memory_space<vmem>>, vector<1x1x18x1xbf16>
    %133 = vector.shape_cast %132 : vector<1x1x18x1xbf16> to vector<18x1xbf16>
    %134 = vector.extract_strided_slice %133 {offsets = [0, 0], sizes = [16, 1], strides = [1, 1]} : vector<18x1xbf16> to vector<16x1xbf16>
    %135 = vector.extract_strided_slice %133 {offsets = [1, 0], sizes = [16, 1], strides = [1, 1]} : vector<18x1xbf16> to vector<16x1xbf16>
    %136 = vector.extract_strided_slice %133 {offsets = [2, 0], sizes = [16, 1], strides = [1, 1]} : vector<18x1xbf16> to vector<16x1xbf16>
    %c0_94 = arith.constant 0 : index
    %c7 = arith.constant 7 : index
    %c0_95 = arith.constant 0 : index
    %c0_96 = arith.constant 0 : index
    %137 = vector.load %arg1[%c0_94, %c7, %c0_95, %c0_96] : memref<1x18x18x1xbf16, #tpu.memory_space<vmem>>, vector<1x1x18x1xbf16>
    %138 = vector.shape_cast %137 : vector<1x1x18x1xbf16> to vector<18x1xbf16>
    %139 = vector.extract_strided_slice %138 {offsets = [0, 0], sizes = [16, 1], strides = [1, 1]} : vector<18x1xbf16> to vector<16x1xbf16>
    %140 = vector.extract_strided_slice %138 {offsets = [1, 0], sizes = [16, 1], strides = [1, 1]} : vector<18x1xbf16> to vector<16x1xbf16>
    %141 = vector.extract_strided_slice %138 {offsets = [2, 0], sizes = [16, 1], strides = [1, 1]} : vector<18x1xbf16> to vector<16x1xbf16>
    %142 = tpu.concatenate %129, %130, %131, %134, %135, %136, %139, %140, %141 in 1 : vector<16x1xbf16>, vector<16x1xbf16>, vector<16x1xbf16>, vector<16x1xbf16>, vector<16x1xbf16>, vector<16x1xbf16>, vector<16x1xbf16>, vector<16x1xbf16>, vector<16x1xbf16> -> vector<16x9xbf16>
    %cst_97 = arith.constant dense<0.000000e+00> : vector<16x8xf32>
    %143 = tpu.matmul %142, %0, %cst_97 {dimension_numbers = #tpu.dot_dimension_numbers<[1], [0], [0], [1], [0, 0, 1, 1], [], []>} : vector<16x9xbf16>, vector<9x8xbf16>, vector<16x8xf32> -> vector<16x8xf32>
    %144 = vector.broadcast %1 : vector<1x8xf32> to vector<16x8xf32>
    %145 = arith.addf %143, %144 : vector<16x8xf32>
    %cst_98 = arith.constant 0.000000e+00 : f32
    %146 = vector.broadcast %cst_98 : f32 to vector<16x8xf32>
    %147 = arith.maximumf %145, %146 : vector<16x8xf32>
    %148 = arith.truncf %147 : vector<16x8xf32> to vector<16x8xbf16>
    %c0_99 = arith.constant 0 : index
    %c5_100 = arith.constant 5 : index
    %c0_101 = arith.constant 0 : index
    %c0_102 = arith.constant 0 : index
    %149 = vector.load %arg4[%c0_99, %c5_100, %c0_101, %c0_102] : memref<1x16x16x8xbf16, #tpu.memory_space<vmem>>, vector<1x1x16x8xbf16>
    %150 = vector.shape_cast %149 : vector<1x1x16x8xbf16> to vector<16x8xbf16>
    %151 = vector.shape_cast %148 : vector<16x8xbf16> to vector<1x1x16x8xbf16>
    tpu.vector_store %arg4[%c0_99, %c5_100, %c0_101, %c0_102], %151 {strides = array<i32>} : memref<1x16x16x8xbf16, #tpu.memory_space<vmem>>, vector<1x1x16x8xbf16>,
    %c0_103 = arith.constant 0 : index
    %c6_104 = arith.constant 6 : index
    %c0_105 = arith.constant 0 : index
    %c0_106 = arith.constant 0 : index
    %152 = vector.load %arg1[%c0_103, %c6_104, %c0_105, %c0_106] : memref<1x18x18x1xbf16, #tpu.memory_space<vmem>>, vector<1x1x18x1xbf16>
    %153 = vector.shape_cast %152 : vector<1x1x18x1xbf16> to vector<18x1xbf16>
    %154 = vector.extract_strided_slice %153 {offsets = [0, 0], sizes = [16, 1], strides = [1, 1]} : vector<18x1xbf16> to vector<16x1xbf16>
    %155 = vector.extract_strided_slice %153 {offsets = [1, 0], sizes = [16, 1], strides = [1, 1]} : vector<18x1xbf16> to vector<16x1xbf16>
    %156 = vector.extract_strided_slice %153 {offsets = [2, 0], sizes = [16, 1], strides = [1, 1]} : vector<18x1xbf16> to vector<16x1xbf16>
    %c0_107 = arith.constant 0 : index
    %c7_108 = arith.constant 7 : index
    %c0_109 = arith.constant 0 : index
    %c0_110 = arith.constant 0 : index
    %157 = vector.load %arg1[%c0_107, %c7_108, %c0_109, %c0_110] : memref<1x18x18x1xbf16, #tpu.memory_space<vmem>>, vector<1x1x18x1xbf16>
    %158 = vector.shape_cast %157 : vector<1x1x18x1xbf16> to vector<18x1xbf16>
    %159 = vector.extract_strided_slice %158 {offsets = [0, 0], sizes = [16, 1], strides = [1, 1]} : vector<18x1xbf16> to vector<16x1xbf16>
    %160 = vector.extract_strided_slice %158 {offsets = [1, 0], sizes = [16, 1], strides = [1, 1]} : vector<18x1xbf16> to vector<16x1xbf16>
    %161 = vector.extract_strided_slice %158 {offsets = [2, 0], sizes = [16, 1], strides = [1, 1]} : vector<18x1xbf16> to vector<16x1xbf16>
    %c0_111 = arith.constant 0 : index
    %c8 = arith.constant 8 : index
    %c0_112 = arith.constant 0 : index
    %c0_113 = arith.constant 0 : index
    %162 = vector.load %arg1[%c0_111, %c8, %c0_112, %c0_113] : memref<1x18x18x1xbf16, #tpu.memory_space<vmem>>, vector<1x1x18x1xbf16>
    %163 = vector.shape_cast %162 : vector<1x1x18x1xbf16> to vector<18x1xbf16>
    %164 = vector.extract_strided_slice %163 {offsets = [0, 0], sizes = [16, 1], strides = [1, 1]} : vector<18x1xbf16> to vector<16x1xbf16>
    %165 = vector.extract_strided_slice %163 {offsets = [1, 0], sizes = [16, 1], strides = [1, 1]} : vector<18x1xbf16> to vector<16x1xbf16>
    %166 = vector.extract_strided_slice %163 {offsets = [2, 0], sizes = [16, 1], strides = [1, 1]} : vector<18x1xbf16> to vector<16x1xbf16>
    %167 = tpu.concatenate %154, %155, %156, %159, %160, %161, %164, %165, %166 in 1 : vector<16x1xbf16>, vector<16x1xbf16>, vector<16x1xbf16>, vector<16x1xbf16>, vector<16x1xbf16>, vector<16x1xbf16>, vector<16x1xbf16>, vector<16x1xbf16>, vector<16x1xbf16> -> vector<16x9xbf16>
    %cst_114 = arith.constant dense<0.000000e+00> : vector<16x8xf32>
    %168 = tpu.matmul %167, %0, %cst_114 {dimension_numbers = #tpu.dot_dimension_numbers<[1], [0], [0], [1], [0, 0, 1, 1], [], []>} : vector<16x9xbf16>, vector<9x8xbf16>, vector<16x8xf32> -> vector<16x8xf32>
    %169 = vector.broadcast %1 : vector<1x8xf32> to vector<16x8xf32>
    %170 = arith.addf %168, %169 : vector<16x8xf32>
    %cst_115 = arith.constant 0.000000e+00 : f32
    %171 = vector.broadcast %cst_115 : f32 to vector<16x8xf32>
    %172 = arith.maximumf %170, %171 : vector<16x8xf32>
    %173 = arith.truncf %172 : vector<16x8xf32> to vector<16x8xbf16>
    %c0_116 = arith.constant 0 : index
    %c6_117 = arith.constant 6 : index
    %c0_118 = arith.constant 0 : index
    %c0_119 = arith.constant 0 : index
    %174 = vector.load %arg4[%c0_116, %c6_117, %c0_118, %c0_119] : memref<1x16x16x8xbf16, #tpu.memory_space<vmem>>, vector<1x1x16x8xbf16>
    %175 = vector.shape_cast %174 : vector<1x1x16x8xbf16> to vector<16x8xbf16>
    %176 = vector.shape_cast %173 : vector<16x8xbf16> to vector<1x1x16x8xbf16>
    tpu.vector_store %arg4[%c0_116, %c6_117, %c0_118, %c0_119], %176 {strides = array<i32>} : memref<1x16x16x8xbf16, #tpu.memory_space<vmem>>, vector<1x1x16x8xbf16>,
    %c0_120 = arith.constant 0 : index
    %c7_121 = arith.constant 7 : index
    %c0_122 = arith.constant 0 : index
    %c0_123 = arith.constant 0 : index
    %177 = vector.load %arg1[%c0_120, %c7_121, %c0_122, %c0_123] : memref<1x18x18x1xbf16, #tpu.memory_space<vmem>>, vector<1x1x18x1xbf16>
    %178 = vector.shape_cast %177 : vector<1x1x18x1xbf16> to vector<18x1xbf16>
    %179 = vector.extract_strided_slice %178 {offsets = [0, 0], sizes = [16, 1], strides = [1, 1]} : vector<18x1xbf16> to vector<16x1xbf16>
    %180 = vector.extract_strided_slice %178 {offsets = [1, 0], sizes = [16, 1], strides = [1, 1]} : vector<18x1xbf16> to vector<16x1xbf16>
    %181 = vector.extract_strided_slice %178 {offsets = [2, 0], sizes = [16, 1], strides = [1, 1]} : vector<18x1xbf16> to vector<16x1xbf16>
    %c0_124 = arith.constant 0 : index
    %c8_125 = arith.constant 8 : index
    %c0_126 = arith.constant 0 : index
    %c0_127 = arith.constant 0 : index
    %182 = vector.load %arg1[%c0_124, %c8_125, %c0_126, %c0_127] : memref<1x18x18x1xbf16, #tpu.memory_space<vmem>>, vector<1x1x18x1xbf16>
    %183 = vector.shape_cast %182 : vector<1x1x18x1xbf16> to vector<18x1xbf16>
    %184 = vector.extract_strided_slice %183 {offsets = [0, 0], sizes = [16, 1], strides = [1, 1]} : vector<18x1xbf16> to vector<16x1xbf16>
    %185 = vector.extract_strided_slice %183 {offsets = [1, 0], sizes = [16, 1], strides = [1, 1]} : vector<18x1xbf16> to vector<16x1xbf16>
    %186 = vector.extract_strided_slice %183 {offsets = [2, 0], sizes = [16, 1], strides = [1, 1]} : vector<18x1xbf16> to vector<16x1xbf16>
    %c0_128 = arith.constant 0 : index
    %c9 = arith.constant 9 : index
    %c0_129 = arith.constant 0 : index
    %c0_130 = arith.constant 0 : index
    %187 = vector.load %arg1[%c0_128, %c9, %c0_129, %c0_130] : memref<1x18x18x1xbf16, #tpu.memory_space<vmem>>, vector<1x1x18x1xbf16>
    %188 = vector.shape_cast %187 : vector<1x1x18x1xbf16> to vector<18x1xbf16>
    %189 = vector.extract_strided_slice %188 {offsets = [0, 0], sizes = [16, 1], strides = [1, 1]} : vector<18x1xbf16> to vector<16x1xbf16>
    %190 = vector.extract_strided_slice %188 {offsets = [1, 0], sizes = [16, 1], strides = [1, 1]} : vector<18x1xbf16> to vector<16x1xbf16>
    %191 = vector.extract_strided_slice %188 {offsets = [2, 0], sizes = [16, 1], strides = [1, 1]} : vector<18x1xbf16> to vector<16x1xbf16>
    %192 = tpu.concatenate %179, %180, %181, %184, %185, %186, %189, %190, %191 in 1 : vector<16x1xbf16>, vector<16x1xbf16>, vector<16x1xbf16>, vector<16x1xbf16>, vector<16x1xbf16>, vector<16x1xbf16>, vector<16x1xbf16>, vector<16x1xbf16>, vector<16x1xbf16> -> vector<16x9xbf16>
    %cst_131 = arith.constant dense<0.000000e+00> : vector<16x8xf32>
    %193 = tpu.matmul %192, %0, %cst_131 {dimension_numbers = #tpu.dot_dimension_numbers<[1], [0], [0], [1], [0, 0, 1, 1], [], []>} : vector<16x9xbf16>, vector<9x8xbf16>, vector<16x8xf32> -> vector<16x8xf32>
    %194 = vector.broadcast %1 : vector<1x8xf32> to vector<16x8xf32>
    %195 = arith.addf %193, %194 : vector<16x8xf32>
    %cst_132 = arith.constant 0.000000e+00 : f32
    %196 = vector.broadcast %cst_132 : f32 to vector<16x8xf32>
    %197 = arith.maximumf %195, %196 : vector<16x8xf32>
    %198 = arith.truncf %197 : vector<16x8xf32> to vector<16x8xbf16>
    %c0_133 = arith.constant 0 : index
    %c7_134 = arith.constant 7 : index
    %c0_135 = arith.constant 0 : index
    %c0_136 = arith.constant 0 : index
    %199 = vector.load %arg4[%c0_133, %c7_134, %c0_135, %c0_136] : memref<1x16x16x8xbf16, #tpu.memory_space<vmem>>, vector<1x1x16x8xbf16>
    %200 = vector.shape_cast %199 : vector<1x1x16x8xbf16> to vector<16x8xbf16>
    %201 = vector.shape_cast %198 : vector<16x8xbf16> to vector<1x1x16x8xbf16>
    tpu.vector_store %arg4[%c0_133, %c7_134, %c0_135, %c0_136], %201 {strides = array<i32>} : memref<1x16x16x8xbf16, #tpu.memory_space<vmem>>, vector<1x1x16x8xbf16>,
    %c0_137 = arith.constant 0 : index
    %c8_138 = arith.constant 8 : index
    %c0_139 = arith.constant 0 : index
    %c0_140 = arith.constant 0 : index
    %202 = vector.load %arg1[%c0_137, %c8_138, %c0_139, %c0_140] : memref<1x18x18x1xbf16, #tpu.memory_space<vmem>>, vector<1x1x18x1xbf16>
    %203 = vector.shape_cast %202 : vector<1x1x18x1xbf16> to vector<18x1xbf16>
    %204 = vector.extract_strided_slice %203 {offsets = [0, 0], sizes = [16, 1], strides = [1, 1]} : vector<18x1xbf16> to vector<16x1xbf16>
    %205 = vector.extract_strided_slice %203 {offsets = [1, 0], sizes = [16, 1], strides = [1, 1]} : vector<18x1xbf16> to vector<16x1xbf16>
    %206 = vector.extract_strided_slice %203 {offsets = [2, 0], sizes = [16, 1], strides = [1, 1]} : vector<18x1xbf16> to vector<16x1xbf16>
    %c0_141 = arith.constant 0 : index
    %c9_142 = arith.constant 9 : index
    %c0_143 = arith.constant 0 : index
    %c0_144 = arith.constant 0 : index
    %207 = vector.load %arg1[%c0_141, %c9_142, %c0_143, %c0_144] : memref<1x18x18x1xbf16, #tpu.memory_space<vmem>>, vector<1x1x18x1xbf16>
    %208 = vector.shape_cast %207 : vector<1x1x18x1xbf16> to vector<18x1xbf16>
    %209 = vector.extract_strided_slice %208 {offsets = [0, 0], sizes = [16, 1], strides = [1, 1]} : vector<18x1xbf16> to vector<16x1xbf16>
    %210 = vector.extract_strided_slice %208 {offsets = [1, 0], sizes = [16, 1], strides = [1, 1]} : vector<18x1xbf16> to vector<16x1xbf16>
    %211 = vector.extract_strided_slice %208 {offsets = [2, 0], sizes = [16, 1], strides = [1, 1]} : vector<18x1xbf16> to vector<16x1xbf16>
    %c0_145 = arith.constant 0 : index
    %c10 = arith.constant 10 : index
    %c0_146 = arith.constant 0 : index
    %c0_147 = arith.constant 0 : index
    %212 = vector.load %arg1[%c0_145, %c10, %c0_146, %c0_147] : memref<1x18x18x1xbf16, #tpu.memory_space<vmem>>, vector<1x1x18x1xbf16>
    %213 = vector.shape_cast %212 : vector<1x1x18x1xbf16> to vector<18x1xbf16>
    %214 = vector.extract_strided_slice %213 {offsets = [0, 0], sizes = [16, 1], strides = [1, 1]} : vector<18x1xbf16> to vector<16x1xbf16>
    %215 = vector.extract_strided_slice %213 {offsets = [1, 0], sizes = [16, 1], strides = [1, 1]} : vector<18x1xbf16> to vector<16x1xbf16>
    %216 = vector.extract_strided_slice %213 {offsets = [2, 0], sizes = [16, 1], strides = [1, 1]} : vector<18x1xbf16> to vector<16x1xbf16>
    %217 = tpu.concatenate %204, %205, %206, %209, %210, %211, %214, %215, %216 in 1 : vector<16x1xbf16>, vector<16x1xbf16>, vector<16x1xbf16>, vector<16x1xbf16>, vector<16x1xbf16>, vector<16x1xbf16>, vector<16x1xbf16>, vector<16x1xbf16>, vector<16x1xbf16> -> vector<16x9xbf16>
    %cst_148 = arith.constant dense<0.000000e+00> : vector<16x8xf32>
    %218 = tpu.matmul %217, %0, %cst_148 {dimension_numbers = #tpu.dot_dimension_numbers<[1], [0], [0], [1], [0, 0, 1, 1], [], []>} : vector<16x9xbf16>, vector<9x8xbf16>, vector<16x8xf32> -> vector<16x8xf32>
    %219 = vector.broadcast %1 : vector<1x8xf32> to vector<16x8xf32>
    %220 = arith.addf %218, %219 : vector<16x8xf32>
    %cst_149 = arith.constant 0.000000e+00 : f32
    %221 = vector.broadcast %cst_149 : f32 to vector<16x8xf32>
    %222 = arith.maximumf %220, %221 : vector<16x8xf32>
    %223 = arith.truncf %222 : vector<16x8xf32> to vector<16x8xbf16>
    %c0_150 = arith.constant 0 : index
    %c8_151 = arith.constant 8 : index
    %c0_152 = arith.constant 0 : index
    %c0_153 = arith.constant 0 : index
    %224 = vector.load %arg4[%c0_150, %c8_151, %c0_152, %c0_153] : memref<1x16x16x8xbf16, #tpu.memory_space<vmem>>, vector<1x1x16x8xbf16>
    %225 = vector.shape_cast %224 : vector<1x1x16x8xbf16> to vector<16x8xbf16>
    %226 = vector.shape_cast %223 : vector<16x8xbf16> to vector<1x1x16x8xbf16>
    tpu.vector_store %arg4[%c0_150, %c8_151, %c0_152, %c0_153], %226 {strides = array<i32>} : memref<1x16x16x8xbf16, #tpu.memory_space<vmem>>, vector<1x1x16x8xbf16>,
    %c0_154 = arith.constant 0 : index
    %c9_155 = arith.constant 9 : index
    %c0_156 = arith.constant 0 : index
    %c0_157 = arith.constant 0 : index
    %227 = vector.load %arg1[%c0_154, %c9_155, %c0_156, %c0_157] : memref<1x18x18x1xbf16, #tpu.memory_space<vmem>>, vector<1x1x18x1xbf16>
    %228 = vector.shape_cast %227 : vector<1x1x18x1xbf16> to vector<18x1xbf16>
    %229 = vector.extract_strided_slice %228 {offsets = [0, 0], sizes = [16, 1], strides = [1, 1]} : vector<18x1xbf16> to vector<16x1xbf16>
    %230 = vector.extract_strided_slice %228 {offsets = [1, 0], sizes = [16, 1], strides = [1, 1]} : vector<18x1xbf16> to vector<16x1xbf16>
    %231 = vector.extract_strided_slice %228 {offsets = [2, 0], sizes = [16, 1], strides = [1, 1]} : vector<18x1xbf16> to vector<16x1xbf16>
    %c0_158 = arith.constant 0 : index
    %c10_159 = arith.constant 10 : index
    %c0_160 = arith.constant 0 : index
    %c0_161 = arith.constant 0 : index
    %232 = vector.load %arg1[%c0_158, %c10_159, %c0_160, %c0_161] : memref<1x18x18x1xbf16, #tpu.memory_space<vmem>>, vector<1x1x18x1xbf16>
    %233 = vector.shape_cast %232 : vector<1x1x18x1xbf16> to vector<18x1xbf16>
    %234 = vector.extract_strided_slice %233 {offsets = [0, 0], sizes = [16, 1], strides = [1, 1]} : vector<18x1xbf16> to vector<16x1xbf16>
    %235 = vector.extract_strided_slice %233 {offsets = [1, 0], sizes = [16, 1], strides = [1, 1]} : vector<18x1xbf16> to vector<16x1xbf16>
    %236 = vector.extract_strided_slice %233 {offsets = [2, 0], sizes = [16, 1], strides = [1, 1]} : vector<18x1xbf16> to vector<16x1xbf16>
    %c0_162 = arith.constant 0 : index
    %c11 = arith.constant 11 : index
    %c0_163 = arith.constant 0 : index
    %c0_164 = arith.constant 0 : index
    %237 = vector.load %arg1[%c0_162, %c11, %c0_163, %c0_164] : memref<1x18x18x1xbf16, #tpu.memory_space<vmem>>, vector<1x1x18x1xbf16>
    %238 = vector.shape_cast %237 : vector<1x1x18x1xbf16> to vector<18x1xbf16>
    %239 = vector.extract_strided_slice %238 {offsets = [0, 0], sizes = [16, 1], strides = [1, 1]} : vector<18x1xbf16> to vector<16x1xbf16>
    %240 = vector.extract_strided_slice %238 {offsets = [1, 0], sizes = [16, 1], strides = [1, 1]} : vector<18x1xbf16> to vector<16x1xbf16>
    %241 = vector.extract_strided_slice %238 {offsets = [2, 0], sizes = [16, 1], strides = [1, 1]} : vector<18x1xbf16> to vector<16x1xbf16>
    %242 = tpu.concatenate %229, %230, %231, %234, %235, %236, %239, %240, %241 in 1 : vector<16x1xbf16>, vector<16x1xbf16>, vector<16x1xbf16>, vector<16x1xbf16>, vector<16x1xbf16>, vector<16x1xbf16>, vector<16x1xbf16>, vector<16x1xbf16>, vector<16x1xbf16> -> vector<16x9xbf16>
    %cst_165 = arith.constant dense<0.000000e+00> : vector<16x8xf32>
    %243 = tpu.matmul %242, %0, %cst_165 {dimension_numbers = #tpu.dot_dimension_numbers<[1], [0], [0], [1], [0, 0, 1, 1], [], []>} : vector<16x9xbf16>, vector<9x8xbf16>, vector<16x8xf32> -> vector<16x8xf32>
    %244 = vector.broadcast %1 : vector<1x8xf32> to vector<16x8xf32>
    %245 = arith.addf %243, %244 : vector<16x8xf32>
    %cst_166 = arith.constant 0.000000e+00 : f32
    %246 = vector.broadcast %cst_166 : f32 to vector<16x8xf32>
    %247 = arith.maximumf %245, %246 : vector<16x8xf32>
    %248 = arith.truncf %247 : vector<16x8xf32> to vector<16x8xbf16>
    %c0_167 = arith.constant 0 : index
    %c9_168 = arith.constant 9 : index
    %c0_169 = arith.constant 0 : index
    %c0_170 = arith.constant 0 : index
    %249 = vector.load %arg4[%c0_167, %c9_168, %c0_169, %c0_170] : memref<1x16x16x8xbf16, #tpu.memory_space<vmem>>, vector<1x1x16x8xbf16>
    %250 = vector.shape_cast %249 : vector<1x1x16x8xbf16> to vector<16x8xbf16>
    %251 = vector.shape_cast %248 : vector<16x8xbf16> to vector<1x1x16x8xbf16>
    tpu.vector_store %arg4[%c0_167, %c9_168, %c0_169, %c0_170], %251 {strides = array<i32>} : memref<1x16x16x8xbf16, #tpu.memory_space<vmem>>, vector<1x1x16x8xbf16>,
    %c0_171 = arith.constant 0 : index
    %c10_172 = arith.constant 10 : index
    %c0_173 = arith.constant 0 : index
    %c0_174 = arith.constant 0 : index
    %252 = vector.load %arg1[%c0_171, %c10_172, %c0_173, %c0_174] : memref<1x18x18x1xbf16, #tpu.memory_space<vmem>>, vector<1x1x18x1xbf16>
    %253 = vector.shape_cast %252 : vector<1x1x18x1xbf16> to vector<18x1xbf16>
    %254 = vector.extract_strided_slice %253 {offsets = [0, 0], sizes = [16, 1], strides = [1, 1]} : vector<18x1xbf16> to vector<16x1xbf16>
    %255 = vector.extract_strided_slice %253 {offsets = [1, 0], sizes = [16, 1], strides = [1, 1]} : vector<18x1xbf16> to vector<16x1xbf16>
    %256 = vector.extract_strided_slice %253 {offsets = [2, 0], sizes = [16, 1], strides = [1, 1]} : vector<18x1xbf16> to vector<16x1xbf16>
    %c0_175 = arith.constant 0 : index
    %c11_176 = arith.constant 11 : index
    %c0_177 = arith.constant 0 : index
    %c0_178 = arith.constant 0 : index
    %257 = vector.load %arg1[%c0_175, %c11_176, %c0_177, %c0_178] : memref<1x18x18x1xbf16, #tpu.memory_space<vmem>>, vector<1x1x18x1xbf16>
    %258 = vector.shape_cast %257 : vector<1x1x18x1xbf16> to vector<18x1xbf16>
    %259 = vector.extract_strided_slice %258 {offsets = [0, 0], sizes = [16, 1], strides = [1, 1]} : vector<18x1xbf16> to vector<16x1xbf16>
    %260 = vector.extract_strided_slice %258 {offsets = [1, 0], sizes = [16, 1], strides = [1, 1]} : vector<18x1xbf16> to vector<16x1xbf16>
    %261 = vector.extract_strided_slice %258 {offsets = [2, 0], sizes = [16, 1], strides = [1, 1]} : vector<18x1xbf16> to vector<16x1xbf16>
    %c0_179 = arith.constant 0 : index
    %c12 = arith.constant 12 : index
    %c0_180 = arith.constant 0 : index
    %c0_181 = arith.constant 0 : index
    %262 = vector.load %arg1[%c0_179, %c12, %c0_180, %c0_181] : memref<1x18x18x1xbf16, #tpu.memory_space<vmem>>, vector<1x1x18x1xbf16>
    %263 = vector.shape_cast %262 : vector<1x1x18x1xbf16> to vector<18x1xbf16>
    %264 = vector.extract_strided_slice %263 {offsets = [0, 0], sizes = [16, 1], strides = [1, 1]} : vector<18x1xbf16> to vector<16x1xbf16>
    %265 = vector.extract_strided_slice %263 {offsets = [1, 0], sizes = [16, 1], strides = [1, 1]} : vector<18x1xbf16> to vector<16x1xbf16>
    %266 = vector.extract_strided_slice %263 {offsets = [2, 0], sizes = [16, 1], strides = [1, 1]} : vector<18x1xbf16> to vector<16x1xbf16>
    %267 = tpu.concatenate %254, %255, %256, %259, %260, %261, %264, %265, %266 in 1 : vector<16x1xbf16>, vector<16x1xbf16>, vector<16x1xbf16>, vector<16x1xbf16>, vector<16x1xbf16>, vector<16x1xbf16>, vector<16x1xbf16>, vector<16x1xbf16>, vector<16x1xbf16> -> vector<16x9xbf16>
    %cst_182 = arith.constant dense<0.000000e+00> : vector<16x8xf32>
    %268 = tpu.matmul %267, %0, %cst_182 {dimension_numbers = #tpu.dot_dimension_numbers<[1], [0], [0], [1], [0, 0, 1, 1], [], []>} : vector<16x9xbf16>, vector<9x8xbf16>, vector<16x8xf32> -> vector<16x8xf32>
    %269 = vector.broadcast %1 : vector<1x8xf32> to vector<16x8xf32>
    %270 = arith.addf %268, %269 : vector<16x8xf32>
    %cst_183 = arith.constant 0.000000e+00 : f32
    %271 = vector.broadcast %cst_183 : f32 to vector<16x8xf32>
    %272 = arith.maximumf %270, %271 : vector<16x8xf32>
    %273 = arith.truncf %272 : vector<16x8xf32> to vector<16x8xbf16>
    %c0_184 = arith.constant 0 : index
    %c10_185 = arith.constant 10 : index
    %c0_186 = arith.constant 0 : index
    %c0_187 = arith.constant 0 : index
    %274 = vector.load %arg4[%c0_184, %c10_185, %c0_186, %c0_187] : memref<1x16x16x8xbf16, #tpu.memory_space<vmem>>, vector<1x1x16x8xbf16>
    %275 = vector.shape_cast %274 : vector<1x1x16x8xbf16> to vector<16x8xbf16>
    %276 = vector.shape_cast %273 : vector<16x8xbf16> to vector<1x1x16x8xbf16>
    tpu.vector_store %arg4[%c0_184, %c10_185, %c0_186, %c0_187], %276 {strides = array<i32>} : memref<1x16x16x8xbf16, #tpu.memory_space<vmem>>, vector<1x1x16x8xbf16>,
    %c0_188 = arith.constant 0 : index
    %c11_189 = arith.constant 11 : index
    %c0_190 = arith.constant 0 : index
    %c0_191 = arith.constant 0 : index
    %277 = vector.load %arg1[%c0_188, %c11_189, %c0_190, %c0_191] : memref<1x18x18x1xbf16, #tpu.memory_space<vmem>>, vector<1x1x18x1xbf16>
    %278 = vector.shape_cast %277 : vector<1x1x18x1xbf16> to vector<18x1xbf16>
    %279 = vector.extract_strided_slice %278 {offsets = [0, 0], sizes = [16, 1], strides = [1, 1]} : vector<18x1xbf16> to vector<16x1xbf16>
    %280 = vector.extract_strided_slice %278 {offsets = [1, 0], sizes = [16, 1], strides = [1, 1]} : vector<18x1xbf16> to vector<16x1xbf16>
    %281 = vector.extract_strided_slice %278 {offsets = [2, 0], sizes = [16, 1], strides = [1, 1]} : vector<18x1xbf16> to vector<16x1xbf16>
    %c0_192 = arith.constant 0 : index
    %c12_193 = arith.constant 12 : index
    %c0_194 = arith.constant 0 : index
    %c0_195 = arith.constant 0 : index
    %282 = vector.load %arg1[%c0_192, %c12_193, %c0_194, %c0_195] : memref<1x18x18x1xbf16, #tpu.memory_space<vmem>>, vector<1x1x18x1xbf16>
    %283 = vector.shape_cast %282 : vector<1x1x18x1xbf16> to vector<18x1xbf16>
    %284 = vector.extract_strided_slice %283 {offsets = [0, 0], sizes = [16, 1], strides = [1, 1]} : vector<18x1xbf16> to vector<16x1xbf16>
    %285 = vector.extract_strided_slice %283 {offsets = [1, 0], sizes = [16, 1], strides = [1, 1]} : vector<18x1xbf16> to vector<16x1xbf16>
    %286 = vector.extract_strided_slice %283 {offsets = [2, 0], sizes = [16, 1], strides = [1, 1]} : vector<18x1xbf16> to vector<16x1xbf16>
    %c0_196 = arith.constant 0 : index
    %c13 = arith.constant 13 : index
    %c0_197 = arith.constant 0 : index
    %c0_198 = arith.constant 0 : index
    %287 = vector.load %arg1[%c0_196, %c13, %c0_197, %c0_198] : memref<1x18x18x1xbf16, #tpu.memory_space<vmem>>, vector<1x1x18x1xbf16>
    %288 = vector.shape_cast %287 : vector<1x1x18x1xbf16> to vector<18x1xbf16>
    %289 = vector.extract_strided_slice %288 {offsets = [0, 0], sizes = [16, 1], strides = [1, 1]} : vector<18x1xbf16> to vector<16x1xbf16>
    %290 = vector.extract_strided_slice %288 {offsets = [1, 0], sizes = [16, 1], strides = [1, 1]} : vector<18x1xbf16> to vector<16x1xbf16>
    %291 = vector.extract_strided_slice %288 {offsets = [2, 0], sizes = [16, 1], strides = [1, 1]} : vector<18x1xbf16> to vector<16x1xbf16>
    %292 = tpu.concatenate %279, %280, %281, %284, %285, %286, %289, %290, %291 in 1 : vector<16x1xbf16>, vector<16x1xbf16>, vector<16x1xbf16>, vector<16x1xbf16>, vector<16x1xbf16>, vector<16x1xbf16>, vector<16x1xbf16>, vector<16x1xbf16>, vector<16x1xbf16> -> vector<16x9xbf16>
    %cst_199 = arith.constant dense<0.000000e+00> : vector<16x8xf32>
    %293 = tpu.matmul %292, %0, %cst_199 {dimension_numbers = #tpu.dot_dimension_numbers<[1], [0], [0], [1], [0, 0, 1, 1], [], []>} : vector<16x9xbf16>, vector<9x8xbf16>, vector<16x8xf32> -> vector<16x8xf32>
    %294 = vector.broadcast %1 : vector<1x8xf32> to vector<16x8xf32>
    %295 = arith.addf %293, %294 : vector<16x8xf32>
    %cst_200 = arith.constant 0.000000e+00 : f32
    %296 = vector.broadcast %cst_200 : f32 to vector<16x8xf32>
    %297 = arith.maximumf %295, %296 : vector<16x8xf32>
    %298 = arith.truncf %297 : vector<16x8xf32> to vector<16x8xbf16>
    %c0_201 = arith.constant 0 : index
    %c11_202 = arith.constant 11 : index
    %c0_203 = arith.constant 0 : index
    %c0_204 = arith.constant 0 : index
    %299 = vector.load %arg4[%c0_201, %c11_202, %c0_203, %c0_204] : memref<1x16x16x8xbf16, #tpu.memory_space<vmem>>, vector<1x1x16x8xbf16>
    %300 = vector.shape_cast %299 : vector<1x1x16x8xbf16> to vector<16x8xbf16>
    %301 = vector.shape_cast %298 : vector<16x8xbf16> to vector<1x1x16x8xbf16>
    tpu.vector_store %arg4[%c0_201, %c11_202, %c0_203, %c0_204], %301 {strides = array<i32>} : memref<1x16x16x8xbf16, #tpu.memory_space<vmem>>, vector<1x1x16x8xbf16>,
    %c0_205 = arith.constant 0 : index
    %c12_206 = arith.constant 12 : index
    %c0_207 = arith.constant 0 : index
    %c0_208 = arith.constant 0 : index
    %302 = vector.load %arg1[%c0_205, %c12_206, %c0_207, %c0_208] : memref<1x18x18x1xbf16, #tpu.memory_space<vmem>>, vector<1x1x18x1xbf16>
    %303 = vector.shape_cast %302 : vector<1x1x18x1xbf16> to vector<18x1xbf16>
    %304 = vector.extract_strided_slice %303 {offsets = [0, 0], sizes = [16, 1], strides = [1, 1]} : vector<18x1xbf16> to vector<16x1xbf16>
    %305 = vector.extract_strided_slice %303 {offsets = [1, 0], sizes = [16, 1], strides = [1, 1]} : vector<18x1xbf16> to vector<16x1xbf16>
    %306 = vector.extract_strided_slice %303 {offsets = [2, 0], sizes = [16, 1], strides = [1, 1]} : vector<18x1xbf16> to vector<16x1xbf16>
    %c0_209 = arith.constant 0 : index
    %c13_210 = arith.constant 13 : index
    %c0_211 = arith.constant 0 : index
    %c0_212 = arith.constant 0 : index
    %307 = vector.load %arg1[%c0_209, %c13_210, %c0_211, %c0_212] : memref<1x18x18x1xbf16, #tpu.memory_space<vmem>>, vector<1x1x18x1xbf16>
    %308 = vector.shape_cast %307 : vector<1x1x18x1xbf16> to vector<18x1xbf16>
    %309 = vector.extract_strided_slice %308 {offsets = [0, 0], sizes = [16, 1], strides = [1, 1]} : vector<18x1xbf16> to vector<16x1xbf16>
    %310 = vector.extract_strided_slice %308 {offsets = [1, 0], sizes = [16, 1], strides = [1, 1]} : vector<18x1xbf16> to vector<16x1xbf16>
    %311 = vector.extract_strided_slice %308 {offsets = [2, 0], sizes = [16, 1], strides = [1, 1]} : vector<18x1xbf16> to vector<16x1xbf16>
    %c0_213 = arith.constant 0 : index
    %c14 = arith.constant 14 : index
    %c0_214 = arith.constant 0 : index
    %c0_215 = arith.constant 0 : index
    %312 = vector.load %arg1[%c0_213, %c14, %c0_214, %c0_215] : memref<1x18x18x1xbf16, #tpu.memory_space<vmem>>, vector<1x1x18x1xbf16>
    %313 = vector.shape_cast %312 : vector<1x1x18x1xbf16> to vector<18x1xbf16>
    %314 = vector.extract_strided_slice %313 {offsets = [0, 0], sizes = [16, 1], strides = [1, 1]} : vector<18x1xbf16> to vector<16x1xbf16>
    %315 = vector.extract_strided_slice %313 {offsets = [1, 0], sizes = [16, 1], strides = [1, 1]} : vector<18x1xbf16> to vector<16x1xbf16>
    %316 = vector.extract_strided_slice %313 {offsets = [2, 0], sizes = [16, 1], strides = [1, 1]} : vector<18x1xbf16> to vector<16x1xbf16>
    %317 = tpu.concatenate %304, %305, %306, %309, %310, %311, %314, %315, %316 in 1 : vector<16x1xbf16>, vector<16x1xbf16>, vector<16x1xbf16>, vector<16x1xbf16>, vector<16x1xbf16>, vector<16x1xbf16>, vector<16x1xbf16>, vector<16x1xbf16>, vector<16x1xbf16> -> vector<16x9xbf16>
    %cst_216 = arith.constant dense<0.000000e+00> : vector<16x8xf32>
    %318 = tpu.matmul %317, %0, %cst_216 {dimension_numbers = #tpu.dot_dimension_numbers<[1], [0], [0], [1], [0, 0, 1, 1], [], []>} : vector<16x9xbf16>, vector<9x8xbf16>, vector<16x8xf32> -> vector<16x8xf32>
    %319 = vector.broadcast %1 : vector<1x8xf32> to vector<16x8xf32>
    %320 = arith.addf %318, %319 : vector<16x8xf32>
    %cst_217 = arith.constant 0.000000e+00 : f32
    %321 = vector.broadcast %cst_217 : f32 to vector<16x8xf32>
    %322 = arith.maximumf %320, %321 : vector<16x8xf32>
    %323 = arith.truncf %322 : vector<16x8xf32> to vector<16x8xbf16>
    %c0_218 = arith.constant 0 : index
    %c12_219 = arith.constant 12 : index
    %c0_220 = arith.constant 0 : index
    %c0_221 = arith.constant 0 : index
    %324 = vector.load %arg4[%c0_218, %c12_219, %c0_220, %c0_221] : memref<1x16x16x8xbf16, #tpu.memory_space<vmem>>, vector<1x1x16x8xbf16>
    %325 = vector.shape_cast %324 : vector<1x1x16x8xbf16> to vector<16x8xbf16>
    %326 = vector.shape_cast %323 : vector<16x8xbf16> to vector<1x1x16x8xbf16>
    tpu.vector_store %arg4[%c0_218, %c12_219, %c0_220, %c0_221], %326 {strides = array<i32>} : memref<1x16x16x8xbf16, #tpu.memory_space<vmem>>, vector<1x1x16x8xbf16>,
    %c0_222 = arith.constant 0 : index
    %c13_223 = arith.constant 13 : index
    %c0_224 = arith.constant 0 : index
    %c0_225 = arith.constant 0 : index
    %327 = vector.load %arg1[%c0_222, %c13_223, %c0_224, %c0_225] : memref<1x18x18x1xbf16, #tpu.memory_space<vmem>>, vector<1x1x18x1xbf16>
    %328 = vector.shape_cast %327 : vector<1x1x18x1xbf16> to vector<18x1xbf16>
    %329 = vector.extract_strided_slice %328 {offsets = [0, 0], sizes = [16, 1], strides = [1, 1]} : vector<18x1xbf16> to vector<16x1xbf16>
    %330 = vector.extract_strided_slice %328 {offsets = [1, 0], sizes = [16, 1], strides = [1, 1]} : vector<18x1xbf16> to vector<16x1xbf16>
    %331 = vector.extract_strided_slice %328 {offsets = [2, 0], sizes = [16, 1], strides = [1, 1]} : vector<18x1xbf16> to vector<16x1xbf16>
    %c0_226 = arith.constant 0 : index
    %c14_227 = arith.constant 14 : index
    %c0_228 = arith.constant 0 : index
    %c0_229 = arith.constant 0 : index
    %332 = vector.load %arg1[%c0_226, %c14_227, %c0_228, %c0_229] : memref<1x18x18x1xbf16, #tpu.memory_space<vmem>>, vector<1x1x18x1xbf16>
    %333 = vector.shape_cast %332 : vector<1x1x18x1xbf16> to vector<18x1xbf16>
    %334 = vector.extract_strided_slice %333 {offsets = [0, 0], sizes = [16, 1], strides = [1, 1]} : vector<18x1xbf16> to vector<16x1xbf16>
    %335 = vector.extract_strided_slice %333 {offsets = [1, 0], sizes = [16, 1], strides = [1, 1]} : vector<18x1xbf16> to vector<16x1xbf16>
    %336 = vector.extract_strided_slice %333 {offsets = [2, 0], sizes = [16, 1], strides = [1, 1]} : vector<18x1xbf16> to vector<16x1xbf16>
    %c0_230 = arith.constant 0 : index
    %c15 = arith.constant 15 : index
    %c0_231 = arith.constant 0 : index
    %c0_232 = arith.constant 0 : index
    %337 = vector.load %arg1[%c0_230, %c15, %c0_231, %c0_232] : memref<1x18x18x1xbf16, #tpu.memory_space<vmem>>, vector<1x1x18x1xbf16>
    %338 = vector.shape_cast %337 : vector<1x1x18x1xbf16> to vector<18x1xbf16>
    %339 = vector.extract_strided_slice %338 {offsets = [0, 0], sizes = [16, 1], strides = [1, 1]} : vector<18x1xbf16> to vector<16x1xbf16>
    %340 = vector.extract_strided_slice %338 {offsets = [1, 0], sizes = [16, 1], strides = [1, 1]} : vector<18x1xbf16> to vector<16x1xbf16>
    %341 = vector.extract_strided_slice %338 {offsets = [2, 0], sizes = [16, 1], strides = [1, 1]} : vector<18x1xbf16> to vector<16x1xbf16>
    %342 = tpu.concatenate %329, %330, %331, %334, %335, %336, %339, %340, %341 in 1 : vector<16x1xbf16>, vector<16x1xbf16>, vector<16x1xbf16>, vector<16x1xbf16>, vector<16x1xbf16>, vector<16x1xbf16>, vector<16x1xbf16>, vector<16x1xbf16>, vector<16x1xbf16> -> vector<16x9xbf16>
    %cst_233 = arith.constant dense<0.000000e+00> : vector<16x8xf32>
    %343 = tpu.matmul %342, %0, %cst_233 {dimension_numbers = #tpu.dot_dimension_numbers<[1], [0], [0], [1], [0, 0, 1, 1], [], []>} : vector<16x9xbf16>, vector<9x8xbf16>, vector<16x8xf32> -> vector<16x8xf32>
    %344 = vector.broadcast %1 : vector<1x8xf32> to vector<16x8xf32>
    %345 = arith.addf %343, %344 : vector<16x8xf32>
    %cst_234 = arith.constant 0.000000e+00 : f32
    %346 = vector.broadcast %cst_234 : f32 to vector<16x8xf32>
    %347 = arith.maximumf %345, %346 : vector<16x8xf32>
    %348 = arith.truncf %347 : vector<16x8xf32> to vector<16x8xbf16>
    %c0_235 = arith.constant 0 : index
    %c13_236 = arith.constant 13 : index
    %c0_237 = arith.constant 0 : index
    %c0_238 = arith.constant 0 : index
    %349 = vector.load %arg4[%c0_235, %c13_236, %c0_237, %c0_238] : memref<1x16x16x8xbf16, #tpu.memory_space<vmem>>, vector<1x1x16x8xbf16>
    %350 = vector.shape_cast %349 : vector<1x1x16x8xbf16> to vector<16x8xbf16>
    %351 = vector.shape_cast %348 : vector<16x8xbf16> to vector<1x1x16x8xbf16>
    tpu.vector_store %arg4[%c0_235, %c13_236, %c0_237, %c0_238], %351 {strides = array<i32>} : memref<1x16x16x8xbf16, #tpu.memory_space<vmem>>, vector<1x1x16x8xbf16>,
    %c0_239 = arith.constant 0 : index
    %c14_240 = arith.constant 14 : index
    %c0_241 = arith.constant 0 : index
    %c0_242 = arith.constant 0 : index
    %352 = vector.load %arg1[%c0_239, %c14_240, %c0_241, %c0_242] : memref<1x18x18x1xbf16, #tpu.memory_space<vmem>>, vector<1x1x18x1xbf16>
    %353 = vector.shape_cast %352 : vector<1x1x18x1xbf16> to vector<18x1xbf16>
    %354 = vector.extract_strided_slice %353 {offsets = [0, 0], sizes = [16, 1], strides = [1, 1]} : vector<18x1xbf16> to vector<16x1xbf16>
    %355 = vector.extract_strided_slice %353 {offsets = [1, 0], sizes = [16, 1], strides = [1, 1]} : vector<18x1xbf16> to vector<16x1xbf16>
    %356 = vector.extract_strided_slice %353 {offsets = [2, 0], sizes = [16, 1], strides = [1, 1]} : vector<18x1xbf16> to vector<16x1xbf16>
    %c0_243 = arith.constant 0 : index
    %c15_244 = arith.constant 15 : index
    %c0_245 = arith.constant 0 : index
    %c0_246 = arith.constant 0 : index
    %357 = vector.load %arg1[%c0_243, %c15_244, %c0_245, %c0_246] : memref<1x18x18x1xbf16, #tpu.memory_space<vmem>>, vector<1x1x18x1xbf16>
    %358 = vector.shape_cast %357 : vector<1x1x18x1xbf16> to vector<18x1xbf16>
    %359 = vector.extract_strided_slice %358 {offsets = [0, 0], sizes = [16, 1], strides = [1, 1]} : vector<18x1xbf16> to vector<16x1xbf16>
    %360 = vector.extract_strided_slice %358 {offsets = [1, 0], sizes = [16, 1], strides = [1, 1]} : vector<18x1xbf16> to vector<16x1xbf16>
    %361 = vector.extract_strided_slice %358 {offsets = [2, 0], sizes = [16, 1], strides = [1, 1]} : vector<18x1xbf16> to vector<16x1xbf16>
    %c0_247 = arith.constant 0 : index
    %c16 = arith.constant 16 : index
    %c0_248 = arith.constant 0 : index
    %c0_249 = arith.constant 0 : index
    %362 = vector.load %arg1[%c0_247, %c16, %c0_248, %c0_249] : memref<1x18x18x1xbf16, #tpu.memory_space<vmem>>, vector<1x1x18x1xbf16>
    %363 = vector.shape_cast %362 : vector<1x1x18x1xbf16> to vector<18x1xbf16>
    %364 = vector.extract_strided_slice %363 {offsets = [0, 0], sizes = [16, 1], strides = [1, 1]} : vector<18x1xbf16> to vector<16x1xbf16>
    %365 = vector.extract_strided_slice %363 {offsets = [1, 0], sizes = [16, 1], strides = [1, 1]} : vector<18x1xbf16> to vector<16x1xbf16>
    %366 = vector.extract_strided_slice %363 {offsets = [2, 0], sizes = [16, 1], strides = [1, 1]} : vector<18x1xbf16> to vector<16x1xbf16>
    %367 = tpu.concatenate %354, %355, %356, %359, %360, %361, %364, %365, %366 in 1 : vector<16x1xbf16>, vector<16x1xbf16>, vector<16x1xbf16>, vector<16x1xbf16>, vector<16x1xbf16>, vector<16x1xbf16>, vector<16x1xbf16>, vector<16x1xbf16>, vector<16x1xbf16> -> vector<16x9xbf16>
    %cst_250 = arith.constant dense<0.000000e+00> : vector<16x8xf32>
    %368 = tpu.matmul %367, %0, %cst_250 {dimension_numbers = #tpu.dot_dimension_numbers<[1], [0], [0], [1], [0, 0, 1, 1], [], []>} : vector<16x9xbf16>, vector<9x8xbf16>, vector<16x8xf32> -> vector<16x8xf32>
    %369 = vector.broadcast %1 : vector<1x8xf32> to vector<16x8xf32>
    %370 = arith.addf %368, %369 : vector<16x8xf32>
    %cst_251 = arith.constant 0.000000e+00 : f32
    %371 = vector.broadcast %cst_251 : f32 to vector<16x8xf32>
    %372 = arith.maximumf %370, %371 : vector<16x8xf32>
    %373 = arith.truncf %372 : vector<16x8xf32> to vector<16x8xbf16>
    %c0_252 = arith.constant 0 : index
    %c14_253 = arith.constant 14 : index
    %c0_254 = arith.constant 0 : index
    %c0_255 = arith.constant 0 : index
    %374 = vector.load %arg4[%c0_252, %c14_253, %c0_254, %c0_255] : memref<1x16x16x8xbf16, #tpu.memory_space<vmem>>, vector<1x1x16x8xbf16>
    %375 = vector.shape_cast %374 : vector<1x1x16x8xbf16> to vector<16x8xbf16>
    %376 = vector.shape_cast %373 : vector<16x8xbf16> to vector<1x1x16x8xbf16>
    tpu.vector_store %arg4[%c0_252, %c14_253, %c0_254, %c0_255], %376 {strides = array<i32>} : memref<1x16x16x8xbf16, #tpu.memory_space<vmem>>, vector<1x1x16x8xbf16>,
    %c0_256 = arith.constant 0 : index
    %c15_257 = arith.constant 15 : index
    %c0_258 = arith.constant 0 : index
    %c0_259 = arith.constant 0 : index
    %377 = vector.load %arg1[%c0_256, %c15_257, %c0_258, %c0_259] : memref<1x18x18x1xbf16, #tpu.memory_space<vmem>>, vector<1x1x18x1xbf16>
    %378 = vector.shape_cast %377 : vector<1x1x18x1xbf16> to vector<18x1xbf16>
    %379 = vector.extract_strided_slice %378 {offsets = [0, 0], sizes = [16, 1], strides = [1, 1]} : vector<18x1xbf16> to vector<16x1xbf16>
    %380 = vector.extract_strided_slice %378 {offsets = [1, 0], sizes = [16, 1], strides = [1, 1]} : vector<18x1xbf16> to vector<16x1xbf16>
    %381 = vector.extract_strided_slice %378 {offsets = [2, 0], sizes = [16, 1], strides = [1, 1]} : vector<18x1xbf16> to vector<16x1xbf16>
    %c0_260 = arith.constant 0 : index
    %c16_261 = arith.constant 16 : index
    %c0_262 = arith.constant 0 : index
    %c0_263 = arith.constant 0 : index
    %382 = vector.load %arg1[%c0_260, %c16_261, %c0_262, %c0_263] : memref<1x18x18x1xbf16, #tpu.memory_space<vmem>>, vector<1x1x18x1xbf16>
    %383 = vector.shape_cast %382 : vector<1x1x18x1xbf16> to vector<18x1xbf16>
    %384 = vector.extract_strided_slice %383 {offsets = [0, 0], sizes = [16, 1], strides = [1, 1]} : vector<18x1xbf16> to vector<16x1xbf16>
    %385 = vector.extract_strided_slice %383 {offsets = [1, 0], sizes = [16, 1], strides = [1, 1]} : vector<18x1xbf16> to vector<16x1xbf16>
    %386 = vector.extract_strided_slice %383 {offsets = [2, 0], sizes = [16, 1], strides = [1, 1]} : vector<18x1xbf16> to vector<16x1xbf16>
    %c0_264 = arith.constant 0 : index
    %c17 = arith.constant 17 : index
    %c0_265 = arith.constant 0 : index
    %c0_266 = arith.constant 0 : index
    %387 = vector.load %arg1[%c0_264, %c17, %c0_265, %c0_266] : memref<1x18x18x1xbf16, #tpu.memory_space<vmem>>, vector<1x1x18x1xbf16>
    %388 = vector.shape_cast %387 : vector<1x1x18x1xbf16> to vector<18x1xbf16>
    %389 = vector.extract_strided_slice %388 {offsets = [0, 0], sizes = [16, 1], strides = [1, 1]} : vector<18x1xbf16> to vector<16x1xbf16>
    %390 = vector.extract_strided_slice %388 {offsets = [1, 0], sizes = [16, 1], strides = [1, 1]} : vector<18x1xbf16> to vector<16x1xbf16>
    %391 = vector.extract_strided_slice %388 {offsets = [2, 0], sizes = [16, 1], strides = [1, 1]} : vector<18x1xbf16> to vector<16x1xbf16>
    %392 = tpu.concatenate %379, %380, %381, %384, %385, %386, %389, %390, %391 in 1 : vector<16x1xbf16>, vector<16x1xbf16>, vector<16x1xbf16>, vector<16x1xbf16>, vector<16x1xbf16>, vector<16x1xbf16>, vector<16x1xbf16>, vector<16x1xbf16>, vector<16x1xbf16> -> vector<16x9xbf16>
    %cst_267 = arith.constant dense<0.000000e+00> : vector<16x8xf32>
    %393 = tpu.matmul %392, %0, %cst_267 {dimension_numbers = #tpu.dot_dimension_numbers<[1], [0], [0], [1], [0, 0, 1, 1], [], []>} : vector<16x9xbf16>, vector<9x8xbf16>, vector<16x8xf32> -> vector<16x8xf32>
    %394 = vector.broadcast %1 : vector<1x8xf32> to vector<16x8xf32>
    %395 = arith.addf %393, %394 : vector<16x8xf32>
    %cst_268 = arith.constant 0.000000e+00 : f32
    %396 = vector.broadcast %cst_268 : f32 to vector<16x8xf32>
    %397 = arith.maximumf %395, %396 : vector<16x8xf32>
    %398 = arith.truncf %397 : vector<16x8xf32> to vector<16x8xbf16>
    %c0_269 = arith.constant 0 : index
    %c15_270 = arith.constant 15 : index
    %c0_271 = arith.constant 0 : index
    %c0_272 = arith.constant 0 : index
    %399 = vector.load %arg4[%c0_269, %c15_270, %c0_271, %c0_272] : memref<1x16x16x8xbf16, #tpu.memory_space<vmem>>, vector<1x1x16x8xbf16>
    %400 = vector.shape_cast %399 : vector<1x1x16x8xbf16> to vector<16x8xbf16>
    %401 = vector.shape_cast %398 : vector<16x8xbf16> to vector<1x1x16x8xbf16>
    tpu.vector_store %arg4[%c0_269, %c15_270, %c0_271, %c0_272], %401 {strides = array<i32>} : memref<1x16x16x8xbf16, #tpu.memory_space<vmem>>, vector<1x1x16x8xbf16>,
    return
  }
  func.func @transform_0(%arg0: i32) -> (i32, i32, i32, i32) {
    %c0_i32 = arith.constant 0 : i32
    %c0_i32_0 = arith.constant 0 : i32
    %c0_i32_1 = arith.constant 0 : i32
    %c0_i32_2 = arith.constant 0 : i32
    return %arg0, %c0_i32, %c0_i32_0, %c0_i32_1 : i32, i32, i32, i32
  }
  func.func @transform_1(%arg0: i32) -> (i32, i32) {
    %c0_i32 = arith.constant 0 : i32
    %c0_i32_0 = arith.constant 0 : i32
    %c0_i32_1 = arith.constant 0 : i32
    return %c0_i32, %c0_i32_0 : i32, i32
  }
  func.func @transform_2(%arg0: i32) -> (i32, i32) {
    %c0_i32 = arith.constant 0 : i32
    %c0_i32_0 = arith.constant 0 : i32
    %c0_i32_1 = arith.constant 0 : i32
    return %c0_i32, %c0_i32_0 : i32, i32
  }
  func.func @transform_3(%arg0: i32) -> (i32, i32, i32, i32) {
    %c0_i32 = arith.constant 0 : i32
    %c0_i32_0 = arith.constant 0 : i32
    %c0_i32_1 = arith.constant 0 : i32
    %c0_i32_2 = arith.constant 0 : i32
    return %arg0, %c0_i32, %c0_i32_0, %c0_i32_1 : i32, i32, i32, i32
  }
}

</mosaic_0001>

<llo_original>
// kernel: tpu_custom_call.1
$region0: #{tpu_custom_call.1}
  #allocation0 [shape = 'u32[]', space=smem, size = 0x4, offset = 0x4, fixed_abs, tag = 'smem constant byte address 0x4 - core index']
  #allocation1 [shape = 'u32[144,128]{1,0:T(1,128)}', space=vmem, size = 0x12000, scoped, tag = 'internal scratch']
  %s0 = inlined_call_operand.vmem [shape: bf16[2,18,18,1], index: 0, kind: input, shape index: {}]
  %s1 = inlined_call_operand.vmem [shape: bf16[9,8], index: 1, kind: input, shape index: {}]
  %s2 = inlined_call_operand.vmem [shape: f32[1,8], index: 2, kind: input, shape index: {}]
  %s3 = inlined_call_operand.vmem [shape: bf16[2,16,16,8], index: 3, kind: output, shape index: {}]
  %s4 = sld [smem:[#allocation0]]
  $region45: #{tpu_custom_call.1} parent=0
    _
  %s6 = ssub.s32 1, %s4
  %s7 = scalar_select 0, %s6, %s4
  loop: start=0, step=1, limit=4
  $region2: #{tpu_custom_call.1} parent=0 // loop_pre_header
    _
  $region3: #{tpu_custom_call.1} parent=0 // loop_header
    %s9 = sphi 0, %s13
    %p10 = scmp.ge.s32.totalorder %s9, 4
    %s19 = sphi 0, %s21
    %s22 = sphi 0, %s19
    %s23 = sphi 0, %s22
    %s39 = sphi 0, %s23
    %s43 = sphi 0, %s43
    %s45 = sphi 0, %s43
    %s46 = sphi 0, %s45
    %s60 = sphi 0, %s46
    %s64 = sphi 0, %s64
    %s66 = sphi 0, %s64
    %s67 = sphi 0, %s66
    %s81 = sphi 0, %s67
    %s87 = sphi 0, %s89
    %s90 = sphi 0, %s87
    %s91 = sphi 0, %s90
    %s107 = sphi 0, %s91
  $region4: #{tpu_custom_call.1} parent=0 // loop_header_branch
    %12 = sbr.rel (%p10) target = $region8
  $region5: #{tpu_custom_call.1} parent=0 // loop_body
    %s14 = ssub.s32 %s9, 1
    %s15 = ssub.s32 %s9, 2
    %s16 = sadd.s32 %s9, 1
    %s17 = ssub.s32 %s9, %s16
    %p18 = scmp.eq.s32.totalorder %s17, 0
    %s20 = sadd.s32 %s19, 1
    %s21 = scalar_select %p18, %s19, %s20
    %p24 = pneg %p18
    %p25 = scmp.eq.s32.totalorder %s9, 1
    %p26 = por %p24, %p25
    %p27 = scmp.ne.s32.totalorder %s19, %s22
    %p28 = scmp.eq.s32.totalorder %s9, 0
    %p29 = por %p27, %p28
    %p30 = scmp.ne.s32.totalorder %s19, %s22
    %p31 = scmp.eq.s32.totalorder %s14, 1
    %p32 = por %p30, %p31
    %p33 = scmp.ne.s32.totalorder %s22, %s23
    %p34 = scmp.eq.s32.totalorder %s14, 0
    %p35 = por %p33, %p34
    %p36 = scmp.ne.s32.totalorder %s22, %s23
    %p37 = scmp.eq.s32.totalorder %s15, 1
    %p38 = por %p36, %p37
    %p40 = scmp.ne.s32.totalorder %s23, %s39
    %p41 = scmp.eq.s32.totalorder %s15, 0
    %p42 = por %p40, %p41
    %s44 = sadd.s32 %s43, 1
    %p47 = scmp.eq.s32.totalorder %s9, 1
    %p48 = scmp.ne.s32.totalorder %s43, %s45
    %p49 = scmp.eq.s32.totalorder %s9, 0
    %p50 = por %p48, %p49
    %p51 = scmp.ne.s32.totalorder %s43, %s45
    %p52 = scmp.eq.s32.totalorder %s14, 1
    %p53 = por %p51, %p52
    %p54 = scmp.ne.s32.totalorder %s45, %s46
    %p55 = scmp.eq.s32.totalorder %s14, 0
    %p56 = por %p54, %p55
    %p57 = scmp.ne.s32.totalorder %s45, %s46
    %p58 = scmp.eq.s32.totalorder %s15, 1
    %p59 = por %p57, %p58
    %p61 = scmp.ne.s32.totalorder %s46, %s60
    %p62 = scmp.eq.s32.totalorder %s15, 0
    %p63 = por %p61, %p62
    %s65 = sadd.s32 %s64, 1
    %p68 = scmp.eq.s32.totalorder %s9, 1
    %p69 = scmp.ne.s32.totalorder %s64, %s66
    %p70 = scmp.eq.s32.totalorder %s9, 0
    %p71 = por %p69, %p70
    %p72 = scmp.ne.s32.totalorder %s64, %s66
    %p73 = scmp.eq.s32.totalorder %s14, 1
    %p74 = por %p72, %p73
    %p75 = scmp.ne.s32.totalorder %s66, %s67
    %p76 = scmp.eq.s32.totalorder %s14, 0
    %p77 = por %p75, %p76
    %p78 = scmp.ne.s32.totalorder %s66, %s67
    %p79 = scmp.eq.s32.totalorder %s15, 1
    %p80 = por %p78, %p79
    %p82 = scmp.ne.s32.totalorder %s67, %s81
    %p83 = scmp.eq.s32.totalorder %s15, 0
    %p84 = por %p82, %p83
    %s85 = ssub.s32 %s9, %s16
    %p86 = scmp.eq.s32.totalorder %s85, 0
    %s88 = sadd.s32 %s87, 1
    %s89 = scalar_select %p86, %s87, %s88
    %p92 = pneg %p86
    %p93 = scmp.eq.s32.totalorder %s9, 1
    %p94 = por %p92, %p93
    %p95 = scmp.ne.s32.totalorder %s87, %s90
    %p96 = scmp.eq.s32.totalorder %s9, 0
    %p97 = por %p95, %p96
    %p98 = scmp.ne.s32.totalorder %s87, %s90
    %p99 = scmp.eq.s32.totalorder %s14, 1
    %p100 = por %p98, %p99
    %p101 = scmp.ne.s32.totalorder %s90, %s91
    %p102 = scmp.eq.s32.totalorder %s14, 0
    %p103 = por %p101, %p102
    %p104 = scmp.ne.s32.totalorder %s90, %s91
    %p105 = scmp.eq.s32.totalorder %s15, 1
    %p106 = por %p104, %p105
    %p108 = scmp.ne.s32.totalorder %s91, %s107
    %p109 = scmp.eq.s32.totalorder %s15, 0
    %p110 = por %p108, %p109
    %p111 = scmp.le.s32.totalorder 1, %s9
    %p112 = scmp.lt.s32.totalorder %s9, 3
    %p113 = pnand %p111, %p112
    %p114 = pneg %p113
    // Predicated region
    $region9: #{tpu_custom_call.1} parent=5 // pred_check
      _
    $region10: #{tpu_custom_call.1} parent=5 // pred_check_branch
      %116 = sbr.rel (%p113) target = $region12
    $region11: #{tpu_custom_call.1} parent=5 // pred_region
      %s117 = ssub.s32 %s9, 1
      // Predicated region
      $region13: #{tpu_custom_call.1} parent=11 // pred_check
        %p118 = pneg %p56
      $region14: #{tpu_custom_call.1} parent=11 // pred_check_branch
        %120 = sbr.rel (%p118) target = $region16
      $region15: #{tpu_custom_call.1} parent=11 // pred_region
        _
      $region16: #{tpu_custom_call.1} parent=11 // pred_fallthru
        _
      // Predicated region
      $region17: #{tpu_custom_call.1} parent=11 // pred_check
        %p121 = pneg %p77
      $region18: #{tpu_custom_call.1} parent=11 // pred_check_branch
        %123 = sbr.rel (%p121) target = $region20
      $region19: #{tpu_custom_call.1} parent=11 // pred_region
        _
      $region20: #{tpu_custom_call.1} parent=11 // pred_fallthru
        _
    $region12: #{tpu_custom_call.1} parent=5 // pred_fallthru
      _
    %p124 = scmp.lt.s32.totalorder %s9, 2
    // Predicated region
    $region21: #{tpu_custom_call.1} parent=5 // pred_check
      %p125 = pneg %p124
    $region22: #{tpu_custom_call.1} parent=5 // pred_check_branch
      %127 = sbr.rel (%p125) target = $region24
    $region23: #{tpu_custom_call.1} parent=5 // pred_region
      // Predicated region
      $region25: #{tpu_custom_call.1} parent=23 // pred_check
        %p128 = pneg %p29
      $region26: #{tpu_custom_call.1} parent=23 // pred_check_branch
        %130 = sbr.rel (%p128) target = $region28
      $region27: #{tpu_custom_call.1} parent=23 // pred_region
        %p131 = scmp.lt.s32.totalorder %s9, 1
        %s132 = scalar_select %p131, %s9, 1
        %s133 = smul.addr %s132, 54
        %s134 = smul.addr %s133, 4
        %s135 = scalar_lea.vmem %s0, %s134
      $region28: #{tpu_custom_call.1} parent=23 // pred_fallthru
        _
    $region24: #{tpu_custom_call.1} parent=5 // pred_fallthru
      _
    %p136 = scmp.le.s32.totalorder 1, %s9
    %p137 = scmp.lt.s32.totalorder %s9, 3
    %p138 = pnand %p136, %p137
    %p139 = pneg %p138
    // Predicated region
    $region29: #{tpu_custom_call.1} parent=5 // pred_check
      _
    $region30: #{tpu_custom_call.1} parent=5 // pred_check_branch
      %141 = sbr.rel (%p138) target = $region32
    $region31: #{tpu_custom_call.1} parent=5 // pred_region
      %s142 = ssub.s32 %s9, 1
      %p143 = scmp.lt.s32.totalorder %s14, 1
      %s144 = scalar_select %p143, %s14, 1
      %s145 = smul.addr %s144, 54
      %s146 = smul.addr %s145, 4
      %s147 = scalar_lea.vmem %s0, %s146
      %p148 = pneg %p35
      %p149 = pneg %p32
      %p150 = pneg %p56
      %p151 = pneg %p53
      %p152 = pneg %p77
      %p153 = pneg %p74
      %p154 = pneg %p103
      %p155 = pneg %p100
      %p156 = scmp.lt.s32.totalorder %s14, 1
      %s157 = scalar_select %p156, %s14, 1
      %s158 = smul.addr %s157, 32
      %s159 = smul.addr %s158, 4
      %s160 = scalar_lea.vmem %s3, %s159
      %p161 = scmp.lt.s32.totalorder %s14, 1
      %s162 = scalar_select %p161, %s14, 1
      %s163 = smul.addr %s162, 54
      %s164 = smul.addr %s163, 4
      %s165 = scalar_lea.vmem %s0, %s164
      %p166 = scmp.lt.s32.totalorder %s14, 1
      %s167 = scalar_select %p166, %s14, 1
      %s168 = smul.addr %s167, 32
      %s169 = smul.addr %s168, 4
      %s170 = scalar_lea.vmem %s3, %s169
      %v172 = vld [vmem:[%s1] sm:$0xf]
      %v173 = vld [vmem:[%s1 + $0x4] sm:$0x1]
      %v174 = vld [vmem:[%s2] sm:$0x1]
      %v175 = vld [vmem:[%s165] sm:$0xf]
      %v176 = vld [vmem:[%s165 + $0x4] sm:$0xf]
      %v177 = vld [vmem:[%s165 + $0x8] sm:$0x1]
      %s178 = scalar_lea.vmem %s165, 12
      %v179 = vld [vmem:[%s178] sm:$0xf]
      %v180 = vld [vmem:[%s178 + $0x4] sm:$0xf]
      %v181 = vld [vmem:[%s178 + $0x8] sm:$0x1]
      %s182 = scalar_lea.vmem %s165, 24
      %v183 = vld [vmem:[%s182] sm:$0xf]
      %v184 = vld [vmem:[%s182 + $0x4] sm:$0xf]
      %v185 = vld [vmem:[%s182 + $0x8] sm:$0x1]
      %v188 = vunpack.c.l.b16 %v175
      %v189 = vunpack.c.l.b16 %v176
      %v190 = vpack.c.b16 %v189, %v188
      %v192 = vunpack.c.l.b16 %v177
      %v193 = vpack.c.b16 %v192, %v192
      %vm194 = vsmask.f32 7424
      %v196 = vshrl.u32 %v190, 16
      %v198 = vshll.u32 %v190, 16
      %v200 = vrot.slane %v198, 1
      %v201 = vor.u32 %v196, %v200
      %v203 = vshll.u32 %v193, 16
      %v205 = vrot.slane %v203, 1
      %v206 = vsel %vm194, %v201, %v205
      %207 = vrot.lane.b32.xlu0 %v206, 1
      %v208 = vpop.permute.xlu0 %207
      %vm209 = vcmask 1046528
      %v210 = vrot.slane %v190, 1
      %v211 = vrot.slane %v193, 1
      %v212 = vsel %vm209, %v210, %v211
      %213 = vrot.lane.b32.xlu0 %v212, 2
      %v214 = vpop.permute.xlu0 %213
      %v217 = vunpack.c.l.b16 %v179
      %v218 = vunpack.c.l.b16 %v180
      %v219 = vpack.c.b16 %v218, %v217
      %220 = vrot.lane.b32.xlu0 %v219, 3
      %v221 = vpop.permute.xlu0 %220
      %v223 = vunpack.c.l.b16 %v181
      %v224 = vpack.c.b16 %v223, %v223
      %v226 = vshrl.u32 %v219, 16
      %v228 = vshll.u32 %v219, 16
      %v230 = vrot.slane %v228, 1
      %v231 = vor.u32 %v226, %v230
      %v233 = vshll.u32 %v224, 16
      %v235 = vrot.slane %v233, 1
      %v236 = vsel %vm194, %v231, %v235
      %237 = vrot.lane.b32.xlu0 %v236, 4
      %v238 = vpop.permute.xlu0 %237
      %v239 = vrot.slane %v219, 1
      %v240 = vrot.slane %v224, 1
      %v241 = vsel %vm209, %v239, %v240
      %242 = vrot.lane.b32.xlu0 %v241, 5
      %v243 = vpop.permute.xlu0 %242
      %v246 = vunpack.c.l.b16 %v183
      %v247 = vunpack.c.l.b16 %v184
      %v248 = vpack.c.b16 %v247, %v246
      %249 = vrot.lane.b32.xlu0 %v248, 6
      %v250 = vpop.permute.xlu0 %249
      %v252 = vunpack.c.l.b16 %v185
      %v253 = vpack.c.b16 %v252, %v252
      %v255 = vshrl.u32 %v248, 16
      %v257 = vshll.u32 %v248, 16
      %v259 = vrot.slane %v257, 1
      %v260 = vor.u32 %v255, %v259
      %v262 = vshll.u32 %v253, 16
      %v264 = vrot.slane %v262, 1
      %v265 = vsel %vm194, %v260, %v264
      %266 = vrot.lane.b32.xlu0 %v265, 7
      %v267 = vpop.permute.xlu0 %266
      %v268 = vrot.slane %v248, 1
      %v269 = vrot.slane %v253, 1
      %v270 = vsel %vm209, %v268, %v269
      %271 = vrot.lane.b32.xlu0 %v270, 8
      %v272 = vpop.permute.xlu0 %271
      %vm273 = vcmask 7168
      %v275 = vsel %vm273, %v190, %v208
      %vm276 = vcmask 15360
      %v278 = vsel %vm276, %v275, %v214
      %vm279 = vcmask 23552
      %v281 = vsel %vm279, %v278, %v221
      %vm282 = vcmask 31744
      %v284 = vsel %vm282, %v281, %v238
      %vm285 = vcmask 39936
      %v287 = vsel %vm285, %v284, %v243
      %vm288 = vcmask 48128
      %v290 = vsel %vm288, %v287, %v250
      %vm291 = vcmask 56320
      %v293 = vsel %vm291, %v290, %v267
      %vm294 = vcmask 64512
      %v296 = vsel %vm294, %v293, %v272
      %v298 = vlaneseq
      %v299 = vshrl.u32 %v298, 7
      %v300 = vsub.s32 0, %v299
      %v301 = vrot.slane %v174, %v300
      %v305 = vunpack.c.l.b16 %v172
      %v306 = vunpack.c.l.b16 %v173
      %v307 = vpack.c.b16 %v306, %v305
      %vm308 = vcmask 72704
      %v309 = vsel %vm308, %v296, 0
      %vm311 = vcmask 1043456
      %vm312 = vcmask 1044480
      %v313 = vsel %vm311, 4294967295, 65535
      %v314 = vsel %vm312, %v313, 0
      %v316 = vand.u32 %v307, %v314
      %318 = vmatprep.subr.bf16.mxu0 0
      %319 = vmatpush1.bf16.msra.mxu0 %v316
      %320 = vmatprep.subr.bf16.mxu0 0
      %321 = vmatpush1.bf16.msra.mxu0 0
      %322 = vmatprep.subr.bf16.mxu0 0
      %323 = vmatpush1.bf16.msra.mxu0 0
      %324 = vmatprep.subr.bf16.mxu0 0
      %325 = vmatpush1.bf16.msra.mxu0 0
      %326 = vmatprep.subr.bf16.mxu0 0
      %327 = vmatpush1.bf16.msra.mxu0 0
      %328 = vmatprep.subr.bf16.mxu0 0
      %329 = vmatpush1.bf16.msra.mxu0 0
      %330 = vmatprep.subr.bf16.mxu0 0
      %331 = vmatpush1.bf16.msra.mxu0 0
      %332 = vmatprep.subr.bf16.mxu0 0
      %333 = vmatpush1.bf16.msra.mxu0 0
      %334 = vmatprep.subr.bf16.mxu0 0
      %335 = vmatpush1.bf16.msra.mxu0 0
      %336 = vmatprep.subr.bf16.mxu0 0
      %337 = vmatpush1.bf16.msra.mxu0 0
      %338 = vmatprep.subr.bf16.mxu0 0
      %339 = vmatpush1.bf16.msra.mxu0 0
      %340 = vmatprep.subr.bf16.mxu0 0
      %341 = vmatpush1.bf16.msra.mxu0 0
      %342 = vmatprep.subr.bf16.mxu0 0
      %343 = vmatpush1.bf16.msra.mxu0 0
      %344 = vmatprep.subr.bf16.mxu0 0
      %345 = vmatpush1.bf16.msra.mxu0 0
      %346 = vmatprep.subr.bf16.mxu0 0
      %347 = vmatpush1.bf16.msra.mxu0 0
      %348 = vmatprep.subr.bf16.mxu0 0
      %349 = vmatpush1.bf16.msra.mxu0 0
      %350 = vmatprep.mubr.bf16.mxu0 0
      %351 = vmatmul.mubr.bf16.gmra.mrb[0].mxu0 %v309
      %v352 = vpop.f32.mrb[0].mxu0
      %v353 = vadd.f32 %v301, %v352
      %v354 = vpop.f32.mrb[0].mxu0
      %v355 = vpop.f32.mrb[0].mxu0
      %v356 = vadd.f32 %v301, %v355
      %v357 = vpop.f32.mrb[0].mxu0
      %358 = vdwg.mxu0
      %v359 = vmax.f32 %v353, 0.0
      %v360 = vmax.f32 %v356, 0.0
      %v361 = vpack.c.bf16 %v360, %v359
      %v363 = vunpack.c.l.b16 %v361
      %v364 = vunpack.c.h.b16 %v361
      %v365 = vpack.c.b16 %v363, %v363
      %v366 = vpack.c.b16 %v364, %v364
      %vm369 = vcmask 60416
      %370 = vst.msk [vmem:[%s170] sm:$0xf] %vm369, %v365
      %371 = vst.msk [vmem:[%s170 + $0x4] sm:$0xf] %vm369, %v366
      %v372 = vld [vmem:[%s178] sm:$0xf]
      %v373 = vld [vmem:[%s178 + $0x4] sm:$0xf]
      %v374 = vld [vmem:[%s178 + $0x8] sm:$0x1]
      %v375 = vld [vmem:[%s182] sm:$0xf]
      %v376 = vld [vmem:[%s182 + $0x4] sm:$0xf]
      %v377 = vld [vmem:[%s182 + $0x8] sm:$0x1]
      %s378 = scalar_lea.vmem %s165, 36
      %v379 = vld [vmem:[%s378] sm:$0xf]
      %v380 = vld [vmem:[%s378 + $0x4] sm:$0xf]
      %v381 = vld [vmem:[%s378 + $0x8] sm:$0x1]
      %v384 = vunpack.c.l.b16 %v372
      %v385 = vunpack.c.l.b16 %v373
      %v386 = vpack.c.b16 %v385, %v384
      %v388 = vunpack.c.l.b16 %v374
      %v389 = vpack.c.b16 %v388, %v388
      %v391 = vshrl.u32 %v386, 16
      %v393 = vshll.u32 %v386, 16
      %v395 = vrot.slane %v393, 1
      %v396 = vor.u32 %v391, %v395
      %v398 = vshll.u32 %v389, 16
      %v400 = vrot.slane %v398, 1
      %v401 = vsel %vm194, %v396, %v400
      %402 = vrot.lane.b32.xlu0 %v401, 1
      %v403 = vpop.permute.xlu0 %402
      %v404 = vrot.slane %v386, 1
      %v405 = vrot.slane %v389, 1
      %v406 = vsel %vm209, %v404, %v405
      %407 = vrot.lane.b32.xlu0 %v406, 2
      %v408 = vpop.permute.xlu0 %407
      %v411 = vunpack.c.l.b16 %v375
      %v412 = vunpack.c.l.b16 %v376
      %v413 = vpack.c.b16 %v412, %v411
      %414 = vrot.lane.b32.xlu0 %v413, 3
      %v415 = vpop.permute.xlu0 %414
      %v417 = vunpack.c.l.b16 %v377
      %v418 = vpack.c.b16 %v417, %v417
      %v420 = vshrl.u32 %v413, 16
      %v422 = vshll.u32 %v413, 16
      %v424 = vrot.slane %v422, 1
      %v425 = vor.u32 %v420, %v424
      %v427 = vshll.u32 %v418, 16
      %v429 = vrot.slane %v427, 1
      %v430 = vsel %vm194, %v425, %v429
      %431 = vrot.lane.b32.xlu0 %v430, 4
      %v432 = vpop.permute.xlu0 %431
      %v433 = vrot.slane %v413, 1
      %v434 = vrot.slane %v418, 1
      %v435 = vsel %vm209, %v433, %v434
      %436 = vrot.lane.b32.xlu0 %v435, 5
      %v437 = vpop.permute.xlu0 %436
      %v440 = vunpack.c.l.b16 %v379
      %v441 = vunpack.c.l.b16 %v380
      %v442 = vpack.c.b16 %v441, %v440
      %443 = vrot.lane.b32.xlu0 %v442, 6
      %v444 = vpop.permute.xlu0 %443
      %v446 = vunpack.c.l.b16 %v381
      %v447 = vpack.c.b16 %v446, %v446
      %v449 = vshrl.u32 %v442, 16
      %v451 = vshll.u32 %v442, 16
      %v453 = vrot.slane %v451, 1
      %v454 = vor.u32 %v449, %v453
      %v456 = vshll.u32 %v447, 16
      %v458 = vrot.slane %v456, 1
      %v459 = vsel %vm194, %v454, %v458
      %460 = vrot.lane.b32.xlu0 %v459, 7
      %v461 = vpop.permute.xlu0 %460
      %v462 = vrot.slane %v442, 1
      %v463 = vrot.slane %v447, 1
      %v464 = vsel %vm209, %v462, %v463
      %465 = vrot.lane.b32.xlu0 %v464, 8
      %v466 = vpop.permute.xlu0 %465
      %v468 = vsel %vm273, %v386, %v403
      %v470 = vsel %vm276, %v468, %v408
      %v472 = vsel %vm279, %v470, %v415
      %v474 = vsel %vm282, %v472, %v432
      %v476 = vsel %vm285, %v474, %v437
      %v478 = vsel %vm288, %v476, %v444
      %v480 = vsel %vm291, %v478, %v461
      %v482 = vsel %vm294, %v480, %v466
      %v483 = vsel %vm308, %v482, 0
      %485 = vmatprep.subr.bf16.mxu0 0
      %486 = vmatpush1.bf16.msra.mxu0 %v316
      %487 = vmatprep.subr.bf16.mxu0 0
      %488 = vmatpush1.bf16.msra.mxu0 0
      %489 = vmatprep.subr.bf16.mxu0 0
      %490 = vmatpush1.bf16.msra.mxu0 0
      %491 = vmatprep.subr.bf16.mxu0 0
      %492 = vmatpush1.bf16.msra.mxu0 0
      %493 = vmatprep.subr.bf16.mxu0 0
      %494 = vmatpush1.bf16.msra.mxu0 0
      %495 = vmatprep.subr.bf16.mxu0 0
      %496 = vmatpush1.bf16.msra.mxu0 0
      %497 = vmatprep.subr.bf16.mxu0 0
      %498 = vmatpush1.bf16.msra.mxu0 0
      %499 = vmatprep.subr.bf16.mxu0 0
      %500 = vmatpush1.bf16.msra.mxu0 0
      %501 = vmatprep.subr.bf16.mxu0 0
      %502 = vmatpush1.bf16.msra.mxu0 0
      %503 = vmatprep.subr.bf16.mxu0 0
      %504 = vmatpush1.bf16.msra.mxu0 0
      %505 = vmatprep.subr.bf16.mxu0 0
      %506 = vmatpush1.bf16.msra.mxu0 0
      %507 = vmatprep.subr.bf16.mxu0 0
      %508 = vmatpush1.bf16.msra.mxu0 0
      %509 = vmatprep.subr.bf16.mxu0 0
      %510 = vmatpush1.bf16.msra.mxu0 0
      %511 = vmatprep.subr.bf16.mxu0 0
      %512 = vmatpush1.bf16.msra.mxu0 0
      %513 = vmatprep.subr.bf16.mxu0 0
      %514 = vmatpush1.bf16.msra.mxu0 0
      %515 = vmatprep.subr.bf16.mxu0 0
      %516 = vmatpush1.bf16.msra.mxu0 0
      %517 = vmatprep.mubr.bf16.mxu0 0
      %518 = vmatmul.mubr.bf16.gmra.mrb[0].mxu0 %v483
      %v519 = vpop.f32.mrb[0].mxu0
      %v520 = vadd.f32 %v301, %v519
      %v521 = vpop.f32.mrb[0].mxu0
      %v522 = vpop.f32.mrb[0].mxu0
      %v523 = vadd.f32 %v301, %v522
      %v524 = vpop.f32.mrb[0].mxu0
      %525 = vdwg.mxu0
      %v526 = vmax.f32 %v520, 0.0
      %v527 = vmax.f32 %v523, 0.0
      %v528 = vpack.c.bf16 %v527, %v526
      %v530 = vunpack.c.l.b16 %v528
      %v531 = vunpack.c.h.b16 %v528
      %v532 = vpack.c.b16 %v530, %v530
      %v533 = vpack.c.b16 %v531, %v531
      %s536 = scalar_lea.vmem %s170, 8
      %537 = vst.msk [vmem:[%s536] sm:$0xf] %vm369, %v532
      %538 = vst.msk [vmem:[%s536 + $0x4] sm:$0xf] %vm369, %v533
      %v539 = vld [vmem:[%s182] sm:$0xf]
      %v540 = vld [vmem:[%s182 + $0x4] sm:$0xf]
      %v541 = vld [vmem:[%s182 + $0x8] sm:$0x1]
      %v542 = vld [vmem:[%s378] sm:$0xf]
      %v543 = vld [vmem:[%s378 + $0x4] sm:$0xf]
      %v544 = vld [vmem:[%s378 + $0x8] sm:$0x1]
      %s545 = scalar_lea.vmem %s165, 48
      %v546 = vld [vmem:[%s545] sm:$0xf]
      %v547 = vld [vmem:[%s545 + $0x4] sm:$0xf]
      %v548 = vld [vmem:[%s545 + $0x8] sm:$0x1]
      %v551 = vunpack.c.l.b16 %v539
      %v552 = vunpack.c.l.b16 %v540
      %v553 = vpack.c.b16 %v552, %v551
      %v555 = vunpack.c.l.b16 %v541
      %v556 = vpack.c.b16 %v555, %v555
      %v558 = vshrl.u32 %v553, 16
      %v560 = vshll.u32 %v553, 16
      %v562 = vrot.slane %v560, 1
      %v563 = vor.u32 %v558, %v562
      %v565 = vshll.u32 %v556, 16
      %v567 = vrot.slane %v565, 1
      %v568 = vsel %vm194, %v563, %v567
      %569 = vrot.lane.b32.xlu0 %v568, 1
      %v570 = vpop.permute.xlu0 %569
      %v571 = vrot.slane %v553, 1
      %v572 = vrot.slane %v556, 1
      %v573 = vsel %vm209, %v571, %v572
      %574 = vrot.lane.b32.xlu0 %v573, 2
      %v575 = vpop.permute.xlu0 %574
      %v578 = vunpack.c.l.b16 %v542
      %v579 = vunpack.c.l.b16 %v543
      %v580 = vpack.c.b16 %v579, %v578
      %581 = vrot.lane.b32.xlu0 %v580, 3
      %v582 = vpop.permute.xlu0 %581
      %v584 = vunpack.c.l.b16 %v544
      %v585 = vpack.c.b16 %v584, %v584
      %v587 = vshrl.u32 %v580, 16
      %v589 = vshll.u32 %v580, 16
      %v591 = vrot.slane %v589, 1
      %v592 = vor.u32 %v587, %v591
      %v594 = vshll.u32 %v585, 16
      %v596 = vrot.slane %v594, 1
      %v597 = vsel %vm194, %v592, %v596
      %598 = vrot.lane.b32.xlu0 %v597, 4
      %v599 = vpop.permute.xlu0 %598
      %v600 = vrot.slane %v580, 1
      %v601 = vrot.slane %v585, 1
      %v602 = vsel %vm209, %v600, %v601
      %603 = vrot.lane.b32.xlu0 %v602, 5
      %v604 = vpop.permute.xlu0 %603
      %v607 = vunpack.c.l.b16 %v546
      %v608 = vunpack.c.l.b16 %v547
      %v609 = vpack.c.b16 %v608, %v607
      %610 = vrot.lane.b32.xlu0 %v609, 6
      %v611 = vpop.permute.xlu0 %610
      %v613 = vunpack.c.l.b16 %v548
      %v614 = vpack.c.b16 %v613, %v613
      %v616 = vshrl.u32 %v609, 16
      %v618 = vshll.u32 %v609, 16
      %v620 = vrot.slane %v618, 1
      %v621 = vor.u32 %v616, %v620
      %v623 = vshll.u32 %v614, 16
      %v625 = vrot.slane %v623, 1
      %v626 = vsel %vm194, %v621, %v625
      %627 = vrot.lane.b32.xlu0 %v626, 7
      %v628 = vpop.permute.xlu0 %627
      %v629 = vrot.slane %v609, 1
      %v630 = vrot.slane %v614, 1
      %v631 = vsel %vm209, %v629, %v630
      %632 = vrot.lane.b32.xlu0 %v631, 8
      %v633 = vpop.permute.xlu0 %632
      %v635 = vsel %vm273, %v553, %v570
      %v637 = vsel %vm276, %v635, %v575
      %v639 = vsel %vm279, %v637, %v582
      %v641 = vsel %vm282, %v639, %v599
      %v643 = vsel %vm285, %v641, %v604
      %v645 = vsel %vm288, %v643, %v611
      %v647 = vsel %vm291, %v645, %v628
      %v649 = vsel %vm294, %v647, %v633
      %v650 = vsel %vm308, %v649, 0
      %652 = vmatprep.subr.bf16.mxu0 0
      %653 = vmatpush1.bf16.msra.mxu0 %v316
      %654 = vmatprep.subr.bf16.mxu0 0
      %655 = vmatpush1.bf16.msra.mxu0 0
      %656 = vmatprep.subr.bf16.mxu0 0
      %657 = vmatpush1.bf16.msra.mxu0 0
      %658 = vmatprep.subr.bf16.mxu0 0
      %659 = vmatpush1.bf16.msra.mxu0 0
      %660 = vmatprep.subr.bf16.mxu0 0
      %661 = vmatpush1.bf16.msra.mxu0 0
      %662 = vmatprep.subr.bf16.mxu0 0
      %663 = vmatpush1.bf16.msra.mxu0 0
      %664 = vmatprep.subr.bf16.mxu0 0
      %665 = vmatpush1.bf16.msra.mxu0 0
      %666 = vmatprep.subr.bf16.mxu0 0
      %667 = vmatpush1.bf16.msra.mxu0 0
      %668 = vmatprep.subr.bf16.mxu0 0
      %669 = vmatpush1.bf16.msra.mxu0 0
      %670 = vmatprep.subr.bf16.mxu0 0
      %671 = vmatpush1.bf16.msra.mxu0 0
      %672 = vmatprep.subr.bf16.mxu0 0
      %673 = vmatpush1.bf16.msra.mxu0 0
      %674 = vmatprep.subr.bf16.mxu0 0
      %675 = vmatpush1.bf16.msra.mxu0 0
      %676 = vmatprep.subr.bf16.mxu0 0
      %677 = vmatpush1.bf16.msra.mxu0 0
      %678 = vmatprep.subr.bf16.mxu0 0
      %679 = vmatpush1.bf16.msra.mxu0 0
      %680 = vmatprep.subr.bf16.mxu0 0
      %681 = vmatpush1.bf16.msra.mxu0 0
      %682 = vmatprep.subr.bf16.mxu0 0
      %683 = vmatpush1.bf16.msra.mxu0 0
      %684 = vmatprep.mubr.bf16.mxu0 0
      %685 = vmatmul.mubr.bf16.gmra.mrb[0].mxu0 %v650
      %v686 = vpop.f32.mrb[0].mxu0
      %v687 = vadd.f32 %v301, %v686
      %v688 = vpop.f32.mrb[0].mxu0
      %v689 = vpop.f32.mrb[0].mxu0
      %v690 = vadd.f32 %v301, %v689
      %v691 = vpop.f32.mrb[0].mxu0
      %692 = vdwg.mxu0
      %v693 = vmax.f32 %v687, 0.0
      %v694 = vmax.f32 %v690, 0.0
      %v695 = vpack.c.bf16 %v694, %v693
      %v697 = vunpack.c.l.b16 %v695
      %v698 = vunpack.c.h.b16 %v695
      %v699 = vpack.c.b16 %v697, %v697
      %v700 = vpack.c.b16 %v698, %v698
      %s703 = scalar_lea.vmem %s170, 16
      %704 = vst.msk [vmem:[%s703] sm:$0xf] %vm369, %v699
      %705 = vst.msk [vmem:[%s703 + $0x4] sm:$0xf] %vm369, %v700
      %v706 = vld [vmem:[%s378] sm:$0xf]
      %v707 = vld [vmem:[%s378 + $0x4] sm:$0xf]
      %v708 = vld [vmem:[%s378 + $0x8] sm:$0x1]
      %v709 = vld [vmem:[%s545] sm:$0xf]
      %v710 = vld [vmem:[%s545 + $0x4] sm:$0xf]
      %v711 = vld [vmem:[%s545 + $0x8] sm:$0x1]
      %s712 = scalar_lea.vmem %s165, 60
      %v713 = vld [vmem:[%s712] sm:$0xf]
      %v714 = vld [vmem:[%s712 + $0x4] sm:$0xf]
      %v715 = vld [vmem:[%s712 + $0x8] sm:$0x1]
      %v718 = vunpack.c.l.b16 %v706
      %v719 = vunpack.c.l.b16 %v707
      %v720 = vpack.c.b16 %v719, %v718
      %v722 = vunpack.c.l.b16 %v708
      %v723 = vpack.c.b16 %v722, %v722
      %v725 = vshrl.u32 %v720, 16
      %v727 = vshll.u32 %v720, 16
      %v729 = vrot.slane %v727, 1
      %v730 = vor.u32 %v725, %v729
      %v732 = vshll.u32 %v723, 16
      %v734 = vrot.slane %v732, 1
      %v735 = vsel %vm194, %v730, %v734
      %736 = vrot.lane.b32.xlu0 %v735, 1
      %v737 = vpop.permute.xlu0 %736
      %v738 = vrot.slane %v720, 1
      %v739 = vrot.slane %v723, 1
      %v740 = vsel %vm209, %v738, %v739
      %741 = vrot.lane.b32.xlu0 %v740, 2
      %v742 = vpop.permute.xlu0 %741
      %v745 = vunpack.c.l.b16 %v709
      %v746 = vunpack.c.l.b16 %v710
      %v747 = vpack.c.b16 %v746, %v745
      %748 = vrot.lane.b32.xlu0 %v747, 3
      %v749 = vpop.permute.xlu0 %748
      %v751 = vunpack.c.l.b16 %v711
      %v752 = vpack.c.b16 %v751, %v751
      %v754 = vshrl.u32 %v747, 16
      %v756 = vshll.u32 %v747, 16
      %v758 = vrot.slane %v756, 1
      %v759 = vor.u32 %v754, %v758
      %v761 = vshll.u32 %v752, 16
      %v763 = vrot.slane %v761, 1
      %v764 = vsel %vm194, %v759, %v763
      %765 = vrot.lane.b32.xlu0 %v764, 4
      %v766 = vpop.permute.xlu0 %765
      %v767 = vrot.slane %v747, 1
      %v768 = vrot.slane %v752, 1
      %v769 = vsel %vm209, %v767, %v768
      %770 = vrot.lane.b32.xlu0 %v769, 5
      %v771 = vpop.permute.xlu0 %770
      %v774 = vunpack.c.l.b16 %v713
      %v775 = vunpack.c.l.b16 %v714
      %v776 = vpack.c.b16 %v775, %v774
      %777 = vrot.lane.b32.xlu0 %v776, 6
      %v778 = vpop.permute.xlu0 %777
      %v780 = vunpack.c.l.b16 %v715
      %v781 = vpack.c.b16 %v780, %v780
      %v783 = vshrl.u32 %v776, 16
      %v785 = vshll.u32 %v776, 16
      %v787 = vrot.slane %v785, 1
      %v788 = vor.u32 %v783, %v787
      %v790 = vshll.u32 %v781, 16
      %v792 = vrot.slane %v790, 1
      %v793 = vsel %vm194, %v788, %v792
      %794 = vrot.lane.b32.xlu0 %v793, 7
      %v795 = vpop.permute.xlu0 %794
      %v796 = vrot.slane %v776, 1
      %v797 = vrot.slane %v781, 1
      %v798 = vsel %vm209, %v796, %v797
      %799 = vrot.lane.b32.xlu0 %v798, 8
      %v800 = vpop.permute.xlu0 %799
      %v802 = vsel %vm273, %v720, %v737
      %v804 = vsel %vm276, %v802, %v742
      %v806 = vsel %vm279, %v804, %v749
      %v808 = vsel %vm282, %v806, %v766
      %v810 = vsel %vm285, %v808, %v771
      %v812 = vsel %vm288, %v810, %v778
      %v814 = vsel %vm291, %v812, %v795
      %v816 = vsel %vm294, %v814, %v800
      %v817 = vsel %vm308, %v816, 0
      %819 = vmatprep.subr.bf16.mxu0 0
      %820 = vmatpush1.bf16.msra.mxu0 %v316
      %821 = vmatprep.subr.bf16.mxu0 0
      %822 = vmatpush1.bf16.msra.mxu0 0
      %823 = vmatprep.subr.bf16.mxu0 0
      %824 = vmatpush1.bf16.msra.mxu0 0
      %825 = vmatprep.subr.bf16.mxu0 0
      %826 = vmatpush1.bf16.msra.mxu0 0
      %827 = vmatprep.subr.bf16.mxu0 0
      %828 = vmatpush1.bf16.msra.mxu0 0
      %829 = vmatprep.subr.bf16.mxu0 0
      %830 = vmatpush1.bf16.msra.mxu0 0
      %831 = vmatprep.subr.bf16.mxu0 0
      %832 = vmatpush1.bf16.msra.mxu0 0
      %833 = vmatprep.subr.bf16.mxu0 0
      %834 = vmatpush1.bf16.msra.mxu0 0
      %835 = vmatprep.subr.bf16.mxu0 0
      %836 = vmatpush1.bf16.msra.mxu0 0
      %837 = vmatprep.subr.bf16.mxu0 0
      %838 = vmatpush1.bf16.msra.mxu0 0
      %839 = vmatprep.subr.bf16.mxu0 0
      %840 = vmatpush1.bf16.msra.mxu0 0
      %841 = vmatprep.subr.bf16.mxu0 0
      %842 = vmatpush1.bf16.msra.mxu0 0
      %843 = vmatprep.subr.bf16.mxu0 0
      %844 = vmatpush1.bf16.msra.mxu0 0
      %845 = vmatprep.subr.bf16.mxu0 0
      %846 = vmatpush1.bf16.msra.mxu0 0
      %847 = vmatprep.subr.bf16.mxu0 0
      %848 = vmatpush1.bf16.msra.mxu0 0
      %849 = vmatprep.subr.bf16.mxu0 0
      %850 = vmatpush1.bf16.msra.mxu0 0
      %851 = vmatprep.mubr.bf16.mxu0 0
      %852 = vmatmul.mubr.bf16.gmra.mrb[0].mxu0 %v817
      %v853 = vpop.f32.mrb[0].mxu0
      %v854 = vadd.f32 %v301, %v853
      %v855 = vpop.f32.mrb[0].mxu0
      %v856 = vpop.f32.mrb[0].mxu0
      %v857 = vadd.f32 %v301, %v856
      %v858 = vpop.f32.mrb[0].mxu0
      %859 = vdwg.mxu0
      %v860 = vmax.f32 %v854, 0.0
      %v861 = vmax.f32 %v857, 0.0
      %v862 = vpack.c.bf16 %v861, %v860
      %v864 = vunpack.c.l.b16 %v862
      %v865 = vunpack.c.h.b16 %v862
      %v866 = vpack.c.b16 %v864, %v864
      %v867 = vpack.c.b16 %v865, %v865
      %s870 = scalar_lea.vmem %s170, 24
      %871 = vst.msk [vmem:[%s870] sm:$0xf] %vm369, %v866
      %872 = vst.msk [vmem:[%s870 + $0x4] sm:$0xf] %vm369, %v867
      %v873 = vld [vmem:[%s545] sm:$0xf]
      %v874 = vld [vmem:[%s545 + $0x4] sm:$0xf]
      %v875 = vld [vmem:[%s545 + $0x8] sm:$0x1]
      %v876 = vld [vmem:[%s712] sm:$0xf]
      %v877 = vld [vmem:[%s712 + $0x4] sm:$0xf]
      %v878 = vld [vmem:[%s712 + $0x8] sm:$0x1]
      %s879 = scalar_lea.vmem %s165, 72
      %v880 = vld [vmem:[%s879] sm:$0xf]
      %v881 = vld [vmem:[%s879 + $0x4] sm:$0xf]
      %v882 = vld [vmem:[%s879 + $0x8] sm:$0x1]
      %v885 = vunpack.c.l.b16 %v873
      %v886 = vunpack.c.l.b16 %v874
      %v887 = vpack.c.b16 %v886, %v885
      %v889 = vunpack.c.l.b16 %v875
      %v890 = vpack.c.b16 %v889, %v889
      %v892 = vshrl.u32 %v887, 16
      %v894 = vshll.u32 %v887, 16
      %v896 = vrot.slane %v894, 1
      %v897 = vor.u32 %v892, %v896
      %v899 = vshll.u32 %v890, 16
      %v901 = vrot.slane %v899, 1
      %v902 = vsel %vm194, %v897, %v901
      %903 = vrot.lane.b32.xlu0 %v902, 1
      %v904 = vpop.permute.xlu0 %903
      %v905 = vrot.slane %v887, 1
      %v906 = vrot.slane %v890, 1
      %v907 = vsel %vm209, %v905, %v906
      %908 = vrot.lane.b32.xlu0 %v907, 2
      %v909 = vpop.permute.xlu0 %908
      %v912 = vunpack.c.l.b16 %v876
      %v913 = vunpack.c.l.b16 %v877
      %v914 = vpack.c.b16 %v913, %v912
      %915 = vrot.lane.b32.xlu0 %v914, 3
      %v916 = vpop.permute.xlu0 %915
      %v918 = vunpack.c.l.b16 %v878
      %v919 = vpack.c.b16 %v918, %v918
      %v921 = vshrl.u32 %v914, 16
      %v923 = vshll.u32 %v914, 16
      %v925 = vrot.slane %v923, 1
      %v926 = vor.u32 %v921, %v925
      %v928 = vshll.u32 %v919, 16
      %v930 = vrot.slane %v928, 1
      %v931 = vsel %vm194, %v926, %v930
      %932 = vrot.lane.b32.xlu0 %v931, 4
      %v933 = vpop.permute.xlu0 %932
      %v934 = vrot.slane %v914, 1
      %v935 = vrot.slane %v919, 1
      %v936 = vsel %vm209, %v934, %v935
      %937 = vrot.lane.b32.xlu0 %v936, 5
      %v938 = vpop.permute.xlu0 %937
      %v941 = vunpack.c.l.b16 %v880
      %v942 = vunpack.c.l.b16 %v881
      %v943 = vpack.c.b16 %v942, %v941
      %944 = vrot.lane.b32.xlu0 %v943, 6
      %v945 = vpop.permute.xlu0 %944
      %v947 = vunpack.c.l.b16 %v882
      %v948 = vpack.c.b16 %v947, %v947
      %v950 = vshrl.u32 %v943, 16
      %v952 = vshll.u32 %v943, 16
      %v954 = vrot.slane %v952, 1
      %v955 = vor.u32 %v950, %v954
      %v957 = vshll.u32 %v948, 16
      %v959 = vrot.slane %v957, 1
      %v960 = vsel %vm194, %v955, %v959
      %961 = vrot.lane.b32.xlu0 %v960, 7
      %v962 = vpop.permute.xlu0 %961
      %v963 = vrot.slane %v943, 1
      %v964 = vrot.slane %v948, 1
      %v965 = vsel %vm209, %v963, %v964
      %966 = vrot.lane.b32.xlu0 %v965, 8
      %v967 = vpop.permute.xlu0 %966
      %v969 = vsel %vm273, %v887, %v904
      %v971 = vsel %vm276, %v969, %v909
      %v973 = vsel %vm279, %v971, %v916
      %v975 = vsel %vm282, %v973, %v933
      %v977 = vsel %vm285, %v975, %v938
      %v979 = vsel %vm288, %v977, %v945
      %v981 = vsel %vm291, %v979, %v962
      %v983 = vsel %vm294, %v981, %v967
      %v984 = vsel %vm308, %v983, 0
      %986 = vmatprep.subr.bf16.mxu0 0
      %987 = vmatpush1.bf16.msra.mxu0 %v316
      %988 = vmatprep.subr.bf16.mxu0 0
      %989 = vmatpush1.bf16.msra.mxu0 0
      %990 = vmatprep.subr.bf16.mxu0 0
      %991 = vmatpush1.bf16.msra.mxu0 0
      %992 = vmatprep.subr.bf16.mxu0 0
      %993 = vmatpush1.bf16.msra.mxu0 0
      %994 = vmatprep.subr.bf16.mxu0 0
      %995 = vmatpush1.bf16.msra.mxu0 0
      %996 = vmatprep.subr.bf16.mxu0 0
      %997 = vmatpush1.bf16.msra.mxu0 0
      %998 = vmatprep.subr.bf16.mxu0 0
      %999 = vmatpush1.bf16.msra.mxu0 0
      %1000 = vmatprep.subr.bf16.mxu0 0
      %1001 = vmatpush1.bf16.msra.mxu0 0
      %1002 = vmatprep.subr.bf16.mxu0 0
      %1003 = vmatpush1.bf16.msra.mxu0 0
      %1004 = vmatprep.subr.bf16.mxu0 0
      %1005 = vmatpush1.bf16.msra.mxu0 0
      %1006 = vmatprep.subr.bf16.mxu0 0
      %1007 = vmatpush1.bf16.msra.mxu0 0
      %1008 = vmatprep.subr.bf16.mxu0 0
      %1009 = vmatpush1.bf16.msra.mxu0 0
      %1010 = vmatprep.subr.bf16.mxu0 0
      %1011 = vmatpush1.bf16.msra.mxu0 0
      %1012 = vmatprep.subr.bf16.mxu0 0
      %1013 = vmatpush1.bf16.msra.mxu0 0
      %1014 = vmatprep.subr.bf16.mxu0 0
      %1015 = vmatpush1.bf16.msra.mxu0 0
      %1016 = vmatprep.subr.bf16.mxu0 0
      %1017 = vmatpush1.bf16.msra.mxu0 0
      %1018 = vmatprep.mubr.bf16.mxu0 0
      %1019 = vmatmul.mubr.bf16.gmra.mrb[0].mxu0 %v984
      %v1020 = vpop.f32.mrb[0].mxu0
      %v1021 = vadd.f32 %v301, %v1020
      %v1022 = vpop.f32.mrb[0].mxu0
      %v1023 = vpop.f32.mrb[0].mxu0
      %v1024 = vadd.f32 %v301, %v1023
      %v1025 = vpop.f32.mrb[0].mxu0
      %1026 = vdwg.mxu0
      %v1027 = vmax.f32 %v1021, 0.0
      %v1028 = vmax.f32 %v1024, 0.0
      %v1029 = vpack.c.bf16 %v1028, %v1027
      %v1031 = vunpack.c.l.b16 %v1029
      %v1032 = vunpack.c.h.b16 %v1029
      %v1033 = vpack.c.b16 %v1031, %v1031
      %v1034 = vpack.c.b16 %v1032, %v1032
      %s1037 = scalar_lea.vmem %s170, 32
      %1038 = vst.msk [vmem:[%s1037] sm:$0xf] %vm369, %v1033
      %1039 = vst.msk [vmem:[%s1037 + $0x4] sm:$0xf] %vm369, %v1034
      %v1040 = vld [vmem:[%s712] sm:$0xf]
      %v1041 = vld [vmem:[%s712 + $0x4] sm:$0xf]
      %v1042 = vld [vmem:[%s712 + $0x8] sm:$0x1]
      %v1043 = vld [vmem:[%s879] sm:$0xf]
      %v1044 = vld [vmem:[%s879 + $0x4] sm:$0xf]
      %v1045 = vld [vmem:[%s879 + $0x8] sm:$0x1]
      %s1046 = scalar_lea.vmem %s165, 84
      %v1047 = vld [vmem:[%s1046] sm:$0xf]
      %v1048 = vld [vmem:[%s1046 + $0x4] sm:$0xf]
      %v1049 = vld [vmem:[%s1046 + $0x8] sm:$0x1]
      %v1052 = vunpack.c.l.b16 %v1040
      %v1053 = vunpack.c.l.b16 %v1041
      %v1054 = vpack.c.b16 %v1053, %v1052
      %v1056 = vunpack.c.l.b16 %v1042
      %v1057 = vpack.c.b16 %v1056, %v1056
      %v1059 = vshrl.u32 %v1054, 16
      %v1061 = vshll.u32 %v1054, 16
      %v1063 = vrot.slane %v1061, 1
      %v1064 = vor.u32 %v1059, %v1063
      %v1066 = vshll.u32 %v1057, 16
      %v1068 = vrot.slane %v1066, 1
      %v1069 = vsel %vm194, %v1064, %v1068
      %1070 = vrot.lane.b32.xlu0 %v1069, 1
      %v1071 = vpop.permute.xlu0 %1070
      %v1072 = vrot.slane %v1054, 1
      %v1073 = vrot.slane %v1057, 1
      %v1074 = vsel %vm209, %v1072, %v1073
      %1075 = vrot.lane.b32.xlu0 %v1074, 2
      %v1076 = vpop.permute.xlu0 %1075
      %v1079 = vunpack.c.l.b16 %v1043
      %v1080 = vunpack.c.l.b16 %v1044
      %v1081 = vpack.c.b16 %v1080, %v1079
      %1082 = vrot.lane.b32.xlu0 %v1081, 3
      %v1083 = vpop.permute.xlu0 %1082
      %v1085 = vunpack.c.l.b16 %v1045
      %v1086 = vpack.c.b16 %v1085, %v1085
      %v1088 = vshrl.u32 %v1081, 16
      %v1090 = vshll.u32 %v1081, 16
      %v1092 = vrot.slane %v1090, 1
      %v1093 = vor.u32 %v1088, %v1092
      %v1095 = vshll.u32 %v1086, 16
      %v1097 = vrot.slane %v1095, 1
      %v1098 = vsel %vm194, %v1093, %v1097
      %1099 = vrot.lane.b32.xlu0 %v1098, 4
      %v1100 = vpop.permute.xlu0 %1099
      %v1101 = vrot.slane %v1081, 1
      %v1102 = vrot.slane %v1086, 1
      %v1103 = vsel %vm209, %v1101, %v1102
      %1104 = vrot.lane.b32.xlu0 %v1103, 5
      %v1105 = vpop.permute.xlu0 %1104
      %v1108 = vunpack.c.l.b16 %v1047
      %v1109 = vunpack.c.l.b16 %v1048
      %v1110 = vpack.c.b16 %v1109, %v1108
      %1111 = vrot.lane.b32.xlu0 %v1110, 6
      %v1112 = vpop.permute.xlu0 %1111
      %v1114 = vunpack.c.l.b16 %v1049
      %v1115 = vpack.c.b16 %v1114, %v1114
      %v1117 = vshrl.u32 %v1110, 16
      %v1119 = vshll.u32 %v1110, 16
      %v1121 = vrot.slane %v1119, 1
      %v1122 = vor.u32 %v1117, %v1121
      %v1124 = vshll.u32 %v1115, 16
      %v1126 = vrot.slane %v1124, 1
      %v1127 = vsel %vm194, %v1122, %v1126
      %1128 = vrot.lane.b32.xlu0 %v1127, 7
      %v1129 = vpop.permute.xlu0 %1128
      %v1130 = vrot.slane %v1110, 1
      %v1131 = vrot.slane %v1115, 1
      %v1132 = vsel %vm209, %v1130, %v1131
      %1133 = vrot.lane.b32.xlu0 %v1132, 8
      %v1134 = vpop.permute.xlu0 %1133
      %v1136 = vsel %vm273, %v1054, %v1071
      %v1138 = vsel %vm276, %v1136, %v1076
      %v1140 = vsel %vm279, %v1138, %v1083
      %v1142 = vsel %vm282, %v1140, %v1100
      %v1144 = vsel %vm285, %v1142, %v1105
      %v1146 = vsel %vm288, %v1144, %v1112
      %v1148 = vsel %vm291, %v1146, %v1129
      %v1150 = vsel %vm294, %v1148, %v1134
      %v1151 = vsel %vm308, %v1150, 0
      %1153 = vmatprep.subr.bf16.mxu0 0
      %1154 = vmatpush1.bf16.msra.mxu0 %v316
      %1155 = vmatprep.subr.bf16.mxu0 0
      %1156 = vmatpush1.bf16.msra.mxu0 0
      %1157 = vmatprep.subr.bf16.mxu0 0
      %1158 = vmatpush1.bf16.msra.mxu0 0
      %1159 = vmatprep.subr.bf16.mxu0 0
      %1160 = vmatpush1.bf16.msra.mxu0 0
      %1161 = vmatprep.subr.bf16.mxu0 0
      %1162 = vmatpush1.bf16.msra.mxu0 0
      %1163 = vmatprep.subr.bf16.mxu0 0
      %1164 = vmatpush1.bf16.msra.mxu0 0
      %1165 = vmatprep.subr.bf16.mxu0 0
      %1166 = vmatpush1.bf16.msra.mxu0 0
      %1167 = vmatprep.subr.bf16.mxu0 0
      %1168 = vmatpush1.bf16.msra.mxu0 0
      %1169 = vmatprep.subr.bf16.mxu0 0
      %1170 = vmatpush1.bf16.msra.mxu0 0
      %1171 = vmatprep.subr.bf16.mxu0 0
      %1172 = vmatpush1.bf16.msra.mxu0 0
      %1173 = vmatprep.subr.bf16.mxu0 0
      %1174 = vmatpush1.bf16.msra.mxu0 0
      %1175 = vmatprep.subr.bf16.mxu0 0
      %1176 = vmatpush1.bf16.msra.mxu0 0
      %1177 = vmatprep.subr.bf16.mxu0 0
      %1178 = vmatpush1.bf16.msra.mxu0 0
      %1179 = vmatprep.subr.bf16.mxu0 0
      %1180 = vmatpush1.bf16.msra.mxu0 0
      %1181 = vmatprep.subr.bf16.mxu0 0
      %1182 = vmatpush1.bf16.msra.mxu0 0
      %1183 = vmatprep.subr.bf16.mxu0 0
      %1184 = vmatpush1.bf16.msra.mxu0 0
      %1185 = vmatprep.mubr.bf16.mxu0 0
      %1186 = vmatmul.mubr.bf16.gmra.mrb[0].mxu0 %v1151
      %v1187 = vpop.f32.mrb[0].mxu0
      %v1188 = vadd.f32 %v301, %v1187
      %v1189 = vpop.f32.mrb[0].mxu0
      %v1190 = vpop.f32.mrb[0].mxu0
      %v1191 = vadd.f32 %v301, %v1190
      %v1192 = vpop.f32.mrb[0].mxu0
      %1193 = vdwg.mxu0
      %v1194 = vmax.f32 %v1188, 0.0
      %v1195 = vmax.f32 %v1191, 0.0
      %v1196 = vpack.c.bf16 %v1195, %v1194
      %v1198 = vunpack.c.l.b16 %v1196
      %v1199 = vunpack.c.h.b16 %v1196
      %v1200 = vpack.c.b16 %v1198, %v1198
      %v1201 = vpack.c.b16 %v1199, %v1199
      %s1204 = scalar_lea.vmem %s170, 40
      %1205 = vst.msk [vmem:[%s1204] sm:$0xf] %vm369, %v1200
      %1206 = vst.msk [vmem:[%s1204 + $0x4] sm:$0xf] %vm369, %v1201
      %v1207 = vld [vmem:[%s879] sm:$0xf]
      %v1208 = vld [vmem:[%s879 + $0x4] sm:$0xf]
      %v1209 = vld [vmem:[%s879 + $0x8] sm:$0x1]
      %v1210 = vld [vmem:[%s1046] sm:$0xf]
      %v1211 = vld [vmem:[%s1046 + $0x4] sm:$0xf]
      %v1212 = vld [vmem:[%s1046 + $0x8] sm:$0x1]
      %s1213 = scalar_lea.vmem %s165, 96
      %v1214 = vld [vmem:[%s1213] sm:$0xf]
      %v1215 = vld [vmem:[%s1213 + $0x4] sm:$0xf]
      %v1216 = vld [vmem:[%s1213 + $0x8] sm:$0x1]
      %v1219 = vunpack.c.l.b16 %v1207
      %v1220 = vunpack.c.l.b16 %v1208
      %v1221 = vpack.c.b16 %v1220, %v1219
      %v1223 = vunpack.c.l.b16 %v1209
      %v1224 = vpack.c.b16 %v1223, %v1223
      %v1226 = vshrl.u32 %v1221, 16
      %v1228 = vshll.u32 %v1221, 16
      %v1230 = vrot.slane %v1228, 1
      %v1231 = vor.u32 %v1226, %v1230
      %v1233 = vshll.u32 %v1224, 16
      %v1235 = vrot.slane %v1233, 1
      %v1236 = vsel %vm194, %v1231, %v1235
      %1237 = vrot.lane.b32.xlu0 %v1236, 1
      %v1238 = vpop.permute.xlu0 %1237
      %v1239 = vrot.slane %v1221, 1
      %v1240 = vrot.slane %v1224, 1
      %v1241 = vsel %vm209, %v1239, %v1240
      %1242 = vrot.lane.b32.xlu0 %v1241, 2
      %v1243 = vpop.permute.xlu0 %1242
      %v1246 = vunpack.c.l.b16 %v1210
      %v1247 = vunpack.c.l.b16 %v1211
      %v1248 = vpack.c.b16 %v1247, %v1246
      %1249 = vrot.lane.b32.xlu0 %v1248, 3
      %v1250 = vpop.permute.xlu0 %1249
      %v1252 = vunpack.c.l.b16 %v1212
      %v1253 = vpack.c.b16 %v1252, %v1252
      %v1255 = vshrl.u32 %v1248, 16
      %v1257 = vshll.u32 %v1248, 16
      %v1259 = vrot.slane %v1257, 1
      %v1260 = vor.u32 %v1255, %v1259
      %v1262 = vshll.u32 %v1253, 16
      %v1264 = vrot.slane %v1262, 1
      %v1265 = vsel %vm194, %v1260, %v1264
      %1266 = vrot.lane.b32.xlu0 %v1265, 4
      %v1267 = vpop.permute.xlu0 %1266
      %v1268 = vrot.slane %v1248, 1
      %v1269 = vrot.slane %v1253, 1
      %v1270 = vsel %vm209, %v1268, %v1269
      %1271 = vrot.lane.b32.xlu0 %v1270, 5
      %v1272 = vpop.permute.xlu0 %1271
      %v1275 = vunpack.c.l.b16 %v1214
      %v1276 = vunpack.c.l.b16 %v1215
      %v1277 = vpack.c.b16 %v1276, %v1275
      %1278 = vrot.lane.b32.xlu0 %v1277, 6
      %v1279 = vpop.permute.xlu0 %1278
      %v1281 = vunpack.c.l.b16 %v1216
      %v1282 = vpack.c.b16 %v1281, %v1281
      %v1284 = vshrl.u32 %v1277, 16
      %v1286 = vshll.u32 %v1277, 16
      %v1288 = vrot.slane %v1286, 1
      %v1289 = vor.u32 %v1284, %v1288
      %v1291 = vshll.u32 %v1282, 16
      %v1293 = vrot.slane %v1291, 1
      %v1294 = vsel %vm194, %v1289, %v1293
      %1295 = vrot.lane.b32.xlu0 %v1294, 7
      %v1296 = vpop.permute.xlu0 %1295
      %v1297 = vrot.slane %v1277, 1
      %v1298 = vrot.slane %v1282, 1
      %v1299 = vsel %vm209, %v1297, %v1298
      %1300 = vrot.lane.b32.xlu0 %v1299, 8
      %v1301 = vpop.permute.xlu0 %1300
      %v1303 = vsel %vm273, %v1221, %v1238
      %v1305 = vsel %vm276, %v1303, %v1243
      %v1307 = vsel %vm279, %v1305, %v1250
      %v1309 = vsel %vm282, %v1307, %v1267
      %v1311 = vsel %vm285, %v1309, %v1272
      %v1313 = vsel %vm288, %v1311, %v1279
      %v1315 = vsel %vm291, %v1313, %v1296
      %v1317 = vsel %vm294, %v1315, %v1301
      %v1318 = vsel %vm308, %v1317, 0
      %1320 = vmatprep.subr.bf16.mxu0 0
      %1321 = vmatpush1.bf16.msra.mxu0 %v316
      %1322 = vmatprep.subr.bf16.mxu0 0
      %1323 = vmatpush1.bf16.msra.mxu0 0
      %1324 = vmatprep.subr.bf16.mxu0 0
      %1325 = vmatpush1.bf16.msra.mxu0 0
      %1326 = vmatprep.subr.bf16.mxu0 0
      %1327 = vmatpush1.bf16.msra.mxu0 0
      %1328 = vmatprep.subr.bf16.mxu0 0
      %1329 = vmatpush1.bf16.msra.mxu0 0
      %1330 = vmatprep.subr.bf16.mxu0 0
      %1331 = vmatpush1.bf16.msra.mxu0 0
      %1332 = vmatprep.subr.bf16.mxu0 0
      %1333 = vmatpush1.bf16.msra.mxu0 0
      %1334 = vmatprep.subr.bf16.mxu0 0
      %1335 = vmatpush1.bf16.msra.mxu0 0
      %1336 = vmatprep.subr.bf16.mxu0 0
      %1337 = vmatpush1.bf16.msra.mxu0 0
      %1338 = vmatprep.subr.bf16.mxu0 0
      %1339 = vmatpush1.bf16.msra.mxu0 0
      %1340 = vmatprep.subr.bf16.mxu0 0
      %1341 = vmatpush1.bf16.msra.mxu0 0
      %1342 = vmatprep.subr.bf16.mxu0 0
      %1343 = vmatpush1.bf16.msra.mxu0 0
      %1344 = vmatprep.subr.bf16.mxu0 0
      %1345 = vmatpush1.bf16.msra.mxu0 0
      %1346 = vmatprep.subr.bf16.mxu0 0
      %1347 = vmatpush1.bf16.msra.mxu0 0
      %1348 = vmatprep.subr.bf16.mxu0 0
      %1349 = vmatpush1.bf16.msra.mxu0 0
      %1350 = vmatprep.subr.bf16.mxu0 0
      %1351 = vmatpush1.bf16.msra.mxu0 0
      %1352 = vmatprep.mubr.bf16.mxu0 0
      %1353 = vmatmul.mubr.bf16.gmra.mrb[0].mxu0 %v1318
      %v1354 = vpop.f32.mrb[0].mxu0
      %v1355 = vadd.f32 %v301, %v1354
      %v1356 = vpop.f32.mrb[0].mxu0
      %v1357 = vpop.f32.mrb[0].mxu0
      %v1358 = vadd.f32 %v301, %v1357
      %v1359 = vpop.f32.mrb[0].mxu0
      %1360 = vdwg.mxu0
      %v1361 = vmax.f32 %v1355, 0.0
      %v1362 = vmax.f32 %v1358, 0.0
      %v1363 = vpack.c.bf16 %v1362, %v1361
      %v1365 = vunpack.c.l.b16 %v1363
      %v1366 = vunpack.c.h.b16 %v1363
      %v1367 = vpack.c.b16 %v1365, %v1365
      %v1368 = vpack.c.b16 %v1366, %v1366
      %s1371 = scalar_lea.vmem %s170, 48
      %1372 = vst.msk [vmem:[%s1371] sm:$0xf] %vm369, %v1367
      %1373 = vst.msk [vmem:[%s1371 + $0x4] sm:$0xf] %vm369, %v1368
      %v1374 = vld [vmem:[%s1046] sm:$0xf]
      %v1375 = vld [vmem:[%s1046 + $0x4] sm:$0xf]
      %v1376 = vld [vmem:[%s1046 + $0x8] sm:$0x1]
      %v1377 = vld [vmem:[%s1213] sm:$0xf]
      %v1378 = vld [vmem:[%s1213 + $0x4] sm:$0xf]
      %v1379 = vld [vmem:[%s1213 + $0x8] sm:$0x1]
      %s1380 = scalar_lea.vmem %s165, 108
      %v1381 = vld [vmem:[%s1380] sm:$0xf]
      %v1382 = vld [vmem:[%s1380 + $0x4] sm:$0xf]
      %v1383 = vld [vmem:[%s1380 + $0x8] sm:$0x1]
      %v1386 = vunpack.c.l.b16 %v1374
      %v1387 = vunpack.c.l.b16 %v1375
      %v1388 = vpack.c.b16 %v1387, %v1386
      %v1390 = vunpack.c.l.b16 %v1376
      %v1391 = vpack.c.b16 %v1390, %v1390
      %v1393 = vshrl.u32 %v1388, 16
      %v1395 = vshll.u32 %v1388, 16
      %v1397 = vrot.slane %v1395, 1
      %v1398 = vor.u32 %v1393, %v1397
      %v1400 = vshll.u32 %v1391, 16
      %v1402 = vrot.slane %v1400, 1
      %v1403 = vsel %vm194, %v1398, %v1402
      %1404 = vrot.lane.b32.xlu0 %v1403, 1
      %v1405 = vpop.permute.xlu0 %1404
      %v1406 = vrot.slane %v1388, 1
      %v1407 = vrot.slane %v1391, 1
      %v1408 = vsel %vm209, %v1406, %v1407
      %1409 = vrot.lane.b32.xlu0 %v1408, 2
      %v1410 = vpop.permute.xlu0 %1409
      %v1413 = vunpack.c.l.b16 %v1377
      %v1414 = vunpack.c.l.b16 %v1378
      %v1415 = vpack.c.b16 %v1414, %v1413
      %1416 = vrot.lane.b32.xlu0 %v1415, 3
      %v1417 = vpop.permute.xlu0 %1416
      %v1419 = vunpack.c.l.b16 %v1379
      %v1420 = vpack.c.b16 %v1419, %v1419
      %v1422 = vshrl.u32 %v1415, 16
      %v1424 = vshll.u32 %v1415, 16
      %v1426 = vrot.slane %v1424, 1
      %v1427 = vor.u32 %v1422, %v1426
      %v1429 = vshll.u32 %v1420, 16
      %v1431 = vrot.slane %v1429, 1
      %v1432 = vsel %vm194, %v1427, %v1431
      %1433 = vrot.lane.b32.xlu0 %v1432, 4
      %v1434 = vpop.permute.xlu0 %1433
      %v1435 = vrot.slane %v1415, 1
      %v1436 = vrot.slane %v1420, 1
      %v1437 = vsel %vm209, %v1435, %v1436
      %1438 = vrot.lane.b32.xlu0 %v1437, 5
      %v1439 = vpop.permute.xlu0 %1438
      %v1442 = vunpack.c.l.b16 %v1381
      %v1443 = vunpack.c.l.b16 %v1382
      %v1444 = vpack.c.b16 %v1443, %v1442
      %1445 = vrot.lane.b32.xlu0 %v1444, 6
      %v1446 = vpop.permute.xlu0 %1445
      %v1448 = vunpack.c.l.b16 %v1383
      %v1449 = vpack.c.b16 %v1448, %v1448
      %v1451 = vshrl.u32 %v1444, 16
      %v1453 = vshll.u32 %v1444, 16
      %v1455 = vrot.slane %v1453, 1
      %v1456 = vor.u32 %v1451, %v1455
      %v1458 = vshll.u32 %v1449, 16
      %v1460 = vrot.slane %v1458, 1
      %v1461 = vsel %vm194, %v1456, %v1460
      %1462 = vrot.lane.b32.xlu0 %v1461, 7
      %v1463 = vpop.permute.xlu0 %1462
      %v1464 = vrot.slane %v1444, 1
      %v1465 = vrot.slane %v1449, 1
      %v1466 = vsel %vm209, %v1464, %v1465
      %1467 = vrot.lane.b32.xlu0 %v1466, 8
      %v1468 = vpop.permute.xlu0 %1467
      %v1470 = vsel %vm273, %v1388, %v1405
      %v1472 = vsel %vm276, %v1470, %v1410
      %v1474 = vsel %vm279, %v1472, %v1417
      %v1476 = vsel %vm282, %v1474, %v1434
      %v1478 = vsel %vm285, %v1476, %v1439
      %v1480 = vsel %vm288, %v1478, %v1446
      %v1482 = vsel %vm291, %v1480, %v1463
      %v1484 = vsel %vm294, %v1482, %v1468
      %v1485 = vsel %vm308, %v1484, 0
      %1487 = vmatprep.subr.bf16.mxu0 0
      %1488 = vmatpush1.bf16.msra.mxu0 %v316
      %1489 = vmatprep.subr.bf16.mxu0 0
      %1490 = vmatpush1.bf16.msra.mxu0 0
      %1491 = vmatprep.subr.bf16.mxu0 0
      %1492 = vmatpush1.bf16.msra.mxu0 0
      %1493 = vmatprep.subr.bf16.mxu0 0
      %1494 = vmatpush1.bf16.msra.mxu0 0
      %1495 = vmatprep.subr.bf16.mxu0 0
      %1496 = vmatpush1.bf16.msra.mxu0 0
      %1497 = vmatprep.subr.bf16.mxu0 0
      %1498 = vmatpush1.bf16.msra.mxu0 0
      %1499 = vmatprep.subr.bf16.mxu0 0
      %1500 = vmatpush1.bf16.msra.mxu0 0
      %1501 = vmatprep.subr.bf16.mxu0 0
      %1502 = vmatpush1.bf16.msra.mxu0 0
      %1503 = vmatprep.subr.bf16.mxu0 0
      %1504 = vmatpush1.bf16.msra.mxu0 0
      %1505 = vmatprep.subr.bf16.mxu0 0
      %1506 = vmatpush1.bf16.msra.mxu0 0
      %1507 = vmatprep.subr.bf16.mxu0 0
      %1508 = vmatpush1.bf16.msra.mxu0 0
      %1509 = vmatprep.subr.bf16.mxu0 0
      %1510 = vmatpush1.bf16.msra.mxu0 0
      %1511 = vmatprep.subr.bf16.mxu0 0
      %1512 = vmatpush1.bf16.msra.mxu0 0
      %1513 = vmatprep.subr.bf16.mxu0 0
      %1514 = vmatpush1.bf16.msra.mxu0 0
      %1515 = vmatprep.subr.bf16.mxu0 0
      %1516 = vmatpush1.bf16.msra.mxu0 0
      %1517 = vmatprep.subr.bf16.mxu0 0
      %1518 = vmatpush1.bf16.msra.mxu0 0
      %1519 = vmatprep.mubr.bf16.mxu0 0
      %1520 = vmatmul.mubr.bf16.gmra.mrb[0].mxu0 %v1485
      %v1521 = vpop.f32.mrb[0].mxu0
      %v1522 = vadd.f32 %v301, %v1521
      %v1523 = vpop.f32.mrb[0].mxu0
      %v1524 = vpop.f32.mrb[0].mxu0
      %v1525 = vadd.f32 %v301, %v1524
      %v1526 = vpop.f32.mrb[0].mxu0
      %1527 = vdwg.mxu0
      %v1528 = vmax.f32 %v1522, 0.0
      %v1529 = vmax.f32 %v1525, 0.0
      %v1530 = vpack.c.bf16 %v1529, %v1528
      %v1532 = vunpack.c.l.b16 %v1530
      %v1533 = vunpack.c.h.b16 %v1530
      %v1534 = vpack.c.b16 %v1532, %v1532
      %v1535 = vpack.c.b16 %v1533, %v1533
      %s1538 = scalar_lea.vmem %s170, 56
      %1539 = vst.msk [vmem:[%s1538] sm:$0xf] %vm369, %v1534
      %1540 = vst.msk [vmem:[%s1538 + $0x4] sm:$0xf] %vm369, %v1535
      %v1541 = vld [vmem:[%s1213] sm:$0xf]
      %v1542 = vld [vmem:[%s1213 + $0x4] sm:$0xf]
      %v1543 = vld [vmem:[%s1213 + $0x8] sm:$0x1]
      %v1544 = vld [vmem:[%s1380] sm:$0xf]
      %v1545 = vld [vmem:[%s1380 + $0x4] sm:$0xf]
      %v1546 = vld [vmem:[%s1380 + $0x8] sm:$0x1]
      %s1547 = scalar_lea.vmem %s165, 120
      %v1548 = vld [vmem:[%s1547] sm:$0xf]
      %v1549 = vld [vmem:[%s1547 + $0x4] sm:$0xf]
      %v1550 = vld [vmem:[%s1547 + $0x8] sm:$0x1]
      %v1553 = vunpack.c.l.b16 %v1541
      %v1554 = vunpack.c.l.b16 %v1542
      %v1555 = vpack.c.b16 %v1554, %v1553
      %v1557 = vunpack.c.l.b16 %v1543
      %v1558 = vpack.c.b16 %v1557, %v1557
      %v1560 = vshrl.u32 %v1555, 16
      %v1562 = vshll.u32 %v1555, 16
      %v1564 = vrot.slane %v1562, 1
      %v1565 = vor.u32 %v1560, %v1564
      %v1567 = vshll.u32 %v1558, 16
      %v1569 = vrot.slane %v1567, 1
      %v1570 = vsel %vm194, %v1565, %v1569
      %1571 = vrot.lane.b32.xlu0 %v1570, 1
      %v1572 = vpop.permute.xlu0 %1571
      %v1573 = vrot.slane %v1555, 1
      %v1574 = vrot.slane %v1558, 1
      %v1575 = vsel %vm209, %v1573, %v1574
      %1576 = vrot.lane.b32.xlu0 %v1575, 2
      %v1577 = vpop.permute.xlu0 %1576
      %v1580 = vunpack.c.l.b16 %v1544
      %v1581 = vunpack.c.l.b16 %v1545
      %v1582 = vpack.c.b16 %v1581, %v1580
      %1583 = vrot.lane.b32.xlu0 %v1582, 3
      %v1584 = vpop.permute.xlu0 %1583
      %v1586 = vunpack.c.l.b16 %v1546
      %v1587 = vpack.c.b16 %v1586, %v1586
      %v1589 = vshrl.u32 %v1582, 16
      %v1591 = vshll.u32 %v1582, 16
      %v1593 = vrot.slane %v1591, 1
      %v1594 = vor.u32 %v1589, %v1593
      %v1596 = vshll.u32 %v1587, 16
      %v1598 = vrot.slane %v1596, 1
      %v1599 = vsel %vm194, %v1594, %v1598
      %1600 = vrot.lane.b32.xlu0 %v1599, 4
      %v1601 = vpop.permute.xlu0 %1600
      %v1602 = vrot.slane %v1582, 1
      %v1603 = vrot.slane %v1587, 1
      %v1604 = vsel %vm209, %v1602, %v1603
      %1605 = vrot.lane.b32.xlu0 %v1604, 5
      %v1606 = vpop.permute.xlu0 %1605
      %v1609 = vunpack.c.l.b16 %v1548
      %v1610 = vunpack.c.l.b16 %v1549
      %v1611 = vpack.c.b16 %v1610, %v1609
      %1612 = vrot.lane.b32.xlu0 %v1611, 6
      %v1613 = vpop.permute.xlu0 %1612
      %v1615 = vunpack.c.l.b16 %v1550
      %v1616 = vpack.c.b16 %v1615, %v1615
      %v1618 = vshrl.u32 %v1611, 16
      %v1620 = vshll.u32 %v1611, 16
      %v1622 = vrot.slane %v1620, 1
      %v1623 = vor.u32 %v1618, %v1622
      %v1625 = vshll.u32 %v1616, 16
      %v1627 = vrot.slane %v1625, 1
      %v1628 = vsel %vm194, %v1623, %v1627
      %1629 = vrot.lane.b32.xlu0 %v1628, 7
      %v1630 = vpop.permute.xlu0 %1629
      %v1631 = vrot.slane %v1611, 1
      %v1632 = vrot.slane %v1616, 1
      %v1633 = vsel %vm209, %v1631, %v1632
      %1634 = vrot.lane.b32.xlu0 %v1633, 8
      %v1635 = vpop.permute.xlu0 %1634
      %v1637 = vsel %vm273, %v1555, %v1572
      %v1639 = vsel %vm276, %v1637, %v1577
      %v1641 = vsel %vm279, %v1639, %v1584
      %v1643 = vsel %vm282, %v1641, %v1601
      %v1645 = vsel %vm285, %v1643, %v1606
      %v1647 = vsel %vm288, %v1645, %v1613
      %v1649 = vsel %vm291, %v1647, %v1630
      %v1651 = vsel %vm294, %v1649, %v1635
      %v1652 = vsel %vm308, %v1651, 0
      %1654 = vmatprep.subr.bf16.mxu0 0
      %1655 = vmatpush1.bf16.msra.mxu0 %v316
      %1656 = vmatprep.subr.bf16.mxu0 0
      %1657 = vmatpush1.bf16.msra.mxu0 0
      %1658 = vmatprep.subr.bf16.mxu0 0
      %1659 = vmatpush1.bf16.msra.mxu0 0
      %1660 = vmatprep.subr.bf16.mxu0 0
      %1661 = vmatpush1.bf16.msra.mxu0 0
      %1662 = vmatprep.subr.bf16.mxu0 0
      %1663 = vmatpush1.bf16.msra.mxu0 0
      %1664 = vmatprep.subr.bf16.mxu0 0
      %1665 = vmatpush1.bf16.msra.mxu0 0
      %1666 = vmatprep.subr.bf16.mxu0 0
      %1667 = vmatpush1.bf16.msra.mxu0 0
      %1668 = vmatprep.subr.bf16.mxu0 0
      %1669 = vmatpush1.bf16.msra.mxu0 0
      %1670 = vmatprep.subr.bf16.mxu0 0
      %1671 = vmatpush1.bf16.msra.mxu0 0
      %1672 = vmatprep.subr.bf16.mxu0 0
      %1673 = vmatpush1.bf16.msra.mxu0 0
      %1674 = vmatprep.subr.bf16.mxu0 0
      %1675 = vmatpush1.bf16.msra.mxu0 0
      %1676 = vmatprep.subr.bf16.mxu0 0
      %1677 = vmatpush1.bf16.msra.mxu0 0
      %1678 = vmatprep.subr.bf16.mxu0 0
      %1679 = vmatpush1.bf16.msra.mxu0 0
      %1680 = vmatprep.subr.bf16.mxu0 0
      %1681 = vmatpush1.bf16.msra.mxu0 0
      %1682 = vmatprep.subr.bf16.mxu0 0
      %1683 = vmatpush1.bf16.msra.mxu0 0
      %1684 = vmatprep.subr.bf16.mxu0 0
      %1685 = vmatpush1.bf16.msra.mxu0 0
      %1686 = vmatprep.mubr.bf16.mxu0 0
      %1687 = vmatmul.mubr.bf16.gmra.mrb[0].mxu0 %v1652
      %v1688 = vpop.f32.mrb[0].mxu0
      %v1689 = vadd.f32 %v301, %v1688
      %v1690 = vpop.f32.mrb[0].mxu0
      %v1691 = vpop.f32.mrb[0].mxu0
      %v1692 = vadd.f32 %v301, %v1691
      %v1693 = vpop.f32.mrb[0].mxu0
      %1694 = vdwg.mxu0
      %v1695 = vmax.f32 %v1689, 0.0
      %v1696 = vmax.f32 %v1692, 0.0
      %v1697 = vpack.c.bf16 %v1696, %v1695
      %v1699 = vunpack.c.l.b16 %v1697
      %v1700 = vunpack.c.h.b16 %v1697
      %v1701 = vpack.c.b16 %v1699, %v1699
      %v1702 = vpack.c.b16 %v1700, %v1700
      %s1705 = scalar_lea.vmem %s170, 64
      %1706 = vst.msk [vmem:[%s1705] sm:$0xf] %vm369, %v1701
      %1707 = vst.msk [vmem:[%s1705 + $0x4] sm:$0xf] %vm369, %v1702
      %v1708 = vld [vmem:[%s1380] sm:$0xf]
      %v1709 = vld [vmem:[%s1380 + $0x4] sm:$0xf]
      %v1710 = vld [vmem:[%s1380 + $0x8] sm:$0x1]
      %v1711 = vld [vmem:[%s1547] sm:$0xf]
      %v1712 = vld [vmem:[%s1547 + $0x4] sm:$0xf]
      %v1713 = vld [vmem:[%s1547 + $0x8] sm:$0x1]
      %s1714 = scalar_lea.vmem %s165, 132
      %v1715 = vld [vmem:[%s1714] sm:$0xf]
      %v1716 = vld [vmem:[%s1714 + $0x4] sm:$0xf]
      %v1717 = vld [vmem:[%s1714 + $0x8] sm:$0x1]
      %v1720 = vunpack.c.l.b16 %v1708
      %v1721 = vunpack.c.l.b16 %v1709
      %v1722 = vpack.c.b16 %v1721, %v1720
      %v1724 = vunpack.c.l.b16 %v1710
      %v1725 = vpack.c.b16 %v1724, %v1724
      %v1727 = vshrl.u32 %v1722, 16
      %v1729 = vshll.u32 %v1722, 16
      %v1731 = vrot.slane %v1729, 1
      %v1732 = vor.u32 %v1727, %v1731
      %v1734 = vshll.u32 %v1725, 16
      %v1736 = vrot.slane %v1734, 1
      %v1737 = vsel %vm194, %v1732, %v1736
      %1738 = vrot.lane.b32.xlu0 %v1737, 1
      %v1739 = vpop.permute.xlu0 %1738
      %v1740 = vrot.slane %v1722, 1
      %v1741 = vrot.slane %v1725, 1
      %v1742 = vsel %vm209, %v1740, %v1741
      %1743 = vrot.lane.b32.xlu0 %v1742, 2
      %v1744 = vpop.permute.xlu0 %1743
      %v1747 = vunpack.c.l.b16 %v1711
      %v1748 = vunpack.c.l.b16 %v1712
      %v1749 = vpack.c.b16 %v1748, %v1747
      %1750 = vrot.lane.b32.xlu0 %v1749, 3
      %v1751 = vpop.permute.xlu0 %1750
      %v1753 = vunpack.c.l.b16 %v1713
      %v1754 = vpack.c.b16 %v1753, %v1753
      %v1756 = vshrl.u32 %v1749, 16
      %v1758 = vshll.u32 %v1749, 16
      %v1760 = vrot.slane %v1758, 1
      %v1761 = vor.u32 %v1756, %v1760
      %v1763 = vshll.u32 %v1754, 16
      %v1765 = vrot.slane %v1763, 1
      %v1766 = vsel %vm194, %v1761, %v1765
      %1767 = vrot.lane.b32.xlu0 %v1766, 4
      %v1768 = vpop.permute.xlu0 %1767
      %v1769 = vrot.slane %v1749, 1
      %v1770 = vrot.slane %v1754, 1
      %v1771 = vsel %vm209, %v1769, %v1770
      %1772 = vrot.lane.b32.xlu0 %v1771, 5
      %v1773 = vpop.permute.xlu0 %1772
      %v1776 = vunpack.c.l.b16 %v1715
      %v1777 = vunpack.c.l.b16 %v1716
      %v1778 = vpack.c.b16 %v1777, %v1776
      %1779 = vrot.lane.b32.xlu0 %v1778, 6
      %v1780 = vpop.permute.xlu0 %1779
      %v1782 = vunpack.c.l.b16 %v1717
      %v1783 = vpack.c.b16 %v1782, %v1782
      %v1785 = vshrl.u32 %v1778, 16
      %v1787 = vshll.u32 %v1778, 16
      %v1789 = vrot.slane %v1787, 1
      %v1790 = vor.u32 %v1785, %v1789
      %v1792 = vshll.u32 %v1783, 16
      %v1794 = vrot.slane %v1792, 1
      %v1795 = vsel %vm194, %v1790, %v1794
      %1796 = vrot.lane.b32.xlu0 %v1795, 7
      %v1797 = vpop.permute.xlu0 %1796
      %v1798 = vrot.slane %v1778, 1
      %v1799 = vrot.slane %v1783, 1
      %v1800 = vsel %vm209, %v1798, %v1799
      %1801 = vrot.lane.b32.xlu0 %v1800, 8
      %v1802 = vpop.permute.xlu0 %1801
      %v1804 = vsel %vm273, %v1722, %v1739
      %v1806 = vsel %vm276, %v1804, %v1744
      %v1808 = vsel %vm279, %v1806, %v1751
      %v1810 = vsel %vm282, %v1808, %v1768
      %v1812 = vsel %vm285, %v1810, %v1773
      %v1814 = vsel %vm288, %v1812, %v1780
      %v1816 = vsel %vm291, %v1814, %v1797
      %v1818 = vsel %vm294, %v1816, %v1802
      %v1819 = vsel %vm308, %v1818, 0
      %1821 = vmatprep.subr.bf16.mxu0 0
      %1822 = vmatpush1.bf16.msra.mxu0 %v316
      %1823 = vmatprep.subr.bf16.mxu0 0
      %1824 = vmatpush1.bf16.msra.mxu0 0
      %1825 = vmatprep.subr.bf16.mxu0 0
      %1826 = vmatpush1.bf16.msra.mxu0 0
      %1827 = vmatprep.subr.bf16.mxu0 0
      %1828 = vmatpush1.bf16.msra.mxu0 0
      %1829 = vmatprep.subr.bf16.mxu0 0
      %1830 = vmatpush1.bf16.msra.mxu0 0
      %1831 = vmatprep.subr.bf16.mxu0 0
      %1832 = vmatpush1.bf16.msra.mxu0 0
      %1833 = vmatprep.subr.bf16.mxu0 0
      %1834 = vmatpush1.bf16.msra.mxu0 0
      %1835 = vmatprep.subr.bf16.mxu0 0
      %1836 = vmatpush1.bf16.msra.mxu0 0
      %1837 = vmatprep.subr.bf16.mxu0 0
      %1838 = vmatpush1.bf16.msra.mxu0 0
      %1839 = vmatprep.subr.bf16.mxu0 0
      %1840 = vmatpush1.bf16.msra.mxu0 0
      %1841 = vmatprep.subr.bf16.mxu0 0
      %1842 = vmatpush1.bf16.msra.mxu0 0
      %1843 = vmatprep.subr.bf16.mxu0 0
      %1844 = vmatpush1.bf16.msra.mxu0 0
      %1845 = vmatprep.subr.bf16.mxu0 0
      %1846 = vmatpush1.bf16.msra.mxu0 0
      %1847 = vmatprep.subr.bf16.mxu0 0
      %1848 = vmatpush1.bf16.msra.mxu0 0
      %1849 = vmatprep.subr.bf16.mxu0 0
      %1850 = vmatpush1.bf16.msra.mxu0 0
      %1851 = vmatprep.subr.bf16.mxu0 0
      %1852 = vmatpush1.bf16.msra.mxu0 0
      %1853 = vmatprep.mubr.bf16.mxu0 0
      %1854 = vmatmul.mubr.bf16.gmra.mrb[0].mxu0 %v1819
      %v1855 = vpop.f32.mrb[0].mxu0
      %v1856 = vadd.f32 %v301, %v1855
      %v1857 = vpop.f32.mrb[0].mxu0
      %v1858 = vpop.f32.mrb[0].mxu0
      %v1859 = vadd.f32 %v301, %v1858
      %v1860 = vpop.f32.mrb[0].mxu0
      %1861 = vdwg.mxu0
      %v1862 = vmax.f32 %v1856, 0.0
      %v1863 = vmax.f32 %v1859, 0.0
      %v1864 = vpack.c.bf16 %v1863, %v1862
      %v1866 = vunpack.c.l.b16 %v1864
      %v1867 = vunpack.c.h.b16 %v1864
      %v1868 = vpack.c.b16 %v1866, %v1866
      %v1869 = vpack.c.b16 %v1867, %v1867
      %s1872 = scalar_lea.vmem %s170, 72
      %1873 = vst.msk [vmem:[%s1872] sm:$0xf] %vm369, %v1868
      %1874 = vst.msk [vmem:[%s1872 + $0x4] sm:$0xf] %vm369, %v1869
      %v1875 = vld [vmem:[%s1547] sm:$0xf]
      %v1876 = vld [vmem:[%s1547 + $0x4] sm:$0xf]
      %v1877 = vld [vmem:[%s1547 + $0x8] sm:$0x1]
      %v1878 = vld [vmem:[%s1714] sm:$0xf]
      %v1879 = vld [vmem:[%s1714 + $0x4] sm:$0xf]
      %v1880 = vld [vmem:[%s1714 + $0x8] sm:$0x1]
      %s1881 = scalar_lea.vmem %s165, 144
      %v1882 = vld [vmem:[%s1881] sm:$0xf]
      %v1883 = vld [vmem:[%s1881 + $0x4] sm:$0xf]
      %v1884 = vld [vmem:[%s1881 + $0x8] sm:$0x1]
      %v1887 = vunpack.c.l.b16 %v1875
      %v1888 = vunpack.c.l.b16 %v1876
      %v1889 = vpack.c.b16 %v1888, %v1887
      %v1891 = vunpack.c.l.b16 %v1877
      %v1892 = vpack.c.b16 %v1891, %v1891
      %v1894 = vshrl.u32 %v1889, 16
      %v1896 = vshll.u32 %v1889, 16
      %v1898 = vrot.slane %v1896, 1
      %v1899 = vor.u32 %v1894, %v1898
      %v1901 = vshll.u32 %v1892, 16
      %v1903 = vrot.slane %v1901, 1
      %v1904 = vsel %vm194, %v1899, %v1903
      %1905 = vrot.lane.b32.xlu0 %v1904, 1
      %v1906 = vpop.permute.xlu0 %1905
      %v1907 = vrot.slane %v1889, 1
      %v1908 = vrot.slane %v1892, 1
      %v1909 = vsel %vm209, %v1907, %v1908
      %1910 = vrot.lane.b32.xlu0 %v1909, 2
      %v1911 = vpop.permute.xlu0 %1910
      %v1914 = vunpack.c.l.b16 %v1878
      %v1915 = vunpack.c.l.b16 %v1879
      %v1916 = vpack.c.b16 %v1915, %v1914
      %1917 = vrot.lane.b32.xlu0 %v1916, 3
      %v1918 = vpop.permute.xlu0 %1917
      %v1920 = vunpack.c.l.b16 %v1880
      %v1921 = vpack.c.b16 %v1920, %v1920
      %v1923 = vshrl.u32 %v1916, 16
      %v1925 = vshll.u32 %v1916, 16
      %v1927 = vrot.slane %v1925, 1
      %v1928 = vor.u32 %v1923, %v1927
      %v1930 = vshll.u32 %v1921, 16
      %v1932 = vrot.slane %v1930, 1
      %v1933 = vsel %vm194, %v1928, %v1932
      %1934 = vrot.lane.b32.xlu0 %v1933, 4
      %v1935 = vpop.permute.xlu0 %1934
      %v1936 = vrot.slane %v1916, 1
      %v1937 = vrot.slane %v1921, 1
      %v1938 = vsel %vm209, %v1936, %v1937
      %1939 = vrot.lane.b32.xlu0 %v1938, 5
      %v1940 = vpop.permute.xlu0 %1939
      %v1943 = vunpack.c.l.b16 %v1882
      %v1944 = vunpack.c.l.b16 %v1883
      %v1945 = vpack.c.b16 %v1944, %v1943
      %1946 = vrot.lane.b32.xlu0 %v1945, 6
      %v1947 = vpop.permute.xlu0 %1946
      %v1949 = vunpack.c.l.b16 %v1884
      %v1950 = vpack.c.b16 %v1949, %v1949
      %v1952 = vshrl.u32 %v1945, 16
      %v1954 = vshll.u32 %v1945, 16
      %v1956 = vrot.slane %v1954, 1
      %v1957 = vor.u32 %v1952, %v1956
      %v1959 = vshll.u32 %v1950, 16
      %v1961 = vrot.slane %v1959, 1
      %v1962 = vsel %vm194, %v1957, %v1961
      %1963 = vrot.lane.b32.xlu0 %v1962, 7
      %v1964 = vpop.permute.xlu0 %1963
      %v1965 = vrot.slane %v1945, 1
      %v1966 = vrot.slane %v1950, 1
      %v1967 = vsel %vm209, %v1965, %v1966
      %1968 = vrot.lane.b32.xlu0 %v1967, 8
      %v1969 = vpop.permute.xlu0 %1968
      %v1971 = vsel %vm273, %v1889, %v1906
      %v1973 = vsel %vm276, %v1971, %v1911
      %v1975 = vsel %vm279, %v1973, %v1918
      %v1977 = vsel %vm282, %v1975, %v1935
      %v1979 = vsel %vm285, %v1977, %v1940
      %v1981 = vsel %vm288, %v1979, %v1947
      %v1983 = vsel %vm291, %v1981, %v1964
      %v1985 = vsel %vm294, %v1983, %v1969
      %v1986 = vsel %vm308, %v1985, 0
      %1988 = vmatprep.subr.bf16.mxu0 0
      %1989 = vmatpush1.bf16.msra.mxu0 %v316
      %1990 = vmatprep.subr.bf16.mxu0 0
      %1991 = vmatpush1.bf16.msra.mxu0 0
      %1992 = vmatprep.subr.bf16.mxu0 0
      %1993 = vmatpush1.bf16.msra.mxu0 0
      %1994 = vmatprep.subr.bf16.mxu0 0
      %1995 = vmatpush1.bf16.msra.mxu0 0
      %1996 = vmatprep.subr.bf16.mxu0 0
      %1997 = vmatpush1.bf16.msra.mxu0 0
      %1998 = vmatprep.subr.bf16.mxu0 0
      %1999 = vmatpush1.bf16.msra.mxu0 0
      %2000 = vmatprep.subr.bf16.mxu0 0
      %2001 = vmatpush1.bf16.msra.mxu0 0
      %2002 = vmatprep.subr.bf16.mxu0 0
      %2003 = vmatpush1.bf16.msra.mxu0 0
      %2004 = vmatprep.subr.bf16.mxu0 0
      %2005 = vmatpush1.bf16.msra.mxu0 0
      %2006 = vmatprep.subr.bf16.mxu0 0
      %2007 = vmatpush1.bf16.msra.mxu0 0
      %2008 = vmatprep.subr.bf16.mxu0 0
      %2009 = vmatpush1.bf16.msra.mxu0 0
      %2010 = vmatprep.subr.bf16.mxu0 0
      %2011 = vmatpush1.bf16.msra.mxu0 0
      %2012 = vmatprep.subr.bf16.mxu0 0
      %2013 = vmatpush1.bf16.msra.mxu0 0
      %2014 = vmatprep.subr.bf16.mxu0 0
      %2015 = vmatpush1.bf16.msra.mxu0 0
      %2016 = vmatprep.subr.bf16.mxu0 0
      %2017 = vmatpush1.bf16.msra.mxu0 0
      %2018 = vmatprep.subr.bf16.mxu0 0
      %2019 = vmatpush1.bf16.msra.mxu0 0
      %2020 = vmatprep.mubr.bf16.mxu0 0
      %2021 = vmatmul.mubr.bf16.gmra.mrb[0].mxu0 %v1986
      %v2022 = vpop.f32.mrb[0].mxu0
      %v2023 = vadd.f32 %v301, %v2022
      %v2024 = vpop.f32.mrb[0].mxu0
      %v2025 = vpop.f32.mrb[0].mxu0
      %v2026 = vadd.f32 %v301, %v2025
      %v2027 = vpop.f32.mrb[0].mxu0
      %2028 = vdwg.mxu0
      %v2029 = vmax.f32 %v2023, 0.0
      %v2030 = vmax.f32 %v2026, 0.0
      %v2031 = vpack.c.bf16 %v2030, %v2029
      %v2033 = vunpack.c.l.b16 %v2031
      %v2034 = vunpack.c.h.b16 %v2031
      %v2035 = vpack.c.b16 %v2033, %v2033
      %v2036 = vpack.c.b16 %v2034, %v2034
      %s2039 = scalar_lea.vmem %s170, 80
      %2040 = vst.msk [vmem:[%s2039] sm:$0xf] %vm369, %v2035
      %2041 = vst.msk [vmem:[%s2039 + $0x4] sm:$0xf] %vm369, %v2036
      %v2042 = vld [vmem:[%s1714] sm:$0xf]
      %v2043 = vld [vmem:[%s1714 + $0x4] sm:$0xf]
      %v2044 = vld [vmem:[%s1714 + $0x8] sm:$0x1]
      %v2045 = vld [vmem:[%s1881] sm:$0xf]
      %v2046 = vld [vmem:[%s1881 + $0x4] sm:$0xf]
      %v2047 = vld [vmem:[%s1881 + $0x8] sm:$0x1]
      %s2048 = scalar_lea.vmem %s165, 156
      %v2049 = vld [vmem:[%s2048] sm:$0xf]
      %v2050 = vld [vmem:[%s2048 + $0x4] sm:$0xf]
      %v2051 = vld [vmem:[%s2048 + $0x8] sm:$0x1]
      %v2054 = vunpack.c.l.b16 %v2042
      %v2055 = vunpack.c.l.b16 %v2043
      %v2056 = vpack.c.b16 %v2055, %v2054
      %v2058 = vunpack.c.l.b16 %v2044
      %v2059 = vpack.c.b16 %v2058, %v2058
      %v2061 = vshrl.u32 %v2056, 16
      %v2063 = vshll.u32 %v2056, 16
      %v2065 = vrot.slane %v2063, 1
      %v2066 = vor.u32 %v2061, %v2065
      %v2068 = vshll.u32 %v2059, 16
      %v2070 = vrot.slane %v2068, 1
      %v2071 = vsel %vm194, %v2066, %v2070
      %2072 = vrot.lane.b32.xlu0 %v2071, 1
      %v2073 = vpop.permute.xlu0 %2072
      %v2074 = vrot.slane %v2056, 1
      %v2075 = vrot.slane %v2059, 1
      %v2076 = vsel %vm209, %v2074, %v2075
      %2077 = vrot.lane.b32.xlu0 %v2076, 2
      %v2078 = vpop.permute.xlu0 %2077
      %v2081 = vunpack.c.l.b16 %v2045
      %v2082 = vunpack.c.l.b16 %v2046
      %v2083 = vpack.c.b16 %v2082, %v2081
      %2084 = vrot.lane.b32.xlu0 %v2083, 3
      %v2085 = vpop.permute.xlu0 %2084
      %v2087 = vunpack.c.l.b16 %v2047
      %v2088 = vpack.c.b16 %v2087, %v2087
      %v2090 = vshrl.u32 %v2083, 16
      %v2092 = vshll.u32 %v2083, 16
      %v2094 = vrot.slane %v2092, 1
      %v2095 = vor.u32 %v2090, %v2094
      %v2097 = vshll.u32 %v2088, 16
      %v2099 = vrot.slane %v2097, 1
      %v2100 = vsel %vm194, %v2095, %v2099
      %2101 = vrot.lane.b32.xlu0 %v2100, 4
      %v2102 = vpop.permute.xlu0 %2101
      %v2103 = vrot.slane %v2083, 1
      %v2104 = vrot.slane %v2088, 1
      %v2105 = vsel %vm209, %v2103, %v2104
      %2106 = vrot.lane.b32.xlu0 %v2105, 5
      %v2107 = vpop.permute.xlu0 %2106
      %v2110 = vunpack.c.l.b16 %v2049
      %v2111 = vunpack.c.l.b16 %v2050
      %v2112 = vpack.c.b16 %v2111, %v2110
      %2113 = vrot.lane.b32.xlu0 %v2112, 6
      %v2114 = vpop.permute.xlu0 %2113
      %v2116 = vunpack.c.l.b16 %v2051
      %v2117 = vpack.c.b16 %v2116, %v2116
      %v2119 = vshrl.u32 %v2112, 16
      %v2121 = vshll.u32 %v2112, 16
      %v2123 = vrot.slane %v2121, 1
      %v2124 = vor.u32 %v2119, %v2123
      %v2126 = vshll.u32 %v2117, 16
      %v2128 = vrot.slane %v2126, 1
      %v2129 = vsel %vm194, %v2124, %v2128
      %2130 = vrot.lane.b32.xlu0 %v2129, 7
      %v2131 = vpop.permute.xlu0 %2130
      %v2132 = vrot.slane %v2112, 1
      %v2133 = vrot.slane %v2117, 1
      %v2134 = vsel %vm209, %v2132, %v2133
      %2135 = vrot.lane.b32.xlu0 %v2134, 8
      %v2136 = vpop.permute.xlu0 %2135
      %v2138 = vsel %vm273, %v2056, %v2073
      %v2140 = vsel %vm276, %v2138, %v2078
      %v2142 = vsel %vm279, %v2140, %v2085
      %v2144 = vsel %vm282, %v2142, %v2102
      %v2146 = vsel %vm285, %v2144, %v2107
      %v2148 = vsel %vm288, %v2146, %v2114
      %v2150 = vsel %vm291, %v2148, %v2131
      %v2152 = vsel %vm294, %v2150, %v2136
      %v2153 = vsel %vm308, %v2152, 0
      %2155 = vmatprep.subr.bf16.mxu0 0
      %2156 = vmatpush1.bf16.msra.mxu0 %v316
      %2157 = vmatprep.subr.bf16.mxu0 0
      %2158 = vmatpush1.bf16.msra.mxu0 0
      %2159 = vmatprep.subr.bf16.mxu0 0
      %2160 = vmatpush1.bf16.msra.mxu0 0
      %2161 = vmatprep.subr.bf16.mxu0 0
      %2162 = vmatpush1.bf16.msra.mxu0 0
      %2163 = vmatprep.subr.bf16.mxu0 0
      %2164 = vmatpush1.bf16.msra.mxu0 0
      %2165 = vmatprep.subr.bf16.mxu0 0
      %2166 = vmatpush1.bf16.msra.mxu0 0
      %2167 = vmatprep.subr.bf16.mxu0 0
      %2168 = vmatpush1.bf16.msra.mxu0 0
      %2169 = vmatprep.subr.bf16.mxu0 0
      %2170 = vmatpush1.bf16.msra.mxu0 0
      %2171 = vmatprep.subr.bf16.mxu0 0
      %2172 = vmatpush1.bf16.msra.mxu0 0
      %2173 = vmatprep.subr.bf16.mxu0 0
      %2174 = vmatpush1.bf16.msra.mxu0 0
      %2175 = vmatprep.subr.bf16.mxu0 0
      %2176 = vmatpush1.bf16.msra.mxu0 0
      %2177 = vmatprep.subr.bf16.mxu0 0
      %2178 = vmatpush1.bf16.msra.mxu0 0
      %2179 = vmatprep.subr.bf16.mxu0 0
      %2180 = vmatpush1.bf16.msra.mxu0 0
      %2181 = vmatprep.subr.bf16.mxu0 0
      %2182 = vmatpush1.bf16.msra.mxu0 0
      %2183 = vmatprep.subr.bf16.mxu0 0
      %2184 = vmatpush1.bf16.msra.mxu0 0
      %2185 = vmatprep.subr.bf16.mxu0 0
      %2186 = vmatpush1.bf16.msra.mxu0 0
      %2187 = vmatprep.mubr.bf16.mxu0 0
      %2188 = vmatmul.mubr.bf16.gmra.mrb[0].mxu0 %v2153
      %v2189 = vpop.f32.mrb[0].mxu0
      %v2190 = vadd.f32 %v301, %v2189
      %v2191 = vpop.f32.mrb[0].mxu0
      %v2192 = vpop.f32.mrb[0].mxu0
      %v2193 = vadd.f32 %v301, %v2192
      %v2194 = vpop.f32.mrb[0].mxu0
      %2195 = vdwg.mxu0
      %v2196 = vmax.f32 %v2190, 0.0
      %v2197 = vmax.f32 %v2193, 0.0
      %v2198 = vpack.c.bf16 %v2197, %v2196
      %v2200 = vunpack.c.l.b16 %v2198
      %v2201 = vunpack.c.h.b16 %v2198
      %v2202 = vpack.c.b16 %v2200, %v2200
      %v2203 = vpack.c.b16 %v2201, %v2201
      %s2206 = scalar_lea.vmem %s170, 88
      %2207 = vst.msk [vmem:[%s2206] sm:$0xf] %vm369, %v2202
      %2208 = vst.msk [vmem:[%s2206 + $0x4] sm:$0xf] %vm369, %v2203
      %v2209 = vld [vmem:[%s1881] sm:$0xf]
      %v2210 = vld [vmem:[%s1881 + $0x4] sm:$0xf]
      %v2211 = vld [vmem:[%s1881 + $0x8] sm:$0x1]
      %v2212 = vld [vmem:[%s2048] sm:$0xf]
      %v2213 = vld [vmem:[%s2048 + $0x4] sm:$0xf]
      %v2214 = vld [vmem:[%s2048 + $0x8] sm:$0x1]
      %s2215 = scalar_lea.vmem %s165, 168
      %v2216 = vld [vmem:[%s2215] sm:$0xf]
      %v2217 = vld [vmem:[%s2215 + $0x4] sm:$0xf]
      %v2218 = vld [vmem:[%s2215 + $0x8] sm:$0x1]
      %v2221 = vunpack.c.l.b16 %v2209
      %v2222 = vunpack.c.l.b16 %v2210
      %v2223 = vpack.c.b16 %v2222, %v2221
      %v2225 = vunpack.c.l.b16 %v2211
      %v2226 = vpack.c.b16 %v2225, %v2225
      %v2228 = vshrl.u32 %v2223, 16
      %v2230 = vshll.u32 %v2223, 16
      %v2232 = vrot.slane %v2230, 1
      %v2233 = vor.u32 %v2228, %v2232
      %v2235 = vshll.u32 %v2226, 16
      %v2237 = vrot.slane %v2235, 1
      %v2238 = vsel %vm194, %v2233, %v2237
      %2239 = vrot.lane.b32.xlu0 %v2238, 1
      %v2240 = vpop.permute.xlu0 %2239
      %v2241 = vrot.slane %v2223, 1
      %v2242 = vrot.slane %v2226, 1
      %v2243 = vsel %vm209, %v2241, %v2242
      %2244 = vrot.lane.b32.xlu0 %v2243, 2
      %v2245 = vpop.permute.xlu0 %2244
      %v2248 = vunpack.c.l.b16 %v2212
      %v2249 = vunpack.c.l.b16 %v2213
      %v2250 = vpack.c.b16 %v2249, %v2248
      %2251 = vrot.lane.b32.xlu0 %v2250, 3
      %v2252 = vpop.permute.xlu0 %2251
      %v2254 = vunpack.c.l.b16 %v2214
      %v2255 = vpack.c.b16 %v2254, %v2254
      %v2257 = vshrl.u32 %v2250, 16
      %v2259 = vshll.u32 %v2250, 16
      %v2261 = vrot.slane %v2259, 1
      %v2262 = vor.u32 %v2257, %v2261
      %v2264 = vshll.u32 %v2255, 16
      %v2266 = vrot.slane %v2264, 1
      %v2267 = vsel %vm194, %v2262, %v2266
      %2268 = vrot.lane.b32.xlu0 %v2267, 4
      %v2269 = vpop.permute.xlu0 %2268
      %v2270 = vrot.slane %v2250, 1
      %v2271 = vrot.slane %v2255, 1
      %v2272 = vsel %vm209, %v2270, %v2271
      %2273 = vrot.lane.b32.xlu0 %v2272, 5
      %v2274 = vpop.permute.xlu0 %2273
      %v2277 = vunpack.c.l.b16 %v2216
      %v2278 = vunpack.c.l.b16 %v2217
      %v2279 = vpack.c.b16 %v2278, %v2277
      %2280 = vrot.lane.b32.xlu0 %v2279, 6
      %v2281 = vpop.permute.xlu0 %2280
      %v2283 = vunpack.c.l.b16 %v2218
      %v2284 = vpack.c.b16 %v2283, %v2283
      %v2286 = vshrl.u32 %v2279, 16
      %v2288 = vshll.u32 %v2279, 16
      %v2290 = vrot.slane %v2288, 1
      %v2291 = vor.u32 %v2286, %v2290
      %v2293 = vshll.u32 %v2284, 16
      %v2295 = vrot.slane %v2293, 1
      %v2296 = vsel %vm194, %v2291, %v2295
      %2297 = vrot.lane.b32.xlu0 %v2296, 7
      %v2298 = vpop.permute.xlu0 %2297
      %v2299 = vrot.slane %v2279, 1
      %v2300 = vrot.slane %v2284, 1
      %v2301 = vsel %vm209, %v2299, %v2300
      %2302 = vrot.lane.b32.xlu0 %v2301, 8
      %v2303 = vpop.permute.xlu0 %2302
      %v2305 = vsel %vm273, %v2223, %v2240
      %v2307 = vsel %vm276, %v2305, %v2245
      %v2309 = vsel %vm279, %v2307, %v2252
      %v2311 = vsel %vm282, %v2309, %v2269
      %v2313 = vsel %vm285, %v2311, %v2274
      %v2315 = vsel %vm288, %v2313, %v2281
      %v2317 = vsel %vm291, %v2315, %v2298
      %v2319 = vsel %vm294, %v2317, %v2303
      %v2320 = vsel %vm308, %v2319, 0
      %2322 = vmatprep.subr.bf16.mxu0 0
      %2323 = vmatpush1.bf16.msra.mxu0 %v316
      %2324 = vmatprep.subr.bf16.mxu0 0
      %2325 = vmatpush1.bf16.msra.mxu0 0
      %2326 = vmatprep.subr.bf16.mxu0 0
      %2327 = vmatpush1.bf16.msra.mxu0 0
      %2328 = vmatprep.subr.bf16.mxu0 0
      %2329 = vmatpush1.bf16.msra.mxu0 0
      %2330 = vmatprep.subr.bf16.mxu0 0
      %2331 = vmatpush1.bf16.msra.mxu0 0
      %2332 = vmatprep.subr.bf16.mxu0 0
      %2333 = vmatpush1.bf16.msra.mxu0 0
      %2334 = vmatprep.subr.bf16.mxu0 0
      %2335 = vmatpush1.bf16.msra.mxu0 0
      %2336 = vmatprep.subr.bf16.mxu0 0
      %2337 = vmatpush1.bf16.msra.mxu0 0
      %2338 = vmatprep.subr.bf16.mxu0 0
      %2339 = vmatpush1.bf16.msra.mxu0 0
      %2340 = vmatprep.subr.bf16.mxu0 0
      %2341 = vmatpush1.bf16.msra.mxu0 0
      %2342 = vmatprep.subr.bf16.mxu0 0
      %2343 = vmatpush1.bf16.msra.mxu0 0
      %2344 = vmatprep.subr.bf16.mxu0 0
      %2345 = vmatpush1.bf16.msra.mxu0 0
      %2346 = vmatprep.subr.bf16.mxu0 0
      %2347 = vmatpush1.bf16.msra.mxu0 0
      %2348 = vmatprep.subr.bf16.mxu0 0
      %2349 = vmatpush1.bf16.msra.mxu0 0
      %2350 = vmatprep.subr.bf16.mxu0 0
      %2351 = vmatpush1.bf16.msra.mxu0 0
      %2352 = vmatprep.subr.bf16.mxu0 0
      %2353 = vmatpush1.bf16.msra.mxu0 0
      %2354 = vmatprep.mubr.bf16.mxu0 0
      %2355 = vmatmul.mubr.bf16.gmra.mrb[0].mxu0 %v2320
      %v2356 = vpop.f32.mrb[0].mxu0
      %v2357 = vadd.f32 %v301, %v2356
      %v2358 = vpop.f32.mrb[0].mxu0
      %v2359 = vpop.f32.mrb[0].mxu0
      %v2360 = vadd.f32 %v301, %v2359
      %v2361 = vpop.f32.mrb[0].mxu0
      %2362 = vdwg.mxu0
      %v2363 = vmax.f32 %v2357, 0.0
      %v2364 = vmax.f32 %v2360, 0.0
      %v2365 = vpack.c.bf16 %v2364, %v2363
      %v2367 = vunpack.c.l.b16 %v2365
      %v2368 = vunpack.c.h.b16 %v2365
      %v2369 = vpack.c.b16 %v2367, %v2367
      %v2370 = vpack.c.b16 %v2368, %v2368
      %s2373 = scalar_lea.vmem %s170, 96
      %2374 = vst.msk [vmem:[%s2373] sm:$0xf] %vm369, %v2369
      %2375 = vst.msk [vmem:[%s2373 + $0x4] sm:$0xf] %vm369, %v2370
      %v2376 = vld [vmem:[%s2048] sm:$0xf]
      %v2377 = vld [vmem:[%s2048 + $0x4] sm:$0xf]
      %v2378 = vld [vmem:[%s2048 + $0x8] sm:$0x1]
      %v2379 = vld [vmem:[%s2215] sm:$0xf]
      %v2380 = vld [vmem:[%s2215 + $0x4] sm:$0xf]
      %v2381 = vld [vmem:[%s2215 + $0x8] sm:$0x1]
      %s2382 = scalar_lea.vmem %s165, 180
      %v2383 = vld [vmem:[%s2382] sm:$0xf]
      %v2384 = vld [vmem:[%s2382 + $0x4] sm:$0xf]
      %v2385 = vld [vmem:[%s2382 + $0x8] sm:$0x1]
      %v2388 = vunpack.c.l.b16 %v2376
      %v2389 = vunpack.c.l.b16 %v2377
      %v2390 = vpack.c.b16 %v2389, %v2388
      %v2392 = vunpack.c.l.b16 %v2378
      %v2393 = vpack.c.b16 %v2392, %v2392
      %v2395 = vshrl.u32 %v2390, 16
      %v2397 = vshll.u32 %v2390, 16
      %v2399 = vrot.slane %v2397, 1
      %v2400 = vor.u32 %v2395, %v2399
      %v2402 = vshll.u32 %v2393, 16
      %v2404 = vrot.slane %v2402, 1
      %v2405 = vsel %vm194, %v2400, %v2404
      %2406 = vrot.lane.b32.xlu0 %v2405, 1
      %v2407 = vpop.permute.xlu0 %2406
      %v2408 = vrot.slane %v2390, 1
      %v2409 = vrot.slane %v2393, 1
      %v2410 = vsel %vm209, %v2408, %v2409
      %2411 = vrot.lane.b32.xlu0 %v2410, 2
      %v2412 = vpop.permute.xlu0 %2411
      %v2415 = vunpack.c.l.b16 %v2379
      %v2416 = vunpack.c.l.b16 %v2380
      %v2417 = vpack.c.b16 %v2416, %v2415
      %2418 = vrot.lane.b32.xlu0 %v2417, 3
      %v2419 = vpop.permute.xlu0 %2418
      %v2421 = vunpack.c.l.b16 %v2381
      %v2422 = vpack.c.b16 %v2421, %v2421
      %v2424 = vshrl.u32 %v2417, 16
      %v2426 = vshll.u32 %v2417, 16
      %v2428 = vrot.slane %v2426, 1
      %v2429 = vor.u32 %v2424, %v2428
      %v2431 = vshll.u32 %v2422, 16
      %v2433 = vrot.slane %v2431, 1
      %v2434 = vsel %vm194, %v2429, %v2433
      %2435 = vrot.lane.b32.xlu0 %v2434, 4
      %v2436 = vpop.permute.xlu0 %2435
      %v2437 = vrot.slane %v2417, 1
      %v2438 = vrot.slane %v2422, 1
      %v2439 = vsel %vm209, %v2437, %v2438
      %2440 = vrot.lane.b32.xlu0 %v2439, 5
      %v2441 = vpop.permute.xlu0 %2440
      %v2444 = vunpack.c.l.b16 %v2383
      %v2445 = vunpack.c.l.b16 %v2384
      %v2446 = vpack.c.b16 %v2445, %v2444
      %2447 = vrot.lane.b32.xlu0 %v2446, 6
      %v2448 = vpop.permute.xlu0 %2447
      %v2450 = vunpack.c.l.b16 %v2385
      %v2451 = vpack.c.b16 %v2450, %v2450
      %v2453 = vshrl.u32 %v2446, 16
      %v2455 = vshll.u32 %v2446, 16
      %v2457 = vrot.slane %v2455, 1
      %v2458 = vor.u32 %v2453, %v2457
      %v2460 = vshll.u32 %v2451, 16
      %v2462 = vrot.slane %v2460, 1
      %v2463 = vsel %vm194, %v2458, %v2462
      %2464 = vrot.lane.b32.xlu0 %v2463, 7
      %v2465 = vpop.permute.xlu0 %2464
      %v2466 = vrot.slane %v2446, 1
      %v2467 = vrot.slane %v2451, 1
      %v2468 = vsel %vm209, %v2466, %v2467
      %2469 = vrot.lane.b32.xlu0 %v2468, 8
      %v2470 = vpop.permute.xlu0 %2469
      %v2472 = vsel %vm273, %v2390, %v2407
      %v2474 = vsel %vm276, %v2472, %v2412
      %v2476 = vsel %vm279, %v2474, %v2419
      %v2478 = vsel %vm282, %v2476, %v2436
      %v2480 = vsel %vm285, %v2478, %v2441
      %v2482 = vsel %vm288, %v2480, %v2448
      %v2484 = vsel %vm291, %v2482, %v2465
      %v2486 = vsel %vm294, %v2484, %v2470
      %v2487 = vsel %vm308, %v2486, 0
      %2489 = vmatprep.subr.bf16.mxu0 0
      %2490 = vmatpush1.bf16.msra.mxu0 %v316
      %2491 = vmatprep.subr.bf16.mxu0 0
      %2492 = vmatpush1.bf16.msra.mxu0 0
      %2493 = vmatprep.subr.bf16.mxu0 0
      %2494 = vmatpush1.bf16.msra.mxu0 0
      %2495 = vmatprep.subr.bf16.mxu0 0
      %2496 = vmatpush1.bf16.msra.mxu0 0
      %2497 = vmatprep.subr.bf16.mxu0 0
      %2498 = vmatpush1.bf16.msra.mxu0 0
      %2499 = vmatprep.subr.bf16.mxu0 0
      %2500 = vmatpush1.bf16.msra.mxu0 0
      %2501 = vmatprep.subr.bf16.mxu0 0
      %2502 = vmatpush1.bf16.msra.mxu0 0
      %2503 = vmatprep.subr.bf16.mxu0 0
      %2504 = vmatpush1.bf16.msra.mxu0 0
      %2505 = vmatprep.subr.bf16.mxu0 0
      %2506 = vmatpush1.bf16.msra.mxu0 0
      %2507 = vmatprep.subr.bf16.mxu0 0
      %2508 = vmatpush1.bf16.msra.mxu0 0
      %2509 = vmatprep.subr.bf16.mxu0 0
      %2510 = vmatpush1.bf16.msra.mxu0 0
      %2511 = vmatprep.subr.bf16.mxu0 0
      %2512 = vmatpush1.bf16.msra.mxu0 0
      %2513 = vmatprep.subr.bf16.mxu0 0
      %2514 = vmatpush1.bf16.msra.mxu0 0
      %2515 = vmatprep.subr.bf16.mxu0 0
      %2516 = vmatpush1.bf16.msra.mxu0 0
      %2517 = vmatprep.subr.bf16.mxu0 0
      %2518 = vmatpush1.bf16.msra.mxu0 0
      %2519 = vmatprep.subr.bf16.mxu0 0
      %2520 = vmatpush1.bf16.msra.mxu0 0
      %2521 = vmatprep.mubr.bf16.mxu0 0
      %2522 = vmatmul.mubr.bf16.gmra.mrb[0].mxu0 %v2487
      %v2523 = vpop.f32.mrb[0].mxu0
      %v2524 = vadd.f32 %v301, %v2523
      %v2525 = vpop.f32.mrb[0].mxu0
      %v2526 = vpop.f32.mrb[0].mxu0
      %v2527 = vadd.f32 %v301, %v2526
      %v2528 = vpop.f32.mrb[0].mxu0
      %2529 = vdwg.mxu0
      %v2530 = vmax.f32 %v2524, 0.0
      %v2531 = vmax.f32 %v2527, 0.0
      %v2532 = vpack.c.bf16 %v2531, %v2530
      %v2534 = vunpack.c.l.b16 %v2532
      %v2535 = vunpack.c.h.b16 %v2532
      %v2536 = vpack.c.b16 %v2534, %v2534
      %v2537 = vpack.c.b16 %v2535, %v2535
      %s2540 = scalar_lea.vmem %s170, 104
      %2541 = vst.msk [vmem:[%s2540] sm:$0xf] %vm369, %v2536
      %2542 = vst.msk [vmem:[%s2540 + $0x4] sm:$0xf] %vm369, %v2537
      %v2543 = vld [vmem:[%s2215] sm:$0xf]
      %v2544 = vld [vmem:[%s2215 + $0x4] sm:$0xf]
      %v2545 = vld [vmem:[%s2215 + $0x8] sm:$0x1]
      %v2546 = vld [vmem:[%s2382] sm:$0xf]
      %v2547 = vld [vmem:[%s2382 + $0x4] sm:$0xf]
      %v2548 = vld [vmem:[%s2382 + $0x8] sm:$0x1]
      %s2549 = scalar_lea.vmem %s165, 192
      %v2550 = vld [vmem:[%s2549] sm:$0xf]
      %v2551 = vld [vmem:[%s2549 + $0x4] sm:$0xf]
      %v2552 = vld [vmem:[%s2549 + $0x8] sm:$0x1]
      %v2555 = vunpack.c.l.b16 %v2543
      %v2556 = vunpack.c.l.b16 %v2544
      %v2557 = vpack.c.b16 %v2556, %v2555
      %v2559 = vunpack.c.l.b16 %v2545
      %v2560 = vpack.c.b16 %v2559, %v2559
      %v2562 = vshrl.u32 %v2557, 16
      %v2564 = vshll.u32 %v2557, 16
      %v2566 = vrot.slane %v2564, 1
      %v2567 = vor.u32 %v2562, %v2566
      %v2569 = vshll.u32 %v2560, 16
      %v2571 = vrot.slane %v2569, 1
      %v2572 = vsel %vm194, %v2567, %v2571
      %2573 = vrot.lane.b32.xlu0 %v2572, 1
      %v2574 = vpop.permute.xlu0 %2573
      %v2575 = vrot.slane %v2557, 1
      %v2576 = vrot.slane %v2560, 1
      %v2577 = vsel %vm209, %v2575, %v2576
      %2578 = vrot.lane.b32.xlu0 %v2577, 2
      %v2579 = vpop.permute.xlu0 %2578
      %v2582 = vunpack.c.l.b16 %v2546
      %v2583 = vunpack.c.l.b16 %v2547
      %v2584 = vpack.c.b16 %v2583, %v2582
      %2585 = vrot.lane.b32.xlu0 %v2584, 3
      %v2586 = vpop.permute.xlu0 %2585
      %v2588 = vunpack.c.l.b16 %v2548
      %v2589 = vpack.c.b16 %v2588, %v2588
      %v2591 = vshrl.u32 %v2584, 16
      %v2593 = vshll.u32 %v2584, 16
      %v2595 = vrot.slane %v2593, 1
      %v2596 = vor.u32 %v2591, %v2595
      %v2598 = vshll.u32 %v2589, 16
      %v2600 = vrot.slane %v2598, 1
      %v2601 = vsel %vm194, %v2596, %v2600
      %2602 = vrot.lane.b32.xlu0 %v2601, 4
      %v2603 = vpop.permute.xlu0 %2602
      %v2604 = vrot.slane %v2584, 1
      %v2605 = vrot.slane %v2589, 1
      %v2606 = vsel %vm209, %v2604, %v2605
      %2607 = vrot.lane.b32.xlu0 %v2606, 5
      %v2608 = vpop.permute.xlu0 %2607
      %v2611 = vunpack.c.l.b16 %v2550
      %v2612 = vunpack.c.l.b16 %v2551
      %v2613 = vpack.c.b16 %v2612, %v2611
      %2614 = vrot.lane.b32.xlu0 %v2613, 6
      %v2615 = vpop.permute.xlu0 %2614
      %v2617 = vunpack.c.l.b16 %v2552
      %v2618 = vpack.c.b16 %v2617, %v2617
      %v2620 = vshrl.u32 %v2613, 16
      %v2622 = vshll.u32 %v2613, 16
      %v2624 = vrot.slane %v2622, 1
      %v2625 = vor.u32 %v2620, %v2624
      %v2627 = vshll.u32 %v2618, 16
      %v2629 = vrot.slane %v2627, 1
      %v2630 = vsel %vm194, %v2625, %v2629
      %2631 = vrot.lane.b32.xlu0 %v2630, 7
      %v2632 = vpop.permute.xlu0 %2631
      %v2633 = vrot.slane %v2613, 1
      %v2634 = vrot.slane %v2618, 1
      %v2635 = vsel %vm209, %v2633, %v2634
      %2636 = vrot.lane.b32.xlu0 %v2635, 8
      %v2637 = vpop.permute.xlu0 %2636
      %v2639 = vsel %vm273, %v2557, %v2574
      %v2641 = vsel %vm276, %v2639, %v2579
      %v2643 = vsel %vm279, %v2641, %v2586
      %v2645 = vsel %vm282, %v2643, %v2603
      %v2647 = vsel %vm285, %v2645, %v2608
      %v2649 = vsel %vm288, %v2647, %v2615
      %v2651 = vsel %vm291, %v2649, %v2632
      %v2653 = vsel %vm294, %v2651, %v2637
      %v2654 = vsel %vm308, %v2653, 0
      %2656 = vmatprep.subr.bf16.mxu0 0
      %2657 = vmatpush1.bf16.msra.mxu0 %v316
      %2658 = vmatprep.subr.bf16.mxu0 0
      %2659 = vmatpush1.bf16.msra.mxu0 0
      %2660 = vmatprep.subr.bf16.mxu0 0
      %2661 = vmatpush1.bf16.msra.mxu0 0
      %2662 = vmatprep.subr.bf16.mxu0 0
      %2663 = vmatpush1.bf16.msra.mxu0 0
      %2664 = vmatprep.subr.bf16.mxu0 0
      %2665 = vmatpush1.bf16.msra.mxu0 0
      %2666 = vmatprep.subr.bf16.mxu0 0
      %2667 = vmatpush1.bf16.msra.mxu0 0
      %2668 = vmatprep.subr.bf16.mxu0 0
      %2669 = vmatpush1.bf16.msra.mxu0 0
      %2670 = vmatprep.subr.bf16.mxu0 0
      %2671 = vmatpush1.bf16.msra.mxu0 0
      %2672 = vmatprep.subr.bf16.mxu0 0
      %2673 = vmatpush1.bf16.msra.mxu0 0
      %2674 = vmatprep.subr.bf16.mxu0 0
      %2675 = vmatpush1.bf16.msra.mxu0 0
      %2676 = vmatprep.subr.bf16.mxu0 0
      %2677 = vmatpush1.bf16.msra.mxu0 0
      %2678 = vmatprep.subr.bf16.mxu0 0
      %2679 = vmatpush1.bf16.msra.mxu0 0
      %2680 = vmatprep.subr.bf16.mxu0 0
      %2681 = vmatpush1.bf16.msra.mxu0 0
      %2682 = vmatprep.subr.bf16.mxu0 0
      %2683 = vmatpush1.bf16.msra.mxu0 0
      %2684 = vmatprep.subr.bf16.mxu0 0
      %2685 = vmatpush1.bf16.msra.mxu0 0
      %2686 = vmatprep.subr.bf16.mxu0 0
      %2687 = vmatpush1.bf16.msra.mxu0 0
      %2688 = vmatprep.mubr.bf16.mxu0 0
      %2689 = vmatmul.mubr.bf16.gmra.mrb[0].mxu0 %v2654
      %v2690 = vpop.f32.mrb[0].mxu0
      %v2691 = vadd.f32 %v301, %v2690
      %v2692 = vpop.f32.mrb[0].mxu0
      %v2693 = vpop.f32.mrb[0].mxu0
      %v2694 = vadd.f32 %v301, %v2693
      %v2695 = vpop.f32.mrb[0].mxu0
      %2696 = vdwg.mxu0
      %v2697 = vmax.f32 %v2691, 0.0
      %v2698 = vmax.f32 %v2694, 0.0
      %v2699 = vpack.c.bf16 %v2698, %v2697
      %v2701 = vunpack.c.l.b16 %v2699
      %v2702 = vunpack.c.h.b16 %v2699
      %v2703 = vpack.c.b16 %v2701, %v2701
      %v2704 = vpack.c.b16 %v2702, %v2702
      %s2707 = scalar_lea.vmem %s170, 112
      %2708 = vst.msk [vmem:[%s2707] sm:$0xf] %vm369, %v2703
      %2709 = vst.msk [vmem:[%s2707 + $0x4] sm:$0xf] %vm369, %v2704
      %v2710 = vld [vmem:[%s2382] sm:$0xf]
      %v2711 = vld [vmem:[%s2382 + $0x4] sm:$0xf]
      %v2712 = vld [vmem:[%s2382 + $0x8] sm:$0x1]
      %v2713 = vld [vmem:[%s2549] sm:$0xf]
      %v2714 = vld [vmem:[%s2549 + $0x4] sm:$0xf]
      %v2715 = vld [vmem:[%s2549 + $0x8] sm:$0x1]
      %s2716 = scalar_lea.vmem %s165, 204
      %v2717 = vld [vmem:[%s2716] sm:$0xf]
      %v2718 = vld [vmem:[%s2716 + $0x4] sm:$0xf]
      %v2719 = vld [vmem:[%s2716 + $0x8] sm:$0x1]
      %v2722 = vunpack.c.l.b16 %v2710
      %v2723 = vunpack.c.l.b16 %v2711
      %v2724 = vpack.c.b16 %v2723, %v2722
      %v2726 = vunpack.c.l.b16 %v2712
      %v2727 = vpack.c.b16 %v2726, %v2726
      %v2729 = vshrl.u32 %v2724, 16
      %v2731 = vshll.u32 %v2724, 16
      %v2733 = vrot.slane %v2731, 1
      %v2734 = vor.u32 %v2729, %v2733
      %v2736 = vshll.u32 %v2727, 16
      %v2738 = vrot.slane %v2736, 1
      %v2739 = vsel %vm194, %v2734, %v2738
      %2740 = vrot.lane.b32.xlu0 %v2739, 1
      %v2741 = vpop.permute.xlu0 %2740
      %v2742 = vrot.slane %v2724, 1
      %v2743 = vrot.slane %v2727, 1
      %v2744 = vsel %vm209, %v2742, %v2743
      %2745 = vrot.lane.b32.xlu0 %v2744, 2
      %v2746 = vpop.permute.xlu0 %2745
      %v2749 = vunpack.c.l.b16 %v2713
      %v2750 = vunpack.c.l.b16 %v2714
      %v2751 = vpack.c.b16 %v2750, %v2749
      %2752 = vrot.lane.b32.xlu0 %v2751, 3
      %v2753 = vpop.permute.xlu0 %2752
      %v2755 = vunpack.c.l.b16 %v2715
      %v2756 = vpack.c.b16 %v2755, %v2755
      %v2758 = vshrl.u32 %v2751, 16
      %v2760 = vshll.u32 %v2751, 16
      %v2762 = vrot.slane %v2760, 1
      %v2763 = vor.u32 %v2758, %v2762
      %v2765 = vshll.u32 %v2756, 16
      %v2767 = vrot.slane %v2765, 1
      %v2768 = vsel %vm194, %v2763, %v2767
      %2769 = vrot.lane.b32.xlu0 %v2768, 4
      %v2770 = vpop.permute.xlu0 %2769
      %v2771 = vrot.slane %v2751, 1
      %v2772 = vrot.slane %v2756, 1
      %v2773 = vsel %vm209, %v2771, %v2772
      %2774 = vrot.lane.b32.xlu0 %v2773, 5
      %v2775 = vpop.permute.xlu0 %2774
      %v2778 = vunpack.c.l.b16 %v2717
      %v2779 = vunpack.c.l.b16 %v2718
      %v2780 = vpack.c.b16 %v2779, %v2778
      %2781 = vrot.lane.b32.xlu0 %v2780, 6
      %v2782 = vpop.permute.xlu0 %2781
      %v2784 = vunpack.c.l.b16 %v2719
      %v2785 = vpack.c.b16 %v2784, %v2784
      %v2787 = vshrl.u32 %v2780, 16
      %v2789 = vshll.u32 %v2780, 16
      %v2791 = vrot.slane %v2789, 1
      %v2792 = vor.u32 %v2787, %v2791
      %v2794 = vshll.u32 %v2785, 16
      %v2796 = vrot.slane %v2794, 1
      %v2797 = vsel %vm194, %v2792, %v2796
      %2798 = vrot.lane.b32.xlu0 %v2797, 7
      %v2799 = vpop.permute.xlu0 %2798
      %v2800 = vrot.slane %v2780, 1
      %v2801 = vrot.slane %v2785, 1
      %v2802 = vsel %vm209, %v2800, %v2801
      %2803 = vrot.lane.b32.xlu0 %v2802, 8
      %v2804 = vpop.permute.xlu0 %2803
      %v2806 = vsel %vm273, %v2724, %v2741
      %v2808 = vsel %vm276, %v2806, %v2746
      %v2810 = vsel %vm279, %v2808, %v2753
      %v2812 = vsel %vm282, %v2810, %v2770
      %v2814 = vsel %vm285, %v2812, %v2775
      %v2816 = vsel %vm288, %v2814, %v2782
      %v2818 = vsel %vm291, %v2816, %v2799
      %v2820 = vsel %vm294, %v2818, %v2804
      %v2821 = vsel %vm308, %v2820, 0
      %2823 = vmatprep.subr.bf16.mxu0 0
      %2824 = vmatpush1.bf16.msra.mxu0 %v316
      %2825 = vmatprep.subr.bf16.mxu0 0
      %2826 = vmatpush1.bf16.msra.mxu0 0
      %2827 = vmatprep.subr.bf16.mxu0 0
      %2828 = vmatpush1.bf16.msra.mxu0 0
      %2829 = vmatprep.subr.bf16.mxu0 0
      %2830 = vmatpush1.bf16.msra.mxu0 0
      %2831 = vmatprep.subr.bf16.mxu0 0
      %2832 = vmatpush1.bf16.msra.mxu0 0
      %2833 = vmatprep.subr.bf16.mxu0 0
      %2834 = vmatpush1.bf16.msra.mxu0 0
      %2835 = vmatprep.subr.bf16.mxu0 0
      %2836 = vmatpush1.bf16.msra.mxu0 0
      %2837 = vmatprep.subr.bf16.mxu0 0
      %2838 = vmatpush1.bf16.msra.mxu0 0
      %2839 = vmatprep.subr.bf16.mxu0 0
      %2840 = vmatpush1.bf16.msra.mxu0 0
      %2841 = vmatprep.subr.bf16.mxu0 0
      %2842 = vmatpush1.bf16.msra.mxu0 0
      %2843 = vmatprep.subr.bf16.mxu0 0
      %2844 = vmatpush1.bf16.msra.mxu0 0
      %2845 = vmatprep.subr.bf16.mxu0 0
      %2846 = vmatpush1.bf16.msra.mxu0 0
      %2847 = vmatprep.subr.bf16.mxu0 0
      %2848 = vmatpush1.bf16.msra.mxu0 0
      %2849 = vmatprep.subr.bf16.mxu0 0
      %2850 = vmatpush1.bf16.msra.mxu0 0
      %2851 = vmatprep.subr.bf16.mxu0 0
      %2852 = vmatpush1.bf16.msra.mxu0 0
      %2853 = vmatprep.subr.bf16.mxu0 0
      %2854 = vmatpush1.bf16.msra.mxu0 0
      %2855 = vmatprep.mubr.bf16.mxu0 0
      %2856 = vmatmul.mubr.bf16.gmra.mrb[0].mxu0 %v2821
      %v2857 = vpop.f32.mrb[0].mxu0
      %v2858 = vadd.f32 %v301, %v2857
      %v2859 = vpop.f32.mrb[0].mxu0
      %v2860 = vpop.f32.mrb[0].mxu0
      %v2861 = vadd.f32 %v301, %v2860
      %v2862 = vpop.f32.mrb[0].mxu0
      %2863 = vdwg.mxu0
      %v2864 = vmax.f32 %v2858, 0.0
      %v2865 = vmax.f32 %v2861, 0.0
      %v2866 = vpack.c.bf16 %v2865, %v2864
      %v2868 = vunpack.c.l.b16 %v2866
      %v2869 = vunpack.c.h.b16 %v2866
      %v2870 = vpack.c.b16 %v2868, %v2868
      %v2871 = vpack.c.b16 %v2869, %v2869
      %s2874 = scalar_lea.vmem %s170, 120
      %2875 = vst.msk [vmem:[%s2874] sm:$0xf] %vm369, %v2870
      %2876 = vst.msk [vmem:[%s2874 + $0x4] sm:$0xf] %vm369, %v2871
      %p2877 = scmp.lt.s32.totalorder %s14, 1
      %s2878 = scalar_select %p2877, %s14, 1
      %s2879 = smul.addr %s2878, 32
      %s2880 = smul.addr %s2879, 4
      %s2881 = scalar_lea.vmem %s3, %s2880
      // Predicated region
      $region33: #{tpu_custom_call.1} parent=31 // pred_check
        %p2882 = pneg %p100
      $region34: #{tpu_custom_call.1} parent=31 // pred_check_branch
        %2884 = sbr.rel (%p2882) target = $region36
      $region35: #{tpu_custom_call.1} parent=31 // pred_region
        _
      $region36: #{tpu_custom_call.1} parent=31 // pred_fallthru
        _
    $region32: #{tpu_custom_call.1} parent=5 // pred_fallthru
      _
    %p2885 = scmp.le.s32.totalorder 2, %s9
    // Predicated region
    $region37: #{tpu_custom_call.1} parent=5 // pred_check
      %p2886 = pneg %p2885
    $region38: #{tpu_custom_call.1} parent=5 // pred_check_branch
      %2888 = sbr.rel (%p2886) target = $region40
    $region39: #{tpu_custom_call.1} parent=5 // pred_region
      %s2889 = ssub.s32 %s9, 2
      // Predicated region
      $region41: #{tpu_custom_call.1} parent=39 // pred_check
        %p2890 = pneg %p106
      $region42: #{tpu_custom_call.1} parent=39 // pred_check_branch
        %2892 = sbr.rel (%p2890) target = $region44
      $region43: #{tpu_custom_call.1} parent=39 // pred_region
        %p2893 = scmp.lt.s32.totalorder %s15, 1
        %s2894 = scalar_select %p2893, %s15, 1
        %s2895 = smul.addr %s2894, 32
        %s2896 = smul.addr %s2895, 4
        %s2897 = scalar_lea.vmem %s3, %s2896
      $region44: #{tpu_custom_call.1} parent=39 // pred_fallthru
        _
    $region40: #{tpu_custom_call.1} parent=5 // pred_fallthru
      _
  $region6: #{tpu_custom_call.1} parent=0 // loop_footer
    %s13 = sadd.s32 1, %s9
  $region7: #{tpu_custom_call.1} parent=0 // loop_footer_branch
    %8 = sbr.rel target = $region3
  $region8: #{tpu_custom_call.1} parent=0 // loop_exit
    _

</llo_original>
